<compile_context>
chip_gen: v6e
topology: v6e:2x2x1
jax: 0.10.0
libtpu: 0.0.40
codegen_flags: <defaults>
</compile_context>

<pallas_src>
import functools

import jax
import jax.numpy as jnp
from jax import lax
from jax.experimental import pallas as pl
from jax.experimental.pallas import tpu as pltpu

NODE_NUM = 4
OUT_LANES = 128


def _round_up(x, m):
    return (x + m - 1) // m * m


# ------------------------------ fused kernel --------------------------------

def _fused_forward_kernel(patches_ref, w1_ref, w2_ref, wc_ref, wh_ref, out_ref,
                          pad_a_ref, pad_b_ref, *, oh, ow, wp):
    f32, bf16 = jnp.float32, jnp.bfloat16
    tap_len = oh * wp                       # rows per 3x3-tap matmul (mult of 16)
    c1 = pad_a_ref.shape[1]                 # conv1 out channels (16)
    c2 = pad_b_ref.shape[1]                 # conv2 out channels (32)
    rows_pad = pad_a_ref.shape[0]
    body_end = (oh + 2) * wp
    tail_len = rows_pad - body_end

    # Zero only the halo rows; the body rows [2*wp, (oh+2)*wp) are fully
    # overwritten by the aligned bulk stores below.
    pad_a_ref[pl.ds(0, 2 * wp), :] = jnp.zeros((2 * wp, c1), bf16)
    pad_a_ref[pl.ds(body_end, tail_len), :] = jnp.zeros((tail_len, c1), bf16)
    pad_b_ref[pl.ds(0, 2 * wp), :] = jnp.zeros((2 * wp, c2), bf16)
    pad_b_ref[pl.ds(body_end, tail_len), :] = jnp.zeros((tail_len, c2), bf16)

    # ---- conv1 (5x5, stride 3): one MXU matmul on pitch-`wp` patches --------
    # Patch rows with (row % wp) >= ow are all-zero, so ReLU(h1) already carries
    # the zero left/right padding columns -> one 16-aligned bulk store.
    h1 = jnp.dot(patches_ref[...], w1_ref[...], preferred_element_type=f32)
    pad_a_ref[pl.ds(2 * wp, tap_len), :] = jnp.maximum(h1, 0.0).astype(bf16)

    def conv3x3(src_ref, w_taps_ref):
        # 3x3 / stride-1 / pad-1 conv = 9 shifted accumulating MXU matmuls over
        # the flattened padded activation; single-accumulator chain.
        acc = None
        for t in range(9):
            di, dj = t // 3, t % 3
            base = (di + 1) * wp + dj - 1            # static offset
            part = jnp.dot(src_ref[pl.ds(base, tap_len), :], w_taps_ref[t],
                           preferred_element_type=f32)
            acc = part if acc is None else acc + part
        return acc          # [tap_len, C_out]; row o = r*wp + c, valid iff c < ow

    def masked_relu(acc):
        col = lax.broadcasted_iota(jnp.int32, acc.shape, 0) % wp
        return jnp.where(col < ow, jnp.maximum(acc, 0.0), 0.0)

    # ---- conv2 (16->32) + ReLU; one aligned store rebuilds the padded layout -
    act2 = masked_relu(conv3x3(pad_a_ref, w2_ref))
    pad_b_ref[pl.ds(2 * wp, tap_len), :] = act2.astype(bf16)

    # ---- ResCell conv (concat([x, x]) folded into weights) + ReLU + GAP ------
    actc = masked_relu(conv3x3(pad_b_ref, wc_ref))
    pooled = jnp.sum(actc, axis=0, keepdims=True) * (1.0 / float(oh * ow))

    # ---- head: linear + softmax + CE(target = NODE_NUM - 1) -----------------
    logits = jnp.dot(pooled, wh_ref[...], preferred_element_type=f32)   # [1,128]
    lane = lax.broadcasted_iota(jnp.int32, (1, OUT_LANES), 1)
    logits_m = jnp.where(lane < NODE_NUM, logits, jnp.float32(-1e30))
    m = jnp.max(logits_m, axis=1, keepdims=True)
    e = jnp.exp(logits_m - m)
    s = jnp.sum(e, axis=1, keepdims=True)
    prob = e / s                                  # exact division (prob sums to 1)
    lse = m + jnp.log(s)
    tgt = jnp.sum(jnp.where(lane == NODE_NUM - 1, logits, 0.0),
                  axis=1, keepdims=True)
    loss = lse - tgt                                                     # [1,1]

    # single unmasked (8,128) store: row 0 = softmax prob, row 1 = loss
    row = lax.broadcasted_iota(jnp.int32, (8, OUT_LANES), 0)
    out_ref[...] = jnp.where(
        row == 0, jnp.broadcast_to(prob, (8, OUT_LANES)),
        jnp.where(row == 1, jnp.broadcast_to(loss, (8, OUT_LANES)), 0.0))


def _build_fused_call(oh, ow, wp, k1p, c1, c2, cc):
    tap_len = oh * wp
    rows_pad = _round_up((oh + 3) * wp + 1, 16)   # covers max tap base + tap_len
    kernel = functools.partial(_fused_forward_kernel, oh=oh, ow=ow, wp=wp)
    return pl.pallas_call(
        kernel,
        out_shape=jax.ShapeDtypeStruct((8, OUT_LANES), jnp.float32),
        in_specs=[
            pl.BlockSpec((tap_len, k1p), lambda: (0, 0)),      # conv1 patches (bf16)
            pl.BlockSpec((k1p, c1), lambda: (0, 0)),           # conv1 weight  (bf16)
            pl.BlockSpec((9, c1, c2), lambda: (0, 0, 0)),      # conv2 taps    (bf16)
            pl.BlockSpec((9, c2, cc), lambda: (0, 0, 0)),      # cell taps     (bf16)
            pl.BlockSpec((cc, OUT_LANES), lambda: (0, 0)),     # head weight   (f32)
        ],
        out_specs=pl.BlockSpec((8, OUT_LANES), lambda: (0, 0)),
        scratch_shapes=[
            pltpu.VMEM((rows_pad, c1), jnp.bfloat16),   # padded conv2 input
            pltpu.VMEM((rows_pad, c2), jnp.bfloat16),   # padded cell-conv input
        ],
    )


# ------------------------------- host glue ----------------------------------

def prepare_params(raw):
    f32, bf16 = jnp.float32, jnp.bfloat16

    w1 = raw["conv1_w"].astype(f32)                        # [16, 3, 5, 5]
    c1 = w1.shape[0]
    k1 = w1.shape[1] * w1.shape[2] * w1.shape[3]
    k1p = _round_up(k1, 16)
    w1_mat = w1.reshape(c1, k1).T                          # [75, 16]
    w1_pad = jnp.zeros((k1p, c1), f32).at[:k1].set(w1_mat).astype(bf16)

    w2 = raw["conv2_w"].astype(f32)                        # [32, 16, 3, 3]
    c2, cin2 = w2.shape[0], w2.shape[1]
    w2_taps = jnp.transpose(w2, (2, 3, 1, 0)).reshape(9, cin2, c2).astype(bf16)

    wc = raw["cell_conv_w"].astype(f32)                    # [32, 64, 3, 3]
    cc = wc.shape[0]
    half = wc.shape[1] // 2
    wc_eff = wc[:, :half] + wc[:, half:]                   # fold rin = concat([x, x])
    wc_taps = jnp.transpose(wc_eff, (2, 3, 1, 0)).reshape(9, half, cc).astype(bf16)

    wh = raw["head_w"].astype(f32)                         # [32, NODE_NUM]
    wh_pad = jnp.zeros((cc, OUT_LANES), f32).at[:, :wh.shape[1]].set(wh)

    return {"w1": w1_pad, "w2_taps": w2_taps, "wc_taps": wc_taps, "w_head": wh_pad}


@jax.jit
def unknown_net_forward(x, params):
    """UnknownNet.forward compute path for label == -1 with a single (fresh)
    ResCell: returns (loss, prob)."""
    _, cin, h, w = x.shape
    oh = (h + 2 - 5) // 3 + 1
    ow = (w + 2 - 5) // 3 + 1
    wp = max(_round_up(ow + 2, 16), 16)                    # sublane-aligned pitch

    k1p, c1 = params["w1"].shape
    _, _, c2 = params["w2_taps"].shape
    _, _, cc = params["wc_taps"].shape
    k1 = cin * 25

    # conv1 patch extraction: one XLA op, then a cheap pad/reshape that bakes in
    # the pitch-`wp` layout (rows with col >= ow are zero) and the K padding.
    pat = lax.conv_general_dilated_patches(
        x, (5, 5), (3, 3), [(1, 1), (1, 1)])               # [1, cin*25, oh, ow]
    pat = jnp.transpose(pat, (0, 2, 3, 1)).reshape(oh, ow, k1)
    pat = jnp.pad(pat, ((0, 0), (0, wp - ow), (0, k1p - k1)))
    patches = pat.reshape(oh * wp, k1p).astype(jnp.bfloat16)

    out_tile = _build_fused_call(oh, ow, wp, k1p, c1, c2, cc)(
        patches, params["w1"], params["w2_taps"], params["wc_taps"],
        params["w_head"])
    prob = out_tile[0:1, :NODE_NUM]                        # [1, NODE_NUM]
    loss = out_tile[1:2, 0:1]                              # [1, 1]
    return loss, prob


def reference_forward(x, raw):
    """Pure-JAX fp32 reference of the same forward path (tolerance check only)."""
    dn = ("NCHW", "OIHW", "NCHW")
    h = lax.conv_general_dilated(x, raw["conv1_w"], (3, 3), [(1, 1), (1, 1)],
                                 dimension_numbers=dn)
    h = jnp.maximum(h, 0.0)
    h = lax.conv_general_dilated(h, raw["conv2_w"], (1, 1), [(1, 1), (1, 1)],
                                 dimension_numbers=dn)
    h = jnp.maximum(h, 0.0)
    rin = jnp.concatenate([h, h], axis=1)
    c = lax.conv_general_dilated(rin, raw["cell_conv_w"], (1, 1), [(1, 1), (1, 1)],
                                 dimension_numbers=dn)
    c = jnp.maximum(c, 0.0)
    pooled = jnp.mean(c, axis=(2, 3))                      # [1, 32]
    logits = pooled @ raw["head_w"]                        # [1, NODE_NUM]
    prob = jax.nn.softmax(logits, axis=1)
    loss = -jax.nn.log_softmax(logits, axis=1)[:, NODE_NUM - 1]
    return loss.reshape(1, 1), prob


# ---------------------------------- main -------------------------------------

if __name__ == "__main__":
    key = jax.random.PRNGKey(0)
    k0, k1, k2, k3, k4 = jax.random.split(key, 5)

    # module convention: NCHW, batch must be 1 (forward() asserts it)
    x = jax.random.normal(k0, (1, 3, 36, 36), jnp.float32)
    label = jnp.array([-1], jnp.int32)  # deterministic "unknown" path

    raw_params = {
        "conv1_w": 0.05 * jax.random.normal(k1, (16, 3, 5, 5), jnp.float32),
        "conv2_w": 0.05 * jax.random.normal(k2, (32, 16, 3, 3), jnp.float32),
        "cell_conv_w": 0.05 * jax.random.normal(k3, (32, 64, 3, 3), jnp.float32),
        "head_w": 0.05 * jax.random.normal(k4, (32, NODE_NUM), jnp.float32),
    }
    params = prepare_params(raw_params)

    loss, prob = unknown_net_forward(x, params)
    jax.block_until_ready((loss, prob))

    loss_ref, prob_ref = reference_forward(x, raw_params)
    assert loss.shape == (1, 1) and prob.shape == (1, NODE_NUM)
    assert bool(jnp.isfinite(loss).all()) and bool(jnp.isfinite(prob).all())
    assert float(jnp.max(jnp.abs(prob - prob_ref))) < 3e-2
    assert float(jnp.max(jnp.abs(loss - loss_ref))) < 3e-2
    print("KERNEL_OK")
</pallas_src>

<mosaic_0001>
module attributes {stable_mosaic.version = 11 : i64} {
  func.func @_fused_forward_kernel(%arg0: memref<192x80xbf16, #tpu.memory_space<vmem>>, %arg1: memref<80x16xbf16, #tpu.memory_space<vmem>>, %arg2: memref<9x16x32xbf16, #tpu.memory_space<vmem>>, %arg3: memref<9x32x32xbf16, #tpu.memory_space<vmem>>, %arg4: memref<32x128xf32, #tpu.memory_space<vmem>>, %arg5: memref<8x128xf32, #tpu.memory_space<vmem>>, %arg6: memref<256x16xbf16, #tpu.memory_space<vmem>>, %arg7: memref<256x32xbf16, #tpu.memory_space<vmem>>) attributes {dimension_semantics = [], scalar_prefetch = 0 : i64, scratch_operands = 2 : i64, tpu.core_type = #tpu.core_type<tc>} {
    %cst = arith.constant 0.000000e+00 : bf16
    %0 = vector.broadcast %cst : bf16 to vector<32x16xbf16>
    %c0 = arith.constant 0 : index
    %c0_0 = arith.constant 0 : index
    %1 = vector.load %arg6[%c0, %c0_0] : memref<256x16xbf16, #tpu.memory_space<vmem>>, vector<32x16xbf16>
    tpu.vector_store %arg6[%c0, %c0_0], %0 {strides = array<i32>} : memref<256x16xbf16, #tpu.memory_space<vmem>>, vector<32x16xbf16>,
    %cst_1 = arith.constant 0.000000e+00 : bf16
    %2 = vector.broadcast %cst_1 : bf16 to vector<32x16xbf16>
    %c224 = arith.constant 224 : index
    %c0_2 = arith.constant 0 : index
    %3 = vector.load %arg6[%c224, %c0_2] : memref<256x16xbf16, #tpu.memory_space<vmem>>, vector<32x16xbf16>
    tpu.vector_store %arg6[%c224, %c0_2], %2 {strides = array<i32>} : memref<256x16xbf16, #tpu.memory_space<vmem>>, vector<32x16xbf16>,
    %cst_3 = arith.constant 0.000000e+00 : bf16
    %4 = vector.broadcast %cst_3 : bf16 to vector<32x32xbf16>
    %c0_4 = arith.constant 0 : index
    %c0_5 = arith.constant 0 : index
    %5 = vector.load %arg7[%c0_4, %c0_5] : memref<256x32xbf16, #tpu.memory_space<vmem>>, vector<32x32xbf16>
    tpu.vector_store %arg7[%c0_4, %c0_5], %4 {strides = array<i32>} : memref<256x32xbf16, #tpu.memory_space<vmem>>, vector<32x32xbf16>,
    %cst_6 = arith.constant 0.000000e+00 : bf16
    %6 = vector.broadcast %cst_6 : bf16 to vector<32x32xbf16>
    %c224_7 = arith.constant 224 : index
    %c0_8 = arith.constant 0 : index
    %7 = vector.load %arg7[%c224_7, %c0_8] : memref<256x32xbf16, #tpu.memory_space<vmem>>, vector<32x32xbf16>
    tpu.vector_store %arg7[%c224_7, %c0_8], %6 {strides = array<i32>} : memref<256x32xbf16, #tpu.memory_space<vmem>>, vector<32x32xbf16>,
    %c0_9 = arith.constant 0 : index
    %c0_10 = arith.constant 0 : index
    %8 = vector.load %arg0[%c0_9, %c0_10] : memref<192x80xbf16, #tpu.memory_space<vmem>>, vector<192x80xbf16>
    %c0_11 = arith.constant 0 : index
    %c0_12 = arith.constant 0 : index
    %9 = vector.load %arg1[%c0_11, %c0_12] : memref<80x16xbf16, #tpu.memory_space<vmem>>, vector<80x16xbf16>
    %cst_13 = arith.constant dense<0.000000e+00> : vector<192x16xf32>
    %10 = tpu.matmul %8, %9, %cst_13 {dimension_numbers = #tpu.dot_dimension_numbers<[1], [0], [0], [1], [0, 0, 1, 1], [], []>} : vector<192x80xbf16>, vector<80x16xbf16>, vector<192x16xf32> -> vector<192x16xf32>
    %cst_14 = arith.constant 0.000000e+00 : f32
    %11 = vector.broadcast %cst_14 : f32 to vector<192x16xf32>
    %12 = arith.maximumf %10, %11 : vector<192x16xf32>
    %13 = arith.truncf %12 : vector<192x16xf32> to vector<192x16xbf16>
    %c32 = arith.constant 32 : index
    %c0_15 = arith.constant 0 : index
    %14 = vector.load %arg6[%c32, %c0_15] : memref<256x16xbf16, #tpu.memory_space<vmem>>, vector<192x16xbf16>
    tpu.vector_store %arg6[%c32, %c0_15], %13 {strides = array<i32>} : memref<256x16xbf16, #tpu.memory_space<vmem>>, vector<192x16xbf16>,
    %c15 = arith.constant 15 : index
    %c0_16 = arith.constant 0 : index
    %15 = vector.load %arg6[%c15, %c0_16] : memref<256x16xbf16, #tpu.memory_space<vmem>>, vector<192x16xbf16>
    %c0_17 = arith.constant 0 : index
    %c0_18 = arith.constant 0 : index
    %c0_19 = arith.constant 0 : index
    %16 = vector.load %arg2[%c0_17, %c0_18, %c0_19] : memref<9x16x32xbf16, #tpu.memory_space<vmem>>, vector<1x16x32xbf16>
    %17 = vector.shape_cast %16 : vector<1x16x32xbf16> to vector<16x32xbf16>
    %cst_20 = arith.constant dense<0.000000e+00> : vector<192x32xf32>
    %18 = tpu.matmul %15, %17, %cst_20 {dimension_numbers = #tpu.dot_dimension_numbers<[1], [0], [0], [1], [0, 0, 1, 1], [], []>} : vector<192x16xbf16>, vector<16x32xbf16>, vector<192x32xf32> -> vector<192x32xf32>
    %c16 = arith.constant 16 : index
    %c0_21 = arith.constant 0 : index
    %19 = vector.load %arg6[%c16, %c0_21] : memref<256x16xbf16, #tpu.memory_space<vmem>>, vector<192x16xbf16>
    %c1 = arith.constant 1 : index
    %c0_22 = arith.constant 0 : index
    %c0_23 = arith.constant 0 : index
    %20 = vector.load %arg2[%c1, %c0_22, %c0_23] : memref<9x16x32xbf16, #tpu.memory_space<vmem>>, vector<1x16x32xbf16>
    %21 = vector.shape_cast %20 : vector<1x16x32xbf16> to vector<16x32xbf16>
    %cst_24 = arith.constant dense<0.000000e+00> : vector<192x32xf32>
    %22 = tpu.matmul %19, %21, %cst_24 {dimension_numbers = #tpu.dot_dimension_numbers<[1], [0], [0], [1], [0, 0, 1, 1], [], []>} : vector<192x16xbf16>, vector<16x32xbf16>, vector<192x32xf32> -> vector<192x32xf32>
    %23 = arith.addf %18, %22 : vector<192x32xf32>
    %c17 = arith.constant 17 : index
    %c0_25 = arith.constant 0 : index
    %24 = vector.load %arg6[%c17, %c0_25] : memref<256x16xbf16, #tpu.memory_space<vmem>>, vector<192x16xbf16>
    %c2 = arith.constant 2 : index
    %c0_26 = arith.constant 0 : index
    %c0_27 = arith.constant 0 : index
    %25 = vector.load %arg2[%c2, %c0_26, %c0_27] : memref<9x16x32xbf16, #tpu.memory_space<vmem>>, vector<1x16x32xbf16>
    %26 = vector.shape_cast %25 : vector<1x16x32xbf16> to vector<16x32xbf16>
    %cst_28 = arith.constant dense<0.000000e+00> : vector<192x32xf32>
    %27 = tpu.matmul %24, %26, %cst_28 {dimension_numbers = #tpu.dot_dimension_numbers<[1], [0], [0], [1], [0, 0, 1, 1], [], []>} : vector<192x16xbf16>, vector<16x32xbf16>, vector<192x32xf32> -> vector<192x32xf32>
    %28 = arith.addf %23, %27 : vector<192x32xf32>
    %c31 = arith.constant 31 : index
    %c0_29 = arith.constant 0 : index
    %29 = vector.load %arg6[%c31, %c0_29] : memref<256x16xbf16, #tpu.memory_space<vmem>>, vector<192x16xbf16>
    %c3 = arith.constant 3 : index
    %c0_30 = arith.constant 0 : index
    %c0_31 = arith.constant 0 : index
    %30 = vector.load %arg2[%c3, %c0_30, %c0_31] : memref<9x16x32xbf16, #tpu.memory_space<vmem>>, vector<1x16x32xbf16>
    %31 = vector.shape_cast %30 : vector<1x16x32xbf16> to vector<16x32xbf16>
    %cst_32 = arith.constant dense<0.000000e+00> : vector<192x32xf32>
    %32 = tpu.matmul %29, %31, %cst_32 {dimension_numbers = #tpu.dot_dimension_numbers<[1], [0], [0], [1], [0, 0, 1, 1], [], []>} : vector<192x16xbf16>, vector<16x32xbf16>, vector<192x32xf32> -> vector<192x32xf32>
    %33 = arith.addf %28, %32 : vector<192x32xf32>
    %c32_33 = arith.constant 32 : index
    %c0_34 = arith.constant 0 : index
    %34 = vector.load %arg6[%c32_33, %c0_34] : memref<256x16xbf16, #tpu.memory_space<vmem>>, vector<192x16xbf16>
    %c4 = arith.constant 4 : index
    %c0_35 = arith.constant 0 : index
    %c0_36 = arith.constant 0 : index
    %35 = vector.load %arg2[%c4, %c0_35, %c0_36] : memref<9x16x32xbf16, #tpu.memory_space<vmem>>, vector<1x16x32xbf16>
    %36 = vector.shape_cast %35 : vector<1x16x32xbf16> to vector<16x32xbf16>
    %cst_37 = arith.constant dense<0.000000e+00> : vector<192x32xf32>
    %37 = tpu.matmul %34, %36, %cst_37 {dimension_numbers = #tpu.dot_dimension_numbers<[1], [0], [0], [1], [0, 0, 1, 1], [], []>} : vector<192x16xbf16>, vector<16x32xbf16>, vector<192x32xf32> -> vector<192x32xf32>
    %38 = arith.addf %33, %37 : vector<192x32xf32>
    %c33 = arith.constant 33 : index
    %c0_38 = arith.constant 0 : index
    %39 = vector.load %arg6[%c33, %c0_38] : memref<256x16xbf16, #tpu.memory_space<vmem>>, vector<192x16xbf16>
    %c5 = arith.constant 5 : index
    %c0_39 = arith.constant 0 : index
    %c0_40 = arith.constant 0 : index
    %40 = vector.load %arg2[%c5, %c0_39, %c0_40] : memref<9x16x32xbf16, #tpu.memory_space<vmem>>, vector<1x16x32xbf16>
    %41 = vector.shape_cast %40 : vector<1x16x32xbf16> to vector<16x32xbf16>
    %cst_41 = arith.constant dense<0.000000e+00> : vector<192x32xf32>
    %42 = tpu.matmul %39, %41, %cst_41 {dimension_numbers = #tpu.dot_dimension_numbers<[1], [0], [0], [1], [0, 0, 1, 1], [], []>} : vector<192x16xbf16>, vector<16x32xbf16>, vector<192x32xf32> -> vector<192x32xf32>
    %43 = arith.addf %38, %42 : vector<192x32xf32>
    %c47 = arith.constant 47 : index
    %c0_42 = arith.constant 0 : index
    %44 = vector.load %arg6[%c47, %c0_42] : memref<256x16xbf16, #tpu.memory_space<vmem>>, vector<192x16xbf16>
    %c6 = arith.constant 6 : index
    %c0_43 = arith.constant 0 : index
    %c0_44 = arith.constant 0 : index
    %45 = vector.load %arg2[%c6, %c0_43, %c0_44] : memref<9x16x32xbf16, #tpu.memory_space<vmem>>, vector<1x16x32xbf16>
    %46 = vector.shape_cast %45 : vector<1x16x32xbf16> to vector<16x32xbf16>
    %cst_45 = arith.constant dense<0.000000e+00> : vector<192x32xf32>
    %47 = tpu.matmul %44, %46, %cst_45 {dimension_numbers = #tpu.dot_dimension_numbers<[1], [0], [0], [1], [0, 0, 1, 1], [], []>} : vector<192x16xbf16>, vector<16x32xbf16>, vector<192x32xf32> -> vector<192x32xf32>
    %48 = arith.addf %43, %47 : vector<192x32xf32>
    %c48 = arith.constant 48 : index
    %c0_46 = arith.constant 0 : index
    %49 = vector.load %arg6[%c48, %c0_46] : memref<256x16xbf16, #tpu.memory_space<vmem>>, vector<192x16xbf16>
    %c7 = arith.constant 7 : index
    %c0_47 = arith.constant 0 : index
    %c0_48 = arith.constant 0 : index
    %50 = vector.load %arg2[%c7, %c0_47, %c0_48] : memref<9x16x32xbf16, #tpu.memory_space<vmem>>, vector<1x16x32xbf16>
    %51 = vector.shape_cast %50 : vector<1x16x32xbf16> to vector<16x32xbf16>
    %cst_49 = arith.constant dense<0.000000e+00> : vector<192x32xf32>
    %52 = tpu.matmul %49, %51, %cst_49 {dimension_numbers = #tpu.dot_dimension_numbers<[1], [0], [0], [1], [0, 0, 1, 1], [], []>} : vector<192x16xbf16>, vector<16x32xbf16>, vector<192x32xf32> -> vector<192x32xf32>
    %53 = arith.addf %48, %52 : vector<192x32xf32>
    %c49 = arith.constant 49 : index
    %c0_50 = arith.constant 0 : index
    %54 = vector.load %arg6[%c49, %c0_50] : memref<256x16xbf16, #tpu.memory_space<vmem>>, vector<192x16xbf16>
    %c8 = arith.constant 8 : index
    %c0_51 = arith.constant 0 : index
    %c0_52 = arith.constant 0 : index
    %55 = vector.load %arg2[%c8, %c0_51, %c0_52] : memref<9x16x32xbf16, #tpu.memory_space<vmem>>, vector<1x16x32xbf16>
    %56 = vector.shape_cast %55 : vector<1x16x32xbf16> to vector<16x32xbf16>
    %cst_53 = arith.constant dense<0.000000e+00> : vector<192x32xf32>
    %57 = tpu.matmul %54, %56, %cst_53 {dimension_numbers = #tpu.dot_dimension_numbers<[1], [0], [0], [1], [0, 0, 1, 1], [], []>} : vector<192x16xbf16>, vector<16x32xbf16>, vector<192x32xf32> -> vector<192x32xf32>
    %58 = arith.addf %53, %57 : vector<192x32xf32>
    %59 = tpu.iota {dimensions = array<i32: 0>} : vector<192x32xi32>
    %c16_i32 = arith.constant 16 : i32
    %c0_i32 = arith.constant 0 : i32
    %60 = arith.cmpi eq, %c16_i32, %c0_i32 : i32
    %c1_i32 = arith.constant 1 : i32
    %61 = arith.select %60, %c1_i32, %c16_i32 : i32
    %62 = vector.broadcast %61 : i32 to vector<192x32xi32>
    %63 = arith.remsi %59, %62 : vector<192x32xi32>
    %c0_i32_54 = arith.constant 0 : i32
    %64 = vector.broadcast %c0_i32_54 : i32 to vector<192x32xi32>
    %65 = arith.cmpi ne, %63, %64 : vector<192x32xi32>
    %c0_i32_55 = arith.constant 0 : i32
    %66 = vector.broadcast %c0_i32_55 : i32 to vector<192x32xi32>
    %67 = arith.cmpi slt, %63, %66 : vector<192x32xi32>
    %c0_i32_56 = arith.constant 0 : i32
    %68 = arith.cmpi slt, %61, %c0_i32_56 : i32
    %69 = vector.broadcast %68 : i1 to vector<192x32xi1>
    %70 = vector.broadcast %69 : vector<192x32xi1> to vector<192x32xi1>
    %71 = arith.xori %67, %70 : vector<192x32xi1>
    %72 = arith.andi %71, %65 : vector<192x32xi1>
    %73 = vector.broadcast %61 : i32 to vector<192x32xi32>
    %74 = arith.addi %63, %73 : vector<192x32xi32>
    %75 = arith.select %72, %74, %63 : vector<192x32xi1>, vector<192x32xi32>
    %c12_i32 = arith.constant 12 : i32
    %76 = vector.broadcast %c12_i32 : i32 to vector<192x32xi32>
    %77 = arith.cmpi slt, %75, %76 : vector<192x32xi32>
    %cst_57 = arith.constant 0.000000e+00 : f32
    %78 = vector.broadcast %cst_57 : f32 to vector<192x32xf32>
    %79 = arith.maximumf %58, %78 : vector<192x32xf32>
    %cst_58 = arith.constant 0.000000e+00 : f32
    %80 = vector.broadcast %cst_58 : f32 to vector<192x32xf32>
    %81 = arith.select %77, %79, %80 : vector<192x32xi1>, vector<192x32xf32>
    %82 = arith.truncf %81 : vector<192x32xf32> to vector<192x32xbf16>
    %c32_59 = arith.constant 32 : index
    %c0_60 = arith.constant 0 : index
    %83 = vector.load %arg7[%c32_59, %c0_60] : memref<256x32xbf16, #tpu.memory_space<vmem>>, vector<192x32xbf16>
    tpu.vector_store %arg7[%c32_59, %c0_60], %82 {strides = array<i32>} : memref<256x32xbf16, #tpu.memory_space<vmem>>, vector<192x32xbf16>,
    %c15_61 = arith.constant 15 : index
    %c0_62 = arith.constant 0 : index
    %84 = vector.load %arg7[%c15_61, %c0_62] : memref<256x32xbf16, #tpu.memory_space<vmem>>, vector<192x32xbf16>
    %c0_63 = arith.constant 0 : index
    %c0_64 = arith.constant 0 : index
    %c0_65 = arith.constant 0 : index
    %85 = vector.load %arg3[%c0_63, %c0_64, %c0_65] : memref<9x32x32xbf16, #tpu.memory_space<vmem>>, vector<1x32x32xbf16>
    %86 = vector.shape_cast %85 : vector<1x32x32xbf16> to vector<32x32xbf16>
    %cst_66 = arith.constant dense<0.000000e+00> : vector<192x32xf32>
    %87 = tpu.matmul %84, %86, %cst_66 {dimension_numbers = #tpu.dot_dimension_numbers<[1], [0], [0], [1], [0, 0, 1, 1], [], []>} : vector<192x32xbf16>, vector<32x32xbf16>, vector<192x32xf32> -> vector<192x32xf32>
    %c16_67 = arith.constant 16 : index
    %c0_68 = arith.constant 0 : index
    %88 = vector.load %arg7[%c16_67, %c0_68] : memref<256x32xbf16, #tpu.memory_space<vmem>>, vector<192x32xbf16>
    %c1_69 = arith.constant 1 : index
    %c0_70 = arith.constant 0 : index
    %c0_71 = arith.constant 0 : index
    %89 = vector.load %arg3[%c1_69, %c0_70, %c0_71] : memref<9x32x32xbf16, #tpu.memory_space<vmem>>, vector<1x32x32xbf16>
    %90 = vector.shape_cast %89 : vector<1x32x32xbf16> to vector<32x32xbf16>
    %cst_72 = arith.constant dense<0.000000e+00> : vector<192x32xf32>
    %91 = tpu.matmul %88, %90, %cst_72 {dimension_numbers = #tpu.dot_dimension_numbers<[1], [0], [0], [1], [0, 0, 1, 1], [], []>} : vector<192x32xbf16>, vector<32x32xbf16>, vector<192x32xf32> -> vector<192x32xf32>
    %92 = arith.addf %87, %91 : vector<192x32xf32>
    %c17_73 = arith.constant 17 : index
    %c0_74 = arith.constant 0 : index
    %93 = vector.load %arg7[%c17_73, %c0_74] : memref<256x32xbf16, #tpu.memory_space<vmem>>, vector<192x32xbf16>
    %c2_75 = arith.constant 2 : index
    %c0_76 = arith.constant 0 : index
    %c0_77 = arith.constant 0 : index
    %94 = vector.load %arg3[%c2_75, %c0_76, %c0_77] : memref<9x32x32xbf16, #tpu.memory_space<vmem>>, vector<1x32x32xbf16>
    %95 = vector.shape_cast %94 : vector<1x32x32xbf16> to vector<32x32xbf16>
    %cst_78 = arith.constant dense<0.000000e+00> : vector<192x32xf32>
    %96 = tpu.matmul %93, %95, %cst_78 {dimension_numbers = #tpu.dot_dimension_numbers<[1], [0], [0], [1], [0, 0, 1, 1], [], []>} : vector<192x32xbf16>, vector<32x32xbf16>, vector<192x32xf32> -> vector<192x32xf32>
    %97 = arith.addf %92, %96 : vector<192x32xf32>
    %c31_79 = arith.constant 31 : index
    %c0_80 = arith.constant 0 : index
    %98 = vector.load %arg7[%c31_79, %c0_80] : memref<256x32xbf16, #tpu.memory_space<vmem>>, vector<192x32xbf16>
    %c3_81 = arith.constant 3 : index
    %c0_82 = arith.constant 0 : index
    %c0_83 = arith.constant 0 : index
    %99 = vector.load %arg3[%c3_81, %c0_82, %c0_83] : memref<9x32x32xbf16, #tpu.memory_space<vmem>>, vector<1x32x32xbf16>
    %100 = vector.shape_cast %99 : vector<1x32x32xbf16> to vector<32x32xbf16>
    %cst_84 = arith.constant dense<0.000000e+00> : vector<192x32xf32>
    %101 = tpu.matmul %98, %100, %cst_84 {dimension_numbers = #tpu.dot_dimension_numbers<[1], [0], [0], [1], [0, 0, 1, 1], [], []>} : vector<192x32xbf16>, vector<32x32xbf16>, vector<192x32xf32> -> vector<192x32xf32>
    %102 = arith.addf %97, %101 : vector<192x32xf32>
    %c32_85 = arith.constant 32 : index
    %c0_86 = arith.constant 0 : index
    %103 = vector.load %arg7[%c32_85, %c0_86] : memref<256x32xbf16, #tpu.memory_space<vmem>>, vector<192x32xbf16>
    %c4_87 = arith.constant 4 : index
    %c0_88 = arith.constant 0 : index
    %c0_89 = arith.constant 0 : index
    %104 = vector.load %arg3[%c4_87, %c0_88, %c0_89] : memref<9x32x32xbf16, #tpu.memory_space<vmem>>, vector<1x32x32xbf16>
    %105 = vector.shape_cast %104 : vector<1x32x32xbf16> to vector<32x32xbf16>
    %cst_90 = arith.constant dense<0.000000e+00> : vector<192x32xf32>
    %106 = tpu.matmul %103, %105, %cst_90 {dimension_numbers = #tpu.dot_dimension_numbers<[1], [0], [0], [1], [0, 0, 1, 1], [], []>} : vector<192x32xbf16>, vector<32x32xbf16>, vector<192x32xf32> -> vector<192x32xf32>
    %107 = arith.addf %102, %106 : vector<192x32xf32>
    %c33_91 = arith.constant 33 : index
    %c0_92 = arith.constant 0 : index
    %108 = vector.load %arg7[%c33_91, %c0_92] : memref<256x32xbf16, #tpu.memory_space<vmem>>, vector<192x32xbf16>
    %c5_93 = arith.constant 5 : index
    %c0_94 = arith.constant 0 : index
    %c0_95 = arith.constant 0 : index
    %109 = vector.load %arg3[%c5_93, %c0_94, %c0_95] : memref<9x32x32xbf16, #tpu.memory_space<vmem>>, vector<1x32x32xbf16>
    %110 = vector.shape_cast %109 : vector<1x32x32xbf16> to vector<32x32xbf16>
    %cst_96 = arith.constant dense<0.000000e+00> : vector<192x32xf32>
    %111 = tpu.matmul %108, %110, %cst_96 {dimension_numbers = #tpu.dot_dimension_numbers<[1], [0], [0], [1], [0, 0, 1, 1], [], []>} : vector<192x32xbf16>, vector<32x32xbf16>, vector<192x32xf32> -> vector<192x32xf32>
    %112 = arith.addf %107, %111 : vector<192x32xf32>
    %c47_97 = arith.constant 47 : index
    %c0_98 = arith.constant 0 : index
    %113 = vector.load %arg7[%c47_97, %c0_98] : memref<256x32xbf16, #tpu.memory_space<vmem>>, vector<192x32xbf16>
    %c6_99 = arith.constant 6 : index
    %c0_100 = arith.constant 0 : index
    %c0_101 = arith.constant 0 : index
    %114 = vector.load %arg3[%c6_99, %c0_100, %c0_101] : memref<9x32x32xbf16, #tpu.memory_space<vmem>>, vector<1x32x32xbf16>
    %115 = vector.shape_cast %114 : vector<1x32x32xbf16> to vector<32x32xbf16>
    %cst_102 = arith.constant dense<0.000000e+00> : vector<192x32xf32>
    %116 = tpu.matmul %113, %115, %cst_102 {dimension_numbers = #tpu.dot_dimension_numbers<[1], [0], [0], [1], [0, 0, 1, 1], [], []>} : vector<192x32xbf16>, vector<32x32xbf16>, vector<192x32xf32> -> vector<192x32xf32>
    %117 = arith.addf %112, %116 : vector<192x32xf32>
    %c48_103 = arith.constant 48 : index
    %c0_104 = arith.constant 0 : index
    %118 = vector.load %arg7[%c48_103, %c0_104] : memref<256x32xbf16, #tpu.memory_space<vmem>>, vector<192x32xbf16>
    %c7_105 = arith.constant 7 : index
    %c0_106 = arith.constant 0 : index
    %c0_107 = arith.constant 0 : index
    %119 = vector.load %arg3[%c7_105, %c0_106, %c0_107] : memref<9x32x32xbf16, #tpu.memory_space<vmem>>, vector<1x32x32xbf16>
    %120 = vector.shape_cast %119 : vector<1x32x32xbf16> to vector<32x32xbf16>
    %cst_108 = arith.constant dense<0.000000e+00> : vector<192x32xf32>
    %121 = tpu.matmul %118, %120, %cst_108 {dimension_numbers = #tpu.dot_dimension_numbers<[1], [0], [0], [1], [0, 0, 1, 1], [], []>} : vector<192x32xbf16>, vector<32x32xbf16>, vector<192x32xf32> -> vector<192x32xf32>
    %122 = arith.addf %117, %121 : vector<192x32xf32>
    %c49_109 = arith.constant 49 : index
    %c0_110 = arith.constant 0 : index
    %123 = vector.load %arg7[%c49_109, %c0_110] : memref<256x32xbf16, #tpu.memory_space<vmem>>, vector<192x32xbf16>
    %c8_111 = arith.constant 8 : index
    %c0_112 = arith.constant 0 : index
    %c0_113 = arith.constant 0 : index
    %124 = vector.load %arg3[%c8_111, %c0_112, %c0_113] : memref<9x32x32xbf16, #tpu.memory_space<vmem>>, vector<1x32x32xbf16>
    %125 = vector.shape_cast %124 : vector<1x32x32xbf16> to vector<32x32xbf16>
    %cst_114 = arith.constant dense<0.000000e+00> : vector<192x32xf32>
    %126 = tpu.matmul %123, %125, %cst_114 {dimension_numbers = #tpu.dot_dimension_numbers<[1], [0], [0], [1], [0, 0, 1, 1], [], []>} : vector<192x32xbf16>, vector<32x32xbf16>, vector<192x32xf32> -> vector<192x32xf32>
    %127 = arith.addf %122, %126 : vector<192x32xf32>
    %128 = tpu.iota {dimensions = array<i32: 0>} : vector<192x32xi32>
    %c16_i32_115 = arith.constant 16 : i32
    %c0_i32_116 = arith.constant 0 : i32
    %129 = arith.cmpi eq, %c16_i32_115, %c0_i32_116 : i32
    %c1_i32_117 = arith.constant 1 : i32
    %130 = arith.select %129, %c1_i32_117, %c16_i32_115 : i32
    %131 = vector.broadcast %130 : i32 to vector<192x32xi32>
    %132 = arith.remsi %128, %131 : vector<192x32xi32>
    %c0_i32_118 = arith.constant 0 : i32
    %133 = vector.broadcast %c0_i32_118 : i32 to vector<192x32xi32>
    %134 = arith.cmpi ne, %132, %133 : vector<192x32xi32>
    %c0_i32_119 = arith.constant 0 : i32
    %135 = vector.broadcast %c0_i32_119 : i32 to vector<192x32xi32>
    %136 = arith.cmpi slt, %132, %135 : vector<192x32xi32>
    %c0_i32_120 = arith.constant 0 : i32
    %137 = arith.cmpi slt, %130, %c0_i32_120 : i32
    %138 = vector.broadcast %137 : i1 to vector<192x32xi1>
    %139 = vector.broadcast %138 : vector<192x32xi1> to vector<192x32xi1>
    %140 = arith.xori %136, %139 : vector<192x32xi1>
    %141 = arith.andi %140, %134 : vector<192x32xi1>
    %142 = vector.broadcast %130 : i32 to vector<192x32xi32>
    %143 = arith.addi %132, %142 : vector<192x32xi32>
    %144 = arith.select %141, %143, %132 : vector<192x32xi1>, vector<192x32xi32>
    %c12_i32_121 = arith.constant 12 : i32
    %145 = vector.broadcast %c12_i32_121 : i32 to vector<192x32xi32>
    %146 = arith.cmpi slt, %144, %145 : vector<192x32xi32>
    %cst_122 = arith.constant 0.000000e+00 : f32
    %147 = vector.broadcast %cst_122 : f32 to vector<192x32xf32>
    %148 = arith.maximumf %127, %147 : vector<192x32xf32>
    %cst_123 = arith.constant 0.000000e+00 : f32
    %149 = vector.broadcast %cst_123 : f32 to vector<192x32xf32>
    %150 = arith.select %146, %148, %149 : vector<192x32xi1>, vector<192x32xf32>
    %cst_124 = arith.constant dense<0.000000e+00> : vector<32xf32>
    %151 = vector.multi_reduction <add>, %150, %cst_124 [0] : vector<192x32xf32> to vector<32xf32>
    %152 = vector.shape_cast %151 : vector<32xf32> to vector<1x32xf32>
    %cst_125 = arith.constant 0.0069444445 : f32
    %153 = vector.broadcast %cst_125 : f32 to vector<1x32xf32>
    %154 = arith.mulf %152, %153 : vector<1x32xf32>
    %c0_126 = arith.constant 0 : index
    %c0_127 = arith.constant 0 : index
    %155 = vector.load %arg4[%c0_126, %c0_127] : memref<32x128xf32, #tpu.memory_space<vmem>>, vector<32x128xf32>
    %cst_128 = arith.constant dense<0.000000e+00> : vector<1x128xf32>
    %156 = tpu.matmul %154, %155, %cst_128 {dimension_numbers = #tpu.dot_dimension_numbers<[1], [0], [0], [1], [0, 0, 1, 1], [], []>} : vector<1x32xf32>, vector<32x128xf32>, vector<1x128xf32> -> vector<1x128xf32>
    %157 = tpu.iota {dimensions = array<i32: 1>} : vector<1x128xi32>
    %c4_i32 = arith.constant 4 : i32
    %158 = vector.broadcast %c4_i32 : i32 to vector<1x128xi32>
    %159 = arith.cmpi slt, %157, %158 : vector<1x128xi32>
    %cst_129 = arith.constant -1.000000e+30 : f32
    %160 = vector.broadcast %cst_129 : f32 to vector<1x128xf32>
    %161 = arith.select %159, %156, %160 : vector<1x128xi1>, vector<1x128xf32>
    %cst_130 = arith.constant dense<0xFF800000> : vector<1xf32>
    %162 = vector.multi_reduction <maximumf>, %161, %cst_130 [1] : vector<1x128xf32> to vector<1xf32>
    %163 = vector.shape_cast %162 : vector<1xf32> to vector<1x1xf32>
    %164 = vector.broadcast %163 : vector<1x1xf32> to vector<1x128xf32>
    %165 = arith.subf %161, %164 : vector<1x128xf32>
    %166 = math.exp %165 : vector<1x128xf32>
    %cst_131 = arith.constant dense<0.000000e+00> : vector<1xf32>
    %167 = vector.multi_reduction <add>, %166, %cst_131 [1] : vector<1x128xf32> to vector<1xf32>
    %168 = vector.shape_cast %167 : vector<1xf32> to vector<1x1xf32>
    %169 = vector.broadcast %168 : vector<1x1xf32> to vector<1x128xf32>
    %170 = arith.divf %166, %169 : vector<1x128xf32>
    %171 = math.log %168 : vector<1x1xf32>
    %172 = arith.addf %163, %171 : vector<1x1xf32>
    %c3_i32 = arith.constant 3 : i32
    %173 = vector.broadcast %c3_i32 : i32 to vector<1x128xi32>
    %174 = arith.cmpi eq, %157, %173 : vector<1x128xi32>
    %cst_132 = arith.constant 0.000000e+00 : f32
    %175 = vector.broadcast %cst_132 : f32 to vector<1x128xf32>
    %176 = arith.select %174, %156, %175 : vector<1x128xi1>, vector<1x128xf32>
    %cst_133 = arith.constant dense<0.000000e+00> : vector<1xf32>
    %177 = vector.multi_reduction <add>, %176, %cst_133 [1] : vector<1x128xf32> to vector<1xf32>
    %178 = vector.shape_cast %177 : vector<1xf32> to vector<1x1xf32>
    %179 = arith.subf %172, %178 : vector<1x1xf32>
    %180 = tpu.iota {dimensions = array<i32: 0>} : vector<8x128xi32>
    %c0_i32_134 = arith.constant 0 : i32
    %181 = vector.broadcast %c0_i32_134 : i32 to vector<8x128xi32>
    %182 = arith.cmpi eq, %180, %181 : vector<8x128xi32>
    %183 = vector.shape_cast %170 : vector<1x128xf32> to vector<1x128xf32>
    %184 = vector.broadcast %183 : vector<1x128xf32> to vector<8x128xf32>
    %c1_i32_135 = arith.constant 1 : i32
    %185 = vector.broadcast %c1_i32_135 : i32 to vector<8x128xi32>
    %186 = arith.cmpi eq, %180, %185 : vector<8x128xi32>
    %187 = vector.shape_cast %179 : vector<1x1xf32> to vector<1x1xf32>
    %188 = vector.broadcast %187 : vector<1x1xf32> to vector<8x128xf32>
    %cst_136 = arith.constant 0.000000e+00 : f32
    %189 = vector.broadcast %cst_136 : f32 to vector<8x128xf32>
    %190 = arith.select %186, %188, %189 : vector<8x128xi1>, vector<8x128xf32>
    %191 = arith.select %182, %184, %190 : vector<8x128xi1>, vector<8x128xf32>
    %c0_137 = arith.constant 0 : index
    %c0_138 = arith.constant 0 : index
    %192 = vector.load %arg5[%c0_137, %c0_138] : memref<8x128xf32, #tpu.memory_space<vmem>>, vector<8x128xf32>
    tpu.vector_store %arg5[%c0_137, %c0_138], %191 {strides = array<i32>} : memref<8x128xf32, #tpu.memory_space<vmem>>, vector<8x128xf32>,
    return
  }
}

</mosaic_0001>

<llo_original>
// kernel: unknown_net_forward.1
$region0: #{unknown_net_forward.1}
  #allocation0 [shape = 'u32[]', space=smem, size = 0x4, offset = 0x4, fixed_abs, tag = 'smem constant byte address 0x4 - core index']
  #allocation1 [shape = 'u32[144,128]{1,0:T(1,128)}', space=vmem, size = 0x12000, scoped, tag = 'internal scratch']
  #allocation2 [shape = 'bf16[256,16]{1,0:T(8,128)(2,1)}', space=vmem, size = 0x10000, scoped, tag = 'scratch operand']
  #allocation3 [shape = 'bf16[256,32]{1,0:T(8,128)(2,1)}', space=vmem, size = 0x10000, scoped, tag = 'scratch operand']
  %s0 = inlined_call_operand.vmem [shape: bf16[192,80], index: 0, kind: input, shape index: {}]
  %s1 = inlined_call_operand.vmem [shape: bf16[80,16], index: 1, kind: input, shape index: {}]
  %s2 = inlined_call_operand.vmem [shape: bf16[9,16,32], index: 2, kind: input, shape index: {}]
  %s3 = inlined_call_operand.vmem [shape: bf16[9,32,32], index: 3, kind: input, shape index: {}]
  %s4 = inlined_call_operand.vmem [shape: f32[32,128], index: 4, kind: input, shape index: {}]
  %s5 = inlined_call_operand.vmem [shape: f32[8,128], index: 5, kind: output, shape index: {}]
  %s6 = sld [smem:[#allocation0]]
  $region30: #{unknown_net_forward.1} parent=0
    _
  %s8 = ssub.s32 1, %s6
  %s9 = scalar_select 0, %s8, %s6
  // Predicated region
  $region2: #{unknown_net_forward.1} parent=0 // pred_check
    _
  $region3: #{unknown_net_forward.1} parent=0 // pred_check_branch
    %11 = sbr.rel (0) target = $region5
  $region4: #{unknown_net_forward.1} parent=0 // pred_region
    _
  $region5: #{unknown_net_forward.1} parent=0 // pred_fallthru
    _
  // Predicated region
  $region6: #{unknown_net_forward.1} parent=0 // pred_check
    _
  $region7: #{unknown_net_forward.1} parent=0 // pred_check_branch
    %13 = sbr.rel (0) target = $region9
  $region8: #{unknown_net_forward.1} parent=0 // pred_region
    _
  $region9: #{unknown_net_forward.1} parent=0 // pred_fallthru
    _
  // Predicated region
  $region10: #{unknown_net_forward.1} parent=0 // pred_check
    _
  $region11: #{unknown_net_forward.1} parent=0 // pred_check_branch
    %15 = sbr.rel (0) target = $region13
  $region12: #{unknown_net_forward.1} parent=0 // pred_region
    _
  $region13: #{unknown_net_forward.1} parent=0 // pred_fallthru
    _
  // Predicated region
  $region14: #{unknown_net_forward.1} parent=0 // pred_check
    _
  $region15: #{unknown_net_forward.1} parent=0 // pred_check_branch
    %17 = sbr.rel (0) target = $region17
  $region16: #{unknown_net_forward.1} parent=0 // pred_region
    _
  $region17: #{unknown_net_forward.1} parent=0 // pred_fallthru
    _
  // Predicated region
  $region18: #{unknown_net_forward.1} parent=0 // pred_check
    _
  $region19: #{unknown_net_forward.1} parent=0 // pred_check_branch
    %19 = sbr.rel (0) target = $region21
  $region20: #{unknown_net_forward.1} parent=0 // pred_region
    _
  $region21: #{unknown_net_forward.1} parent=0 // pred_fallthru
    _
  %vm21 = vcmask 125952
  %22 = vst.msk [vmem:[#allocation2] sm:$0xf] %vm21, 0
  %23 = vst.msk [vmem:[#allocation2 + $0x4] sm:$0xf] %vm21, 0
  %24 = vst.msk [vmem:[#allocation2 + $0x8] sm:$0xf] %vm21, 0
  %25 = vst.msk [vmem:[#allocation2 + $0xc] sm:$0xf] %vm21, 0
  %26 = vst.msk [vmem:[#allocation2 + $0x70] sm:$0xf] %vm21, 0
  %27 = vst.msk [vmem:[#allocation2 + $0x74] sm:$0xf] %vm21, 0
  %28 = vst.msk [vmem:[#allocation2 + $0x78] sm:$0xf] %vm21, 0
  %29 = vst.msk [vmem:[#allocation2 + $0x7c] sm:$0xf] %vm21, 0
  %vm30 = vcmask 257024
  %31 = vst.msk [vmem:[#allocation3] sm:$0xf] %vm30, 0
  %32 = vst.msk [vmem:[#allocation3 + $0x4] sm:$0xf] %vm30, 0
  %33 = vst.msk [vmem:[#allocation3 + $0x8] sm:$0xf] %vm30, 0
  %34 = vst.msk [vmem:[#allocation3 + $0xc] sm:$0xf] %vm30, 0
  %35 = vst.msk [vmem:[#allocation3 + $0x70] sm:$0xf] %vm30, 0
  %36 = vst.msk [vmem:[#allocation3 + $0x74] sm:$0xf] %vm30, 0
  %37 = vst.msk [vmem:[#allocation3 + $0x78] sm:$0xf] %vm30, 0
  %38 = vst.msk [vmem:[#allocation3 + $0x7c] sm:$0xf] %vm30, 0
  %v39 = vld [vmem:[%s0] sm:$0xf]
  %v40 = vld [vmem:[%s0 + $0x4] sm:$0xf]
  %v41 = vld [vmem:[%s0 + $0x8] sm:$0xf]
  %v42 = vld [vmem:[%s0 + $0xc] sm:$0xf]
  %v43 = vld [vmem:[%s0 + $0x10] sm:$0xf]
  %v44 = vld [vmem:[%s0 + $0x14] sm:$0xf]
  %v45 = vld [vmem:[%s0 + $0x18] sm:$0xf]
  %v46 = vld [vmem:[%s0 + $0x1c] sm:$0xf]
  %v47 = vld [vmem:[%s0 + $0x20] sm:$0xf]
  %v48 = vld [vmem:[%s0 + $0x24] sm:$0xf]
  %v49 = vld [vmem:[%s0 + $0x28] sm:$0xf]
  %v50 = vld [vmem:[%s0 + $0x2c] sm:$0xf]
  %v51 = vld [vmem:[%s0 + $0x30] sm:$0xf]
  %v52 = vld [vmem:[%s0 + $0x34] sm:$0xf]
  %v53 = vld [vmem:[%s0 + $0x38] sm:$0xf]
  %v54 = vld [vmem:[%s0 + $0x3c] sm:$0xf]
  %v55 = vld [vmem:[%s0 + $0x40] sm:$0xf]
  %v56 = vld [vmem:[%s0 + $0x44] sm:$0xf]
  %v57 = vld [vmem:[%s0 + $0x48] sm:$0xf]
  %v58 = vld [vmem:[%s0 + $0x4c] sm:$0xf]
  %v59 = vld [vmem:[%s0 + $0x50] sm:$0xf]
  %v60 = vld [vmem:[%s0 + $0x54] sm:$0xf]
  %v61 = vld [vmem:[%s0 + $0x58] sm:$0xf]
  %v62 = vld [vmem:[%s0 + $0x5c] sm:$0xf]
  %v63 = vld [vmem:[%s1] sm:$0xf]
  %v64 = vld [vmem:[%s1 + $0x4] sm:$0xf]
  %v65 = vld [vmem:[%s1 + $0x8] sm:$0xf]
  %v66 = vld [vmem:[%s1 + $0xc] sm:$0xf]
  %v67 = vld [vmem:[%s1 + $0x10] sm:$0xf]
  %v68 = vld [vmem:[%s1 + $0x14] sm:$0xf]
  %v69 = vld [vmem:[%s1 + $0x18] sm:$0xf]
  %v70 = vld [vmem:[%s1 + $0x1c] sm:$0xf]
  %v71 = vld [vmem:[%s1 + $0x20] sm:$0xf]
  %v72 = vld [vmem:[%s1 + $0x24] sm:$0xf]
  %v97 = vunpack.c.l.b16 %v39
  %v98 = vunpack.c.l.b16 %v40
  %v99 = vunpack.c.l.b16 %v41
  %v100 = vunpack.c.l.b16 %v42
  %v101 = vunpack.c.l.b16 %v43
  %v102 = vunpack.c.l.b16 %v44
  %v103 = vunpack.c.l.b16 %v45
  %v104 = vunpack.c.l.b16 %v46
  %v105 = vunpack.c.l.b16 %v47
  %v106 = vunpack.c.l.b16 %v48
  %v107 = vunpack.c.l.b16 %v49
  %v108 = vunpack.c.l.b16 %v50
  %v109 = vunpack.c.l.b16 %v51
  %v110 = vunpack.c.l.b16 %v52
  %v111 = vunpack.c.l.b16 %v53
  %v112 = vunpack.c.l.b16 %v54
  %v113 = vunpack.c.l.b16 %v55
  %v114 = vunpack.c.l.b16 %v56
  %v115 = vunpack.c.l.b16 %v57
  %v116 = vunpack.c.l.b16 %v58
  %v117 = vunpack.c.l.b16 %v59
  %v118 = vunpack.c.l.b16 %v60
  %v119 = vunpack.c.l.b16 %v61
  %v120 = vunpack.c.l.b16 %v62
  %v121 = vpack.c.b16 %v98, %v97
  %v122 = vpack.c.b16 %v100, %v99
  %v123 = vpack.c.b16 %v102, %v101
  %v124 = vpack.c.b16 %v104, %v103
  %v125 = vpack.c.b16 %v106, %v105
  %v126 = vpack.c.b16 %v108, %v107
  %v127 = vpack.c.b16 %v110, %v109
  %v128 = vpack.c.b16 %v112, %v111
  %v129 = vpack.c.b16 %v114, %v113
  %v130 = vpack.c.b16 %v116, %v115
  %v131 = vpack.c.b16 %v118, %v117
  %v132 = vpack.c.b16 %v120, %v119
  %v143 = vunpack.c.l.b16 %v63
  %v144 = vunpack.c.l.b16 %v64
  %v145 = vunpack.c.l.b16 %v65
  %v146 = vunpack.c.l.b16 %v66
  %v147 = vunpack.c.l.b16 %v67
  %v148 = vunpack.c.l.b16 %v68
  %v149 = vunpack.c.l.b16 %v69
  %v150 = vunpack.c.l.b16 %v70
  %v151 = vunpack.c.l.b16 %v71
  %v152 = vunpack.c.l.b16 %v72
  %v153 = vpack.c.b16 %v144, %v143
  %v154 = vpack.c.b16 %v146, %v145
  %v155 = vpack.c.b16 %v148, %v147
  %v156 = vpack.c.b16 %v150, %v149
  %v157 = vpack.c.b16 %v152, %v151
  %vm163 = vcmask 654336
  %v165 = vsel %vm163, %v121, 0
  %v168 = vsel %vm163, %v122, 0
  %v171 = vsel %vm163, %v123, 0
  %v174 = vsel %vm163, %v124, 0
  %v177 = vsel %vm163, %v125, 0
  %v180 = vsel %vm163, %v126, 0
  %v183 = vsel %vm163, %v127, 0
  %v186 = vsel %vm163, %v128, 0
  %v189 = vsel %vm163, %v129, 0
  %v192 = vsel %vm163, %v130, 0
  %v195 = vsel %vm163, %v131, 0
  %v198 = vsel %vm163, %v132, 0
  %200 = vmatprep.subr.bf16.mxu0 0
  %201 = vmatpush1.bf16.msra.mxu0 0
  %202 = vmatprep.subr.bf16.mxu0 0
  %203 = vmatpush1.bf16.msra.mxu0 0
  %204 = vmatprep.subr.bf16.mxu0 0
  %205 = vmatpush1.bf16.msra.mxu0 0
  %206 = vmatprep.subr.bf16.mxu0 0
  %207 = vmatpush1.bf16.msra.mxu0 %v157
  %208 = vmatprep.subr.bf16.mxu0 0
  %209 = vmatpush1.bf16.msra.mxu0 %v156
  %210 = vmatprep.subr.bf16.mxu0 0
  %211 = vmatpush1.bf16.msra.mxu0 %v155
  %212 = vmatprep.subr.bf16.mxu0 0
  %213 = vmatpush1.bf16.msra.mxu0 %v154
  %214 = vmatprep.subr.bf16.mxu0 0
  %215 = vmatpush1.bf16.msra.mxu0 %v153
  %216 = vmatprep.subr.bf16.mxu0 0
  %217 = vmatpush2.bf16.msra.mxu0 0
  %218 = vmatprep.subr.bf16.mxu0 0
  %219 = vmatpush2.bf16.msra.mxu0 0
  %220 = vmatprep.subr.bf16.mxu0 0
  %221 = vmatpush2.bf16.msra.mxu0 0
  %222 = vmatprep.subr.bf16.mxu0 0
  %223 = vmatpush2.bf16.msra.mxu0 0
  %224 = vmatprep.subr.bf16.mxu0 0
  %225 = vmatpush2.bf16.msra.mxu0 0
  %226 = vmatprep.subr.bf16.mxu0 0
  %227 = vmatpush2.bf16.msra.mxu0 0
  %228 = vmatprep.subr.bf16.mxu0 0
  %229 = vmatpush2.bf16.msra.mxu0 0
  %230 = vmatprep.subr.bf16.mxu0 0
  %231 = vmatpush2.bf16.msra.mxu0 0
  %232 = vmatprep.mubr.bf16.mxu0 0
  %233 = vmatmul.mubr.bf16.gmra.mxu0 %v165
  %v234 = vpop.f32.mrf.mxu0
  %v235 = vadd.f32 0.0, %v234
  %v236 = vpop.f32.mrf.mxu0
  %v237 = vpop.f32.mrf.mxu0
  %v238 = vadd.f32 0.0, %v237
  %v239 = vpop.f32.mrf.mxu0
  %240 = vmatprep.mubr.bf16.mxu0 0
  %241 = vmatmul.mubr.bf16.gmra.mxu0 %v168
  %v242 = vpop.f32.mrf.mxu0
  %v243 = vadd.f32 0.0, %v242
  %v244 = vpop.f32.mrf.mxu0
  %v245 = vpop.f32.mrf.mxu0
  %v246 = vadd.f32 0.0, %v245
  %v247 = vpop.f32.mrf.mxu0
  %248 = vmatprep.mubr.bf16.mxu0 0
  %249 = vmatmul.mubr.bf16.gmra.mxu0 %v171
  %v250 = vpop.f32.mrf.mxu0
  %v251 = vadd.f32 0.0, %v250
  %v252 = vpop.f32.mrf.mxu0
  %v253 = vpop.f32.mrf.mxu0
  %v254 = vadd.f32 0.0, %v253
  %v255 = vpop.f32.mrf.mxu0
  %256 = vmatprep.mubr.bf16.mxu0 0
  %257 = vmatmul.mubr.bf16.gmra.mxu0 %v174
  %v258 = vpop.f32.mrf.mxu0
  %v259 = vadd.f32 0.0, %v258
  %v260 = vpop.f32.mrf.mxu0
  %v261 = vpop.f32.mrf.mxu0
  %v262 = vadd.f32 0.0, %v261
  %v263 = vpop.f32.mrf.mxu0
  %264 = vmatprep.mubr.bf16.mxu0 0
  %265 = vmatmul.mubr.bf16.gmra.mxu0 %v177
  %v266 = vpop.f32.mrf.mxu0
  %v267 = vadd.f32 0.0, %v266
  %v268 = vpop.f32.mrf.mxu0
  %v269 = vpop.f32.mrf.mxu0
  %v270 = vadd.f32 0.0, %v269
  %v271 = vpop.f32.mrf.mxu0
  %272 = vmatprep.mubr.bf16.mxu0 0
  %273 = vmatmul.mubr.bf16.gmra.mxu0 %v180
  %v274 = vpop.f32.mrf.mxu0
  %v275 = vadd.f32 0.0, %v274
  %v276 = vpop.f32.mrf.mxu0
  %v277 = vpop.f32.mrf.mxu0
  %v278 = vadd.f32 0.0, %v277
  %v279 = vpop.f32.mrf.mxu0
  %280 = vmatprep.mubr.bf16.mxu0 0
  %281 = vmatmul.mubr.bf16.gmra.mxu0 %v183
  %v282 = vpop.f32.mrf.mxu0
  %v283 = vadd.f32 0.0, %v282
  %v284 = vpop.f32.mrf.mxu0
  %v285 = vpop.f32.mrf.mxu0
  %v286 = vadd.f32 0.0, %v285
  %v287 = vpop.f32.mrf.mxu0
  %288 = vmatprep.mubr.bf16.mxu0 0
  %289 = vmatmul.mubr.bf16.gmra.mxu0 %v186
  %v290 = vpop.f32.mrf.mxu0
  %v291 = vadd.f32 0.0, %v290
  %v292 = vpop.f32.mrf.mxu0
  %v293 = vpop.f32.mrf.mxu0
  %v294 = vadd.f32 0.0, %v293
  %v295 = vpop.f32.mrf.mxu0
  %296 = vmatprep.mubr.bf16.mxu0 0
  %297 = vmatmul.mubr.bf16.gmra.mxu0 %v189
  %v298 = vpop.f32.mrf.mxu0
  %v299 = vadd.f32 0.0, %v298
  %v300 = vpop.f32.mrf.mxu0
  %v301 = vpop.f32.mrf.mxu0
  %v302 = vadd.f32 0.0, %v301
  %v303 = vpop.f32.mrf.mxu0
  %304 = vmatprep.mubr.bf16.mxu0 0
  %305 = vmatmul.mubr.bf16.gmra.mxu0 %v192
  %v306 = vpop.f32.mrf.mxu0
  %v307 = vadd.f32 0.0, %v306
  %v308 = vpop.f32.mrf.mxu0
  %v309 = vpop.f32.mrf.mxu0
  %v310 = vadd.f32 0.0, %v309
  %v311 = vpop.f32.mrf.mxu0
  %312 = vmatprep.mubr.bf16.mxu0 0
  %313 = vmatmul.mubr.bf16.gmra.mxu0 %v195
  %v314 = vpop.f32.mrf.mxu0
  %v315 = vadd.f32 0.0, %v314
  %v316 = vpop.f32.mrf.mxu0
  %v317 = vpop.f32.mrf.mxu0
  %v318 = vadd.f32 0.0, %v317
  %v319 = vpop.f32.mrf.mxu0
  %320 = vmatprep.mubr.bf16.mxu0 0
  %321 = vmatmul.mubr.bf16.gmra.mxu0 %v198
  %v322 = vpop.f32.mrf.mxu0
  %v323 = vadd.f32 0.0, %v322
  %v324 = vpop.f32.mrf.mxu0
  %v325 = vpop.f32.mrf.mxu0
  %v326 = vadd.f32 0.0, %v325
  %v327 = vpop.f32.mrf.mxu0
  %328 = vdwg.mxu0
  %v329 = vmax.f32 %v235, 0.0
  %v330 = vmax.f32 %v238, 0.0
  %v331 = vmax.f32 %v243, 0.0
  %v332 = vmax.f32 %v246, 0.0
  %v333 = vmax.f32 %v251, 0.0
  %v334 = vmax.f32 %v254, 0.0
  %v335 = vmax.f32 %v259, 0.0
  %v336 = vmax.f32 %v262, 0.0
  %v337 = vmax.f32 %v267, 0.0
  %v338 = vmax.f32 %v270, 0.0
  %v339 = vmax.f32 %v275, 0.0
  %v340 = vmax.f32 %v278, 0.0
  %v341 = vmax.f32 %v283, 0.0
  %v342 = vmax.f32 %v286, 0.0
  %v343 = vmax.f32 %v291, 0.0
  %v344 = vmax.f32 %v294, 0.0
  %v345 = vmax.f32 %v299, 0.0
  %v346 = vmax.f32 %v302, 0.0
  %v347 = vmax.f32 %v307, 0.0
  %v348 = vmax.f32 %v310, 0.0
  %v349 = vmax.f32 %v315, 0.0
  %v350 = vmax.f32 %v318, 0.0
  %v351 = vmax.f32 %v323, 0.0
  %v352 = vmax.f32 %v326, 0.0
  %v353 = vpack.c.bf16 %v330, %v329
  %v354 = vpack.c.bf16 %v332, %v331
  %v355 = vpack.c.bf16 %v334, %v333
  %v356 = vpack.c.bf16 %v336, %v335
  %v357 = vpack.c.bf16 %v338, %v337
  %v358 = vpack.c.bf16 %v340, %v339
  %v359 = vpack.c.bf16 %v342, %v341
  %v360 = vpack.c.bf16 %v344, %v343
  %v361 = vpack.c.bf16 %v346, %v345
  %v362 = vpack.c.bf16 %v348, %v347
  %v363 = vpack.c.bf16 %v350, %v349
  %v364 = vpack.c.bf16 %v352, %v351
  %v377 = vunpack.c.l.b16 %v353
  %v378 = vunpack.c.h.b16 %v353
  %v379 = vunpack.c.l.b16 %v354
  %v380 = vunpack.c.h.b16 %v354
  %v381 = vunpack.c.l.b16 %v355
  %v382 = vunpack.c.h.b16 %v355
  %v383 = vunpack.c.l.b16 %v356
  %v384 = vunpack.c.h.b16 %v356
  %v385 = vunpack.c.l.b16 %v357
  %v386 = vunpack.c.h.b16 %v357
  %v387 = vunpack.c.l.b16 %v358
  %v388 = vunpack.c.h.b16 %v358
  %v389 = vunpack.c.l.b16 %v359
  %v390 = vunpack.c.h.b16 %v359
  %v391 = vunpack.c.l.b16 %v360
  %v392 = vunpack.c.h.b16 %v360
  %v393 = vunpack.c.l.b16 %v361
  %v394 = vunpack.c.h.b16 %v361
  %v395 = vunpack.c.l.b16 %v362
  %v396 = vunpack.c.h.b16 %v362
  %v397 = vunpack.c.l.b16 %v363
  %v398 = vunpack.c.h.b16 %v363
  %v399 = vunpack.c.l.b16 %v364
  %v400 = vunpack.c.h.b16 %v364
  %v401 = vpack.c.b16 %v377, %v377
  %v402 = vpack.c.b16 %v378, %v378
  %v403 = vpack.c.b16 %v379, %v379
  %v404 = vpack.c.b16 %v380, %v380
  %v405 = vpack.c.b16 %v381, %v381
  %v406 = vpack.c.b16 %v382, %v382
  %v407 = vpack.c.b16 %v383, %v383
  %v408 = vpack.c.b16 %v384, %v384
  %v409 = vpack.c.b16 %v385, %v385
  %v410 = vpack.c.b16 %v386, %v386
  %v411 = vpack.c.b16 %v387, %v387
  %v412 = vpack.c.b16 %v388, %v388
  %v413 = vpack.c.b16 %v389, %v389
  %v414 = vpack.c.b16 %v390, %v390
  %v415 = vpack.c.b16 %v391, %v391
  %v416 = vpack.c.b16 %v392, %v392
  %v417 = vpack.c.b16 %v393, %v393
  %v418 = vpack.c.b16 %v394, %v394
  %v419 = vpack.c.b16 %v395, %v395
  %v420 = vpack.c.b16 %v396, %v396
  %v421 = vpack.c.b16 %v397, %v397
  %v422 = vpack.c.b16 %v398, %v398
  %v423 = vpack.c.b16 %v399, %v399
  %v424 = vpack.c.b16 %v400, %v400
  %449 = vst.msk [vmem:[#allocation2 + $0x10] sm:$0xf] %vm21, %v401
  %450 = vst.msk [vmem:[#allocation2 + $0x14] sm:$0xf] %vm21, %v402
  %451 = vst.msk [vmem:[#allocation2 + $0x18] sm:$0xf] %vm21, %v403
  %452 = vst.msk [vmem:[#allocation2 + $0x1c] sm:$0xf] %vm21, %v404
  %453 = vst.msk [vmem:[#allocation2 + $0x20] sm:$0xf] %vm21, %v405
  %454 = vst.msk [vmem:[#allocation2 + $0x24] sm:$0xf] %vm21, %v406
  %455 = vst.msk [vmem:[#allocation2 + $0x28] sm:$0xf] %vm21, %v407
  %456 = vst.msk [vmem:[#allocation2 + $0x2c] sm:$0xf] %vm21, %v408
  %457 = vst.msk [vmem:[#allocation2 + $0x30] sm:$0xf] %vm21, %v409
  %458 = vst.msk [vmem:[#allocation2 + $0x34] sm:$0xf] %vm21, %v410
  %459 = vst.msk [vmem:[#allocation2 + $0x38] sm:$0xf] %vm21, %v411
  %460 = vst.msk [vmem:[#allocation2 + $0x3c] sm:$0xf] %vm21, %v412
  %461 = vst.msk [vmem:[#allocation2 + $0x40] sm:$0xf] %vm21, %v413
  %462 = vst.msk [vmem:[#allocation2 + $0x44] sm:$0xf] %vm21, %v414
  %463 = vst.msk [vmem:[#allocation2 + $0x48] sm:$0xf] %vm21, %v415
  %464 = vst.msk [vmem:[#allocation2 + $0x4c] sm:$0xf] %vm21, %v416
  %465 = vst.msk [vmem:[#allocation2 + $0x50] sm:$0xf] %vm21, %v417
  %466 = vst.msk [vmem:[#allocation2 + $0x54] sm:$0xf] %vm21, %v418
  %467 = vst.msk [vmem:[#allocation2 + $0x58] sm:$0xf] %vm21, %v419
  %468 = vst.msk [vmem:[#allocation2 + $0x5c] sm:$0xf] %vm21, %v420
  %469 = vst.msk [vmem:[#allocation2 + $0x60] sm:$0xf] %vm21, %v421
  %470 = vst.msk [vmem:[#allocation2 + $0x64] sm:$0xf] %vm21, %v422
  %471 = vst.msk [vmem:[#allocation2 + $0x68] sm:$0xf] %vm21, %v423
  %472 = vst.msk [vmem:[#allocation2 + $0x6c] sm:$0xf] %vm21, %v424
  %v473 = vld [vmem:[#allocation2 + $0x4] sm:$0x8]
  %v474 = vld [vmem:[#allocation2 + $0x8] sm:$0xf]
  %v475 = vld [vmem:[#allocation2 + $0xc] sm:$0xf]
  %v476 = vld [vmem:[#allocation2 + $0x10] sm:$0xf]
  %v477 = vld [vmem:[#allocation2 + $0x14] sm:$0xf]
  %v478 = vld [vmem:[#allocation2 + $0x18] sm:$0xf]
  %v479 = vld [vmem:[#allocation2 + $0x1c] sm:$0xf]
  %v480 = vld [vmem:[#allocation2 + $0x20] sm:$0xf]
  %v481 = vld [vmem:[#allocation2 + $0x24] sm:$0xf]
  %v482 = vld [vmem:[#allocation2 + $0x28] sm:$0xf]
  %v483 = vld [vmem:[#allocation2 + $0x2c] sm:$0xf]
  %v484 = vld [vmem:[#allocation2 + $0x30] sm:$0xf]
  %v485 = vld [vmem:[#allocation2 + $0x34] sm:$0xf]
  %v486 = vld [vmem:[#allocation2 + $0x38] sm:$0xf]
  %v487 = vld [vmem:[#allocation2 + $0x3c] sm:$0xf]
  %v488 = vld [vmem:[#allocation2 + $0x40] sm:$0xf]
  %v489 = vld [vmem:[#allocation2 + $0x44] sm:$0xf]
  %v490 = vld [vmem:[#allocation2 + $0x48] sm:$0xf]
  %v491 = vld [vmem:[#allocation2 + $0x4c] sm:$0xf]
  %v492 = vld [vmem:[#allocation2 + $0x50] sm:$0xf]
  %v493 = vld [vmem:[#allocation2 + $0x54] sm:$0xf]
  %v494 = vld [vmem:[#allocation2 + $0x58] sm:$0xf]
  %v495 = vld [vmem:[#allocation2 + $0x5c] sm:$0xf]
  %v496 = vld [vmem:[#allocation2 + $0x60] sm:$0xf]
  %v497 = vld [vmem:[#allocation2 + $0x64] sm:$0xf]
  %v498 = vld [vmem:[%s2] sm:$0xf]
  %v499 = vld [vmem:[%s2 + $0x4] sm:$0xf]
  %s500 = scalar_lea.vmem %s2, 8
  %v501 = vld [vmem:[%s500] sm:$0xf]
  %v502 = vld [vmem:[%s500 + $0x4] sm:$0xf]
  %v527 = vunpack.c.l.b16 %v474
  %v528 = vunpack.c.l.b16 %v475
  %v529 = vunpack.c.l.b16 %v476
  %v530 = vunpack.c.l.b16 %v477
  %v531 = vunpack.c.l.b16 %v478
  %v532 = vunpack.c.l.b16 %v479
  %v533 = vunpack.c.l.b16 %v480
  %v534 = vunpack.c.l.b16 %v481
  %v535 = vunpack.c.l.b16 %v482
  %v536 = vunpack.c.l.b16 %v483
  %v537 = vunpack.c.l.b16 %v484
  %v538 = vunpack.c.l.b16 %v485
  %v539 = vunpack.c.l.b16 %v486
  %v540 = vunpack.c.l.b16 %v487
  %v541 = vunpack.c.l.b16 %v488
  %v542 = vunpack.c.l.b16 %v489
  %v543 = vunpack.c.l.b16 %v490
  %v544 = vunpack.c.l.b16 %v491
  %v545 = vunpack.c.l.b16 %v492
  %v546 = vunpack.c.l.b16 %v493
  %v547 = vunpack.c.l.b16 %v494
  %v548 = vunpack.c.l.b16 %v495
  %v549 = vunpack.c.l.b16 %v496
  %v550 = vunpack.c.l.b16 %v497
  %v551 = vpack.c.b16 %v528, %v527
  %v552 = vpack.c.b16 %v530, %v529
  %v553 = vpack.c.b16 %v532, %v531
  %v554 = vpack.c.b16 %v534, %v533
  %v555 = vpack.c.b16 %v536, %v535
  %v556 = vpack.c.b16 %v538, %v537
  %v557 = vpack.c.b16 %v540, %v539
  %v558 = vpack.c.b16 %v542, %v541
  %v559 = vpack.c.b16 %v544, %v543
  %v560 = vpack.c.b16 %v546, %v545
  %v561 = vpack.c.b16 %v548, %v547
  %v562 = vpack.c.b16 %v550, %v549
  %v565 = vunpack.c.l.b16 %v501
  %v566 = vunpack.c.l.b16 %v502
  %v567 = vpack.c.b16 %v566, %v565
  %vm569 = vcmask 130048
  %v571 = vsel %vm569, %v551, 0
  %v574 = vsel %vm569, %v552, 0
  %v577 = vsel %vm569, %v553, 0
  %v580 = vsel %vm569, %v554, 0
  %v583 = vsel %vm569, %v555, 0
  %v586 = vsel %vm569, %v556, 0
  %v589 = vsel %vm569, %v557, 0
  %v592 = vsel %vm569, %v558, 0
  %v595 = vsel %vm569, %v559, 0
  %v598 = vsel %vm569, %v560, 0
  %v601 = vsel %vm569, %v561, 0
  %v604 = vsel %vm569, %v562, 0
  %606 = vmatprep.subr.bf16.mxu0 0
  %607 = vmatpush1.bf16.msra.mxu0 0
  %608 = vmatprep.subr.bf16.mxu0 0
  %609 = vmatpush1.bf16.msra.mxu0 0
  %610 = vmatprep.subr.bf16.mxu0 0
  %611 = vmatpush1.bf16.msra.mxu0 0
  %612 = vmatprep.subr.bf16.mxu0 0
  %613 = vmatpush1.bf16.msra.mxu0 0
  %614 = vmatprep.subr.bf16.mxu0 0
  %615 = vmatpush1.bf16.msra.mxu0 0
  %616 = vmatprep.subr.bf16.mxu0 0
  %617 = vmatpush1.bf16.msra.mxu0 0
  %618 = vmatprep.subr.bf16.mxu0 0
  %619 = vmatpush1.bf16.msra.mxu0 0
  %620 = vmatprep.subr.bf16.mxu0 0
  %621 = vmatpush1.bf16.msra.mxu0 %v567
  %622 = vmatprep.subr.bf16.mxu0 0
  %623 = vmatpush2.bf16.msra.mxu0 0
  %624 = vmatprep.subr.bf16.mxu0 0
  %625 = vmatpush2.bf16.msra.mxu0 0
  %626 = vmatprep.subr.bf16.mxu0 0
  %627 = vmatpush2.bf16.msra.mxu0 0
  %628 = vmatprep.subr.bf16.mxu0 0
  %629 = vmatpush2.bf16.msra.mxu0 0
  %630 = vmatprep.subr.bf16.mxu0 0
  %631 = vmatpush2.bf16.msra.mxu0 0
  %632 = vmatprep.subr.bf16.mxu0 0
  %633 = vmatpush2.bf16.msra.mxu0 0
  %634 = vmatprep.subr.bf16.mxu0 0
  %635 = vmatpush2.bf16.msra.mxu0 0
  %636 = vmatprep.subr.bf16.mxu0 0
  %637 = vmatpush2.bf16.msra.mxu0 0
  %638 = vmatprep.mubr.bf16.mxu0 0
  %639 = vmatmul.mubr.bf16.gmra.mxu0 %v571
  %v640 = vpop.f32.mrf.mxu0
  %v641 = vadd.f32 0.0, %v640
  %v642 = vpop.f32.mrf.mxu0
  %v643 = vpop.f32.mrf.mxu0
  %v644 = vadd.f32 0.0, %v643
  %v645 = vpop.f32.mrf.mxu0
  %646 = vmatprep.mubr.bf16.mxu0 0
  %647 = vmatmul.mubr.bf16.gmra.mxu0 %v574
  %v648 = vpop.f32.mrf.mxu0
  %v649 = vadd.f32 0.0, %v648
  %v650 = vpop.f32.mrf.mxu0
  %v651 = vpop.f32.mrf.mxu0
  %v652 = vadd.f32 0.0, %v651
  %v653 = vpop.f32.mrf.mxu0
  %654 = vmatprep.mubr.bf16.mxu0 0
  %655 = vmatmul.mubr.bf16.gmra.mxu0 %v577
  %v656 = vpop.f32.mrf.mxu0
  %v657 = vadd.f32 0.0, %v656
  %v658 = vpop.f32.mrf.mxu0
  %v659 = vpop.f32.mrf.mxu0
  %v660 = vadd.f32 0.0, %v659
  %v661 = vpop.f32.mrf.mxu0
  %662 = vmatprep.mubr.bf16.mxu0 0
  %663 = vmatmul.mubr.bf16.gmra.mxu0 %v580
  %v664 = vpop.f32.mrf.mxu0
  %v665 = vadd.f32 0.0, %v664
  %v666 = vpop.f32.mrf.mxu0
  %v667 = vpop.f32.mrf.mxu0
  %v668 = vadd.f32 0.0, %v667
  %v669 = vpop.f32.mrf.mxu0
  %670 = vmatprep.mubr.bf16.mxu0 0
  %671 = vmatmul.mubr.bf16.gmra.mxu0 %v583
  %v672 = vpop.f32.mrf.mxu0
  %v673 = vadd.f32 0.0, %v672
  %v674 = vpop.f32.mrf.mxu0
  %v675 = vpop.f32.mrf.mxu0
  %v676 = vadd.f32 0.0, %v675
  %v677 = vpop.f32.mrf.mxu0
  %678 = vmatprep.mubr.bf16.mxu0 0
  %679 = vmatmul.mubr.bf16.gmra.mxu0 %v586
  %v680 = vpop.f32.mrf.mxu0
  %v681 = vadd.f32 0.0, %v680
  %v682 = vpop.f32.mrf.mxu0
  %v683 = vpop.f32.mrf.mxu0
  %v684 = vadd.f32 0.0, %v683
  %v685 = vpop.f32.mrf.mxu0
  %686 = vmatprep.mubr.bf16.mxu0 0
  %687 = vmatmul.mubr.bf16.gmra.mxu0 %v589
  %v688 = vpop.f32.mrf.mxu0
  %v689 = vadd.f32 0.0, %v688
  %v690 = vpop.f32.mrf.mxu0
  %v691 = vpop.f32.mrf.mxu0
  %v692 = vadd.f32 0.0, %v691
  %v693 = vpop.f32.mrf.mxu0
  %694 = vmatprep.mubr.bf16.mxu0 0
  %695 = vmatmul.mubr.bf16.gmra.mxu0 %v592
  %v696 = vpop.f32.mrf.mxu0
  %v697 = vadd.f32 0.0, %v696
  %v698 = vpop.f32.mrf.mxu0
  %v699 = vpop.f32.mrf.mxu0
  %v700 = vadd.f32 0.0, %v699
  %v701 = vpop.f32.mrf.mxu0
  %702 = vmatprep.mubr.bf16.mxu0 0
  %703 = vmatmul.mubr.bf16.gmra.mxu0 %v595
  %v704 = vpop.f32.mrf.mxu0
  %v705 = vadd.f32 0.0, %v704
  %v706 = vpop.f32.mrf.mxu0
  %v707 = vpop.f32.mrf.mxu0
  %v708 = vadd.f32 0.0, %v707
  %v709 = vpop.f32.mrf.mxu0
  %710 = vmatprep.mubr.bf16.mxu0 0
  %711 = vmatmul.mubr.bf16.gmra.mxu0 %v598
  %v712 = vpop.f32.mrf.mxu0
  %v713 = vadd.f32 0.0, %v712
  %v714 = vpop.f32.mrf.mxu0
  %v715 = vpop.f32.mrf.mxu0
  %v716 = vadd.f32 0.0, %v715
  %v717 = vpop.f32.mrf.mxu0
  %718 = vmatprep.mubr.bf16.mxu0 0
  %719 = vmatmul.mubr.bf16.gmra.mxu0 %v601
  %v720 = vpop.f32.mrf.mxu0
  %v721 = vadd.f32 0.0, %v720
  %v722 = vpop.f32.mrf.mxu0
  %v723 = vpop.f32.mrf.mxu0
  %v724 = vadd.f32 0.0, %v723
  %v725 = vpop.f32.mrf.mxu0
  %726 = vmatprep.mubr.bf16.mxu0 0
  %727 = vmatmul.mubr.bf16.gmra.mxu0 %v604
  %v728 = vpop.f32.mrf.mxu0
  %v729 = vadd.f32 0.0, %v728
  %v730 = vpop.f32.mrf.mxu0
  %v731 = vpop.f32.mrf.mxu0
  %v732 = vadd.f32 0.0, %v731
  %v733 = vpop.f32.mrf.mxu0
  %734 = vdwg.mxu0
  %v736 = vunpack.c.l.b16 %v473
  %v737 = vpack.c.b16 %v527, %v736
  %v738 = vpack.c.b16 %v529, %v528
  %v739 = vpack.c.b16 %v531, %v530
  %v740 = vpack.c.b16 %v533, %v532
  %v741 = vpack.c.b16 %v535, %v534
  %v742 = vpack.c.b16 %v537, %v536
  %v743 = vpack.c.b16 %v539, %v538
  %v744 = vpack.c.b16 %v541, %v540
  %v745 = vpack.c.b16 %v543, %v542
  %v746 = vpack.c.b16 %v545, %v544
  %v747 = vpack.c.b16 %v547, %v546
  %v748 = vpack.c.b16 %v549, %v548
  %v749 = vpack.c.b16 %v550, %v550
  %vm750 = vsmask.f32 4352
  %v752 = vshrl.u32 %v737, 16
  %v754 = vrot.slane %v752, 3
  %v755 = vshll.u32 %v737, 16
  %v757 = vrot.slane %v755, 4
  %v758 = vor.u32 %v754, %v757
  %v760 = vshrl.u32 %v738, 16
  %v762 = vrot.slane %v760, 3
  %v763 = vshll.u32 %v738, 16
  %v765 = vrot.slane %v763, 4
  %v766 = vor.u32 %v762, %v765
  %v767 = vsel %vm750, %v758, %v766
  %v769 = vshrl.u32 %v739, 16
  %v771 = vrot.slane %v769, 3
  %v772 = vshll.u32 %v739, 16
  %v774 = vrot.slane %v772, 4
  %v775 = vor.u32 %v771, %v774
  %v776 = vsel %vm750, %v766, %v775
  %v778 = vshrl.u32 %v740, 16
  %v780 = vrot.slane %v778, 3
  %v781 = vshll.u32 %v740, 16
  %v783 = vrot.slane %v781, 4
  %v784 = vor.u32 %v780, %v783
  %v785 = vsel %vm750, %v775, %v784
  %v787 = vshrl.u32 %v741, 16
  %v789 = vrot.slane %v787, 3
  %v790 = vshll.u32 %v741, 16
  %v792 = vrot.slane %v790, 4
  %v793 = vor.u32 %v789, %v792
  %v794 = vsel %vm750, %v784, %v793
  %v796 = vshrl.u32 %v742, 16
  %v798 = vrot.slane %v796, 3
  %v799 = vshll.u32 %v742, 16
  %v801 = vrot.slane %v799, 4
  %v802 = vor.u32 %v798, %v801
  %v803 = vsel %vm750, %v793, %v802
  %v805 = vshrl.u32 %v743, 16
  %v807 = vrot.slane %v805, 3
  %v808 = vshll.u32 %v743, 16
  %v810 = vrot.slane %v808, 4
  %v811 = vor.u32 %v807, %v810
  %v812 = vsel %vm750, %v802, %v811
  %v814 = vshrl.u32 %v744, 16
  %v816 = vrot.slane %v814, 3
  %v817 = vshll.u32 %v744, 16
  %v819 = vrot.slane %v817, 4
  %v820 = vor.u32 %v816, %v819
  %v821 = vsel %vm750, %v811, %v820
  %v823 = vshrl.u32 %v745, 16
  %v825 = vrot.slane %v823, 3
  %v826 = vshll.u32 %v745, 16
  %v828 = vrot.slane %v826, 4
  %v829 = vor.u32 %v825, %v828
  %v830 = vsel %vm750, %v820, %v829
  %v832 = vshrl.u32 %v746, 16
  %v834 = vrot.slane %v832, 3
  %v835 = vshll.u32 %v746, 16
  %v837 = vrot.slane %v835, 4
  %v838 = vor.u32 %v834, %v837
  %v839 = vsel %vm750, %v829, %v838
  %v841 = vshrl.u32 %v747, 16
  %v843 = vrot.slane %v841, 3
  %v844 = vshll.u32 %v747, 16
  %v846 = vrot.slane %v844, 4
  %v847 = vor.u32 %v843, %v846
  %v848 = vsel %vm750, %v838, %v847
  %v850 = vshrl.u32 %v748, 16
  %v852 = vrot.slane %v850, 3
  %v853 = vshll.u32 %v748, 16
  %v855 = vrot.slane %v853, 4
  %v856 = vor.u32 %v852, %v855
  %v857 = vsel %vm750, %v847, %v856
  %v859 = vshrl.u32 %v749, 16
  %v861 = vrot.slane %v859, 3
  %v862 = vshll.u32 %v749, 16
  %v864 = vrot.slane %v862, 4
  %v865 = vor.u32 %v861, %v864
  %v866 = vsel %vm750, %v856, %v865
  %v869 = vunpack.c.l.b16 %v498
  %v870 = vunpack.c.l.b16 %v499
  %v871 = vpack.c.b16 %v870, %v869
  %v874 = vsel %vm569, %v767, 0
  %v877 = vsel %vm569, %v776, 0
  %v880 = vsel %vm569, %v785, 0
  %v883 = vsel %vm569, %v794, 0
  %v886 = vsel %vm569, %v803, 0
  %v889 = vsel %vm569, %v812, 0
  %v892 = vsel %vm569, %v821, 0
  %v895 = vsel %vm569, %v830, 0
  %v898 = vsel %vm569, %v839, 0
  %v901 = vsel %vm569, %v848, 0
  %v904 = vsel %vm569, %v857, 0
  %v907 = vsel %vm569, %v866, 0
  %909 = vmatprep.subr.bf16.mxu0 0
  %910 = vmatpush1.bf16.msra.mxu0 0
  %911 = vmatprep.subr.bf16.mxu0 0
  %912 = vmatpush1.bf16.msra.mxu0 0
  %913 = vmatprep.subr.bf16.mxu0 0
  %914 = vmatpush1.bf16.msra.mxu0 0
  %915 = vmatprep.subr.bf16.mxu0 0
  %916 = vmatpush1.bf16.msra.mxu0 0
  %917 = vmatprep.subr.bf16.mxu0 0
  %918 = vmatpush1.bf16.msra.mxu0 0
  %919 = vmatprep.subr.bf16.mxu0 0
  %920 = vmatpush1.bf16.msra.mxu0 0
  %921 = vmatprep.subr.bf16.mxu0 0
  %922 = vmatpush1.bf16.msra.mxu0 0
  %923 = vmatprep.subr.bf16.mxu0 0
  %924 = vmatpush1.bf16.msra.mxu0 %v871
  %925 = vmatprep.subr.bf16.mxu0 0
  %926 = vmatpush2.bf16.msra.mxu0 0
  %927 = vmatprep.subr.bf16.mxu0 0
  %928 = vmatpush2.bf16.msra.mxu0 0
  %929 = vmatprep.subr.bf16.mxu0 0
  %930 = vmatpush2.bf16.msra.mxu0 0
  %931 = vmatprep.subr.bf16.mxu0 0
  %932 = vmatpush2.bf16.msra.mxu0 0
  %933 = vmatprep.subr.bf16.mxu0 0
  %934 = vmatpush2.bf16.msra.mxu0 0
  %935 = vmatprep.subr.bf16.mxu0 0
  %936 = vmatpush2.bf16.msra.mxu0 0
  %937 = vmatprep.subr.bf16.mxu0 0
  %938 = vmatpush2.bf16.msra.mxu0 0
  %939 = vmatprep.subr.bf16.mxu0 0
  %940 = vmatpush2.bf16.msra.mxu0 0
  %941 = vmatprep.mubr.bf16.mxu0 0
  %942 = vmatmul.mubr.bf16.gmra.mxu0 %v874
  %v943 = vpop.f32.mrf.mxu0
  %v944 = vadd.f32 %v641, %v943
  %v945 = vpop.f32.mrf.mxu0
  %v946 = vpop.f32.mrf.mxu0
  %v947 = vadd.f32 %v644, %v946
  %v948 = vpop.f32.mrf.mxu0
  %949 = vmatprep.mubr.bf16.mxu0 0
  %950 = vmatmul.mubr.bf16.gmra.mxu0 %v877
  %v951 = vpop.f32.mrf.mxu0
  %v952 = vadd.f32 %v649, %v951
  %v953 = vpop.f32.mrf.mxu0
  %v954 = vpop.f32.mrf.mxu0
  %v955 = vadd.f32 %v652, %v954
  %v956 = vpop.f32.mrf.mxu0
  %957 = vmatprep.mubr.bf16.mxu0 0
  %958 = vmatmul.mubr.bf16.gmra.mxu0 %v880
  %v959 = vpop.f32.mrf.mxu0
  %v960 = vadd.f32 %v657, %v959
  %v961 = vpop.f32.mrf.mxu0
  %v962 = vpop.f32.mrf.mxu0
  %v963 = vadd.f32 %v660, %v962
  %v964 = vpop.f32.mrf.mxu0
  %965 = vmatprep.mubr.bf16.mxu0 0
  %966 = vmatmul.mubr.bf16.gmra.mxu0 %v883
  %v967 = vpop.f32.mrf.mxu0
  %v968 = vadd.f32 %v665, %v967
  %v969 = vpop.f32.mrf.mxu0
  %v970 = vpop.f32.mrf.mxu0
  %v971 = vadd.f32 %v668, %v970
  %v972 = vpop.f32.mrf.mxu0
  %973 = vmatprep.mubr.bf16.mxu0 0
  %974 = vmatmul.mubr.bf16.gmra.mxu0 %v886
  %v975 = vpop.f32.mrf.mxu0
  %v976 = vadd.f32 %v673, %v975
  %v977 = vpop.f32.mrf.mxu0
  %v978 = vpop.f32.mrf.mxu0
  %v979 = vadd.f32 %v676, %v978
  %v980 = vpop.f32.mrf.mxu0
  %981 = vmatprep.mubr.bf16.mxu0 0
  %982 = vmatmul.mubr.bf16.gmra.mxu0 %v889
  %v983 = vpop.f32.mrf.mxu0
  %v984 = vadd.f32 %v681, %v983
  %v985 = vpop.f32.mrf.mxu0
  %v986 = vpop.f32.mrf.mxu0
  %v987 = vadd.f32 %v684, %v986
  %v988 = vpop.f32.mrf.mxu0
  %989 = vmatprep.mubr.bf16.mxu0 0
  %990 = vmatmul.mubr.bf16.gmra.mxu0 %v892
  %v991 = vpop.f32.mrf.mxu0
  %v992 = vadd.f32 %v689, %v991
  %v993 = vpop.f32.mrf.mxu0
  %v994 = vpop.f32.mrf.mxu0
  %v995 = vadd.f32 %v692, %v994
  %v996 = vpop.f32.mrf.mxu0
  %997 = vmatprep.mubr.bf16.mxu0 0
  %998 = vmatmul.mubr.bf16.gmra.mxu0 %v895
  %v999 = vpop.f32.mrf.mxu0
  %v1000 = vadd.f32 %v697, %v999
  %v1001 = vpop.f32.mrf.mxu0
  %v1002 = vpop.f32.mrf.mxu0
  %v1003 = vadd.f32 %v700, %v1002
  %v1004 = vpop.f32.mrf.mxu0
  %1005 = vmatprep.mubr.bf16.mxu0 0
  %1006 = vmatmul.mubr.bf16.gmra.mxu0 %v898
  %v1007 = vpop.f32.mrf.mxu0
  %v1008 = vadd.f32 %v705, %v1007
  %v1009 = vpop.f32.mrf.mxu0
  %v1010 = vpop.f32.mrf.mxu0
  %v1011 = vadd.f32 %v708, %v1010
  %v1012 = vpop.f32.mrf.mxu0
  %1013 = vmatprep.mubr.bf16.mxu0 0
  %1014 = vmatmul.mubr.bf16.gmra.mxu0 %v901
  %v1015 = vpop.f32.mrf.mxu0
  %v1016 = vadd.f32 %v713, %v1015
  %v1017 = vpop.f32.mrf.mxu0
  %v1018 = vpop.f32.mrf.mxu0
  %v1019 = vadd.f32 %v716, %v1018
  %v1020 = vpop.f32.mrf.mxu0
  %1021 = vmatprep.mubr.bf16.mxu0 0
  %1022 = vmatmul.mubr.bf16.gmra.mxu0 %v904
  %v1023 = vpop.f32.mrf.mxu0
  %v1024 = vadd.f32 %v721, %v1023
  %v1025 = vpop.f32.mrf.mxu0
  %v1026 = vpop.f32.mrf.mxu0
  %v1027 = vadd.f32 %v724, %v1026
  %v1028 = vpop.f32.mrf.mxu0
  %1029 = vmatprep.mubr.bf16.mxu0 0
  %1030 = vmatmul.mubr.bf16.gmra.mxu0 %v907
  %v1031 = vpop.f32.mrf.mxu0
  %v1032 = vadd.f32 %v729, %v1031
  %v1033 = vpop.f32.mrf.mxu0
  %v1034 = vpop.f32.mrf.mxu0
  %v1035 = vadd.f32 %v732, %v1034
  %v1036 = vpop.f32.mrf.mxu0
  %1037 = vdwg.mxu0
  %v1038 = vld [vmem:[#allocation2 + $0x8] sm:$0xf]
  %v1039 = vld [vmem:[#allocation2 + $0xc] sm:$0xf]
  %v1040 = vld [vmem:[#allocation2 + $0x10] sm:$0xf]
  %v1041 = vld [vmem:[#allocation2 + $0x14] sm:$0xf]
  %v1042 = vld [vmem:[#allocation2 + $0x18] sm:$0xf]
  %v1043 = vld [vmem:[#allocation2 + $0x1c] sm:$0xf]
  %v1044 = vld [vmem:[#allocation2 + $0x20] sm:$0xf]
  %v1045 = vld [vmem:[#allocation2 + $0x24] sm:$0xf]
  %v1046 = vld [vmem:[#allocation2 + $0x28] sm:$0xf]
  %v1047 = vld [vmem:[#allocation2 + $0x2c] sm:$0xf]
  %v1048 = vld [vmem:[#allocation2 + $0x30] sm:$0xf]
  %v1049 = vld [vmem:[#allocation2 + $0x34] sm:$0xf]
  %v1050 = vld [vmem:[#allocation2 + $0x38] sm:$0xf]
  %v1051 = vld [vmem:[#allocation2 + $0x3c] sm:$0xf]
  %v1052 = vld [vmem:[#allocation2 + $0x40] sm:$0xf]
  %v1053 = vld [vmem:[#allocation2 + $0x44] sm:$0xf]
  %v1054 = vld [vmem:[#allocation2 + $0x48] sm:$0xf]
  %v1055 = vld [vmem:[#allocation2 + $0x4c] sm:$0xf]
  %v1056 = vld [vmem:[#allocation2 + $0x50] sm:$0xf]
  %v1057 = vld [vmem:[#allocation2 + $0x54] sm:$0xf]
  %v1058 = vld [vmem:[#allocation2 + $0x58] sm:$0xf]
  %v1059 = vld [vmem:[#allocation2 + $0x5c] sm:$0xf]
  %v1060 = vld [vmem:[#allocation2 + $0x60] sm:$0xf]
  %v1061 = vld [vmem:[#allocation2 + $0x64] sm:$0xf]
  %v1062 = vld [vmem:[#allocation2 + $0x68] sm:$0x1]
  %s1063 = scalar_lea.vmem %s2, 16
  %v1064 = vld [vmem:[%s1063] sm:$0xf]
  %v1065 = vld [vmem:[%s1063 + $0x4] sm:$0xf]
  %v1091 = vunpack.c.l.b16 %v1038
  %v1092 = vunpack.c.l.b16 %v1039
  %v1093 = vunpack.c.l.b16 %v1040
  %v1094 = vunpack.c.l.b16 %v1041
  %v1095 = vunpack.c.l.b16 %v1042
  %v1096 = vunpack.c.l.b16 %v1043
  %v1097 = vunpack.c.l.b16 %v1044
  %v1098 = vunpack.c.l.b16 %v1045
  %v1099 = vunpack.c.l.b16 %v1046
  %v1100 = vunpack.c.l.b16 %v1047
  %v1101 = vunpack.c.l.b16 %v1048
  %v1102 = vunpack.c.l.b16 %v1049
  %v1103 = vunpack.c.l.b16 %v1050
  %v1104 = vunpack.c.l.b16 %v1051
  %v1105 = vunpack.c.l.b16 %v1052
  %v1106 = vunpack.c.l.b16 %v1053
  %v1107 = vunpack.c.l.b16 %v1054
  %v1108 = vunpack.c.l.b16 %v1055
  %v1109 = vunpack.c.l.b16 %v1056
  %v1110 = vunpack.c.l.b16 %v1057
  %v1111 = vunpack.c.l.b16 %v1058
  %v1112 = vunpack.c.l.b16 %v1059
  %v1113 = vunpack.c.l.b16 %v1060
  %v1114 = vunpack.c.l.b16 %v1061
  %v1115 = vunpack.c.l.b16 %v1062
  %v1116 = vpack.c.b16 %v1092, %v1091
  %v1117 = vpack.c.b16 %v1094, %v1093
  %v1118 = vpack.c.b16 %v1096, %v1095
  %v1119 = vpack.c.b16 %v1098, %v1097
  %v1120 = vpack.c.b16 %v1100, %v1099
  %v1121 = vpack.c.b16 %v1102, %v1101
  %v1122 = vpack.c.b16 %v1104, %v1103
  %v1123 = vpack.c.b16 %v1106, %v1105
  %v1124 = vpack.c.b16 %v1108, %v1107
  %v1125 = vpack.c.b16 %v1110, %v1109
  %v1126 = vpack.c.b16 %v1112, %v1111
  %v1127 = vpack.c.b16 %v1114, %v1113
  %v1128 = vpack.c.b16 %v1115, %v1115
  %vm1129 = vsmask.f32 7424
  %v1131 = vshrl.u32 %v1116, 16
  %v1133 = vshll.u32 %v1116, 16
  %v1135 = vrot.slane %v1133, 1
  %v1136 = vor.u32 %v1131, %v1135
  %v1138 = vshll.u32 %v1117, 16
  %v1140 = vrot.slane %v1138, 1
  %v1141 = vsel %vm1129, %v1136, %v1140
  %v1142 = vshrl.u32 %v1117, 16
  %v1144 = vor.u32 %v1142, %v1140
  %v1146 = vshll.u32 %v1118, 16
  %v1148 = vrot.slane %v1146, 1
  %v1149 = vsel %vm1129, %v1144, %v1148
  %v1150 = vshrl.u32 %v1118, 16
  %v1152 = vor.u32 %v1150, %v1148
  %v1154 = vshll.u32 %v1119, 16
  %v1156 = vrot.slane %v1154, 1
  %v1157 = vsel %vm1129, %v1152, %v1156
  %v1158 = vshrl.u32 %v1119, 16
  %v1160 = vor.u32 %v1158, %v1156
  %v1162 = vshll.u32 %v1120, 16
  %v1164 = vrot.slane %v1162, 1
  %v1165 = vsel %vm1129, %v1160, %v1164
  %v1166 = vshrl.u32 %v1120, 16
  %v1168 = vor.u32 %v1166, %v1164
  %v1170 = vshll.u32 %v1121, 16
  %v1172 = vrot.slane %v1170, 1
  %v1173 = vsel %vm1129, %v1168, %v1172
  %v1174 = vshrl.u32 %v1121, 16
  %v1176 = vor.u32 %v1174, %v1172
  %v1178 = vshll.u32 %v1122, 16
  %v1180 = vrot.slane %v1178, 1
  %v1181 = vsel %vm1129, %v1176, %v1180
  %v1182 = vshrl.u32 %v1122, 16
  %v1184 = vor.u32 %v1182, %v1180
  %v1186 = vshll.u32 %v1123, 16
  %v1188 = vrot.slane %v1186, 1
  %v1189 = vsel %vm1129, %v1184, %v1188
  %v1190 = vshrl.u32 %v1123, 16
  %v1192 = vor.u32 %v1190, %v1188
  %v1194 = vshll.u32 %v1124, 16
  %v1196 = vrot.slane %v1194, 1
  %v1197 = vsel %vm1129, %v1192, %v1196
  %v1198 = vshrl.u32 %v1124, 16
  %v1200 = vor.u32 %v1198, %v1196
  %v1202 = vshll.u32 %v1125, 16
  %v1204 = vrot.slane %v1202, 1
  %v1205 = vsel %vm1129, %v1200, %v1204
  %v1206 = vshrl.u32 %v1125, 16
  %v1208 = vor.u32 %v1206, %v1204
  %v1210 = vshll.u32 %v1126, 16
  %v1212 = vrot.slane %v1210, 1
  %v1213 = vsel %vm1129, %v1208, %v1212
  %v1214 = vshrl.u32 %v1126, 16
  %v1216 = vor.u32 %v1214, %v1212
  %v1218 = vshll.u32 %v1127, 16
  %v1220 = vrot.slane %v1218, 1
  %v1221 = vsel %vm1129, %v1216, %v1220
  %v1222 = vshrl.u32 %v1127, 16
  %v1224 = vor.u32 %v1222, %v1220
  %v1226 = vshll.u32 %v1128, 16
  %v1228 = vrot.slane %v1226, 1
  %v1229 = vsel %vm1129, %v1224, %v1228
  %v1232 = vunpack.c.l.b16 %v1064
  %v1233 = vunpack.c.l.b16 %v1065
  %v1234 = vpack.c.b16 %v1233, %v1232
  %v1237 = vsel %vm569, %v1141, 0
  %v1240 = vsel %vm569, %v1149, 0
  %v1243 = vsel %vm569, %v1157, 0
  %v1246 = vsel %vm569, %v1165, 0
  %v1249 = vsel %vm569, %v1173, 0
  %v1252 = vsel %vm569, %v1181, 0
  %v1255 = vsel %vm569, %v1189, 0
  %v1258 = vsel %vm569, %v1197, 0
  %v1261 = vsel %vm569, %v1205, 0
  %v1264 = vsel %vm569, %v1213, 0
  %v1267 = vsel %vm569, %v1221, 0
  %v1270 = vsel %vm569, %v1229, 0
  %1272 = vmatprep.subr.bf16.mxu0 0
  %1273 = vmatpush1.bf16.msra.mxu0 0
  %1274 = vmatprep.subr.bf16.mxu0 0
  %1275 = vmatpush1.bf16.msra.mxu0 0
  %1276 = vmatprep.subr.bf16.mxu0 0
  %1277 = vmatpush1.bf16.msra.mxu0 0
  %1278 = vmatprep.subr.bf16.mxu0 0
  %1279 = vmatpush1.bf16.msra.mxu0 0
  %1280 = vmatprep.subr.bf16.mxu0 0
  %1281 = vmatpush1.bf16.msra.mxu0 0
  %1282 = vmatprep.subr.bf16.mxu0 0
  %1283 = vmatpush1.bf16.msra.mxu0 0
  %1284 = vmatprep.subr.bf16.mxu0 0
  %1285 = vmatpush1.bf16.msra.mxu0 0
  %1286 = vmatprep.subr.bf16.mxu0 0
  %1287 = vmatpush1.bf16.msra.mxu0 %v1234
  %1288 = vmatprep.subr.bf16.mxu0 0
  %1289 = vmatpush2.bf16.msra.mxu0 0
  %1290 = vmatprep.subr.bf16.mxu0 0
  %1291 = vmatpush2.bf16.msra.mxu0 0
  %1292 = vmatprep.subr.bf16.mxu0 0
  %1293 = vmatpush2.bf16.msra.mxu0 0
  %1294 = vmatprep.subr.bf16.mxu0 0
  %1295 = vmatpush2.bf16.msra.mxu0 0
  %1296 = vmatprep.subr.bf16.mxu0 0
  %1297 = vmatpush2.bf16.msra.mxu0 0
  %1298 = vmatprep.subr.bf16.mxu0 0
  %1299 = vmatpush2.bf16.msra.mxu0 0
  %1300 = vmatprep.subr.bf16.mxu0 0
  %1301 = vmatpush2.bf16.msra.mxu0 0
  %1302 = vmatprep.subr.bf16.mxu0 0
  %1303 = vmatpush2.bf16.msra.mxu0 0
  %1304 = vmatprep.mubr.bf16.mxu0 0
  %1305 = vmatmul.mubr.bf16.gmra.mxu0 %v1237
  %v1306 = vpop.f32.mrf.mxu0
  %v1307 = vadd.f32 0.0, %v1306
  %v1308 = vpop.f32.mrf.mxu0
  %v1309 = vpop.f32.mrf.mxu0
  %v1310 = vadd.f32 0.0, %v1309
  %v1311 = vpop.f32.mrf.mxu0
  %1312 = vmatprep.mubr.bf16.mxu0 0
  %1313 = vmatmul.mubr.bf16.gmra.mxu0 %v1240
  %v1314 = vpop.f32.mrf.mxu0
  %v1315 = vadd.f32 0.0, %v1314
  %v1316 = vpop.f32.mrf.mxu0
  %v1317 = vpop.f32.mrf.mxu0
  %v1318 = vadd.f32 0.0, %v1317
  %v1319 = vpop.f32.mrf.mxu0
  %1320 = vmatprep.mubr.bf16.mxu0 0
  %1321 = vmatmul.mubr.bf16.gmra.mxu0 %v1243
  %v1322 = vpop.f32.mrf.mxu0
  %v1323 = vadd.f32 0.0, %v1322
  %v1324 = vpop.f32.mrf.mxu0
  %v1325 = vpop.f32.mrf.mxu0
  %v1326 = vadd.f32 0.0, %v1325
  %v1327 = vpop.f32.mrf.mxu0
  %1328 = vmatprep.mubr.bf16.mxu0 0
  %1329 = vmatmul.mubr.bf16.gmra.mxu0 %v1246
  %v1330 = vpop.f32.mrf.mxu0
  %v1331 = vadd.f32 0.0, %v1330
  %v1332 = vpop.f32.mrf.mxu0
  %v1333 = vpop.f32.mrf.mxu0
  %v1334 = vadd.f32 0.0, %v1333
  %v1335 = vpop.f32.mrf.mxu0
  %1336 = vmatprep.mubr.bf16.mxu0 0
  %1337 = vmatmul.mubr.bf16.gmra.mxu0 %v1249
  %v1338 = vpop.f32.mrf.mxu0
  %v1339 = vadd.f32 0.0, %v1338
  %v1340 = vpop.f32.mrf.mxu0
  %v1341 = vpop.f32.mrf.mxu0
  %v1342 = vadd.f32 0.0, %v1341
  %v1343 = vpop.f32.mrf.mxu0
  %1344 = vmatprep.mubr.bf16.mxu0 0
  %1345 = vmatmul.mubr.bf16.gmra.mxu0 %v1252
  %v1346 = vpop.f32.mrf.mxu0
  %v1347 = vadd.f32 0.0, %v1346
  %v1348 = vpop.f32.mrf.mxu0
  %v1349 = vpop.f32.mrf.mxu0
  %v1350 = vadd.f32 0.0, %v1349
  %v1351 = vpop.f32.mrf.mxu0
  %1352 = vmatprep.mubr.bf16.mxu0 0
  %1353 = vmatmul.mubr.bf16.gmra.mxu0 %v1255
  %v1354 = vpop.f32.mrf.mxu0
  %v1355 = vadd.f32 0.0, %v1354
  %v1356 = vpop.f32.mrf.mxu0
  %v1357 = vpop.f32.mrf.mxu0
  %v1358 = vadd.f32 0.0, %v1357
  %v1359 = vpop.f32.mrf.mxu0
  %1360 = vmatprep.mubr.bf16.mxu0 0
  %1361 = vmatmul.mubr.bf16.gmra.mxu0 %v1258
  %v1362 = vpop.f32.mrf.mxu0
  %v1363 = vadd.f32 0.0, %v1362
  %v1364 = vpop.f32.mrf.mxu0
  %v1365 = vpop.f32.mrf.mxu0
  %v1366 = vadd.f32 0.0, %v1365
  %v1367 = vpop.f32.mrf.mxu0
  %1368 = vmatprep.mubr.bf16.mxu0 0
  %1369 = vmatmul.mubr.bf16.gmra.mxu0 %v1261
  %v1370 = vpop.f32.mrf.mxu0
  %v1371 = vadd.f32 0.0, %v1370
  %v1372 = vpop.f32.mrf.mxu0
  %v1373 = vpop.f32.mrf.mxu0
  %v1374 = vadd.f32 0.0, %v1373
  %v1375 = vpop.f32.mrf.mxu0
  %1376 = vmatprep.mubr.bf16.mxu0 0
  %1377 = vmatmul.mubr.bf16.gmra.mxu0 %v1264
  %v1378 = vpop.f32.mrf.mxu0
  %v1379 = vadd.f32 0.0, %v1378
  %v1380 = vpop.f32.mrf.mxu0
  %v1381 = vpop.f32.mrf.mxu0
  %v1382 = vadd.f32 0.0, %v1381
  %v1383 = vpop.f32.mrf.mxu0
  %1384 = vmatprep.mubr.bf16.mxu0 0
  %1385 = vmatmul.mubr.bf16.gmra.mxu0 %v1267
  %v1386 = vpop.f32.mrf.mxu0
  %v1387 = vadd.f32 0.0, %v1386
  %v1388 = vpop.f32.mrf.mxu0
  %v1389 = vpop.f32.mrf.mxu0
  %v1390 = vadd.f32 0.0, %v1389
  %v1391 = vpop.f32.mrf.mxu0
  %1392 = vmatprep.mubr.bf16.mxu0 0
  %1393 = vmatmul.mubr.bf16.gmra.mxu0 %v1270
  %v1394 = vpop.f32.mrf.mxu0
  %v1395 = vadd.f32 0.0, %v1394
  %v1396 = vpop.f32.mrf.mxu0
  %v1397 = vpop.f32.mrf.mxu0
  %v1398 = vadd.f32 0.0, %v1397
  %v1399 = vpop.f32.mrf.mxu0
  %1400 = vdwg.mxu0
  %v1401 = vadd.f32 %v944, %v1307
  %v1402 = vadd.f32 %v947, %v1310
  %v1403 = vadd.f32 %v952, %v1315
  %v1404 = vadd.f32 %v955, %v1318
  %v1405 = vadd.f32 %v960, %v1323
  %v1406 = vadd.f32 %v963, %v1326
  %v1407 = vadd.f32 %v968, %v1331
  %v1408 = vadd.f32 %v971, %v1334
  %v1409 = vadd.f32 %v976, %v1339
  %v1410 = vadd.f32 %v979, %v1342
  %v1411 = vadd.f32 %v984, %v1347
  %v1412 = vadd.f32 %v987, %v1350
  %v1413 = vadd.f32 %v992, %v1355
  %v1414 = vadd.f32 %v995, %v1358
  %v1415 = vadd.f32 %v1000, %v1363
  %v1416 = vadd.f32 %v1003, %v1366
  %v1417 = vadd.f32 %v1008, %v1371
  %v1418 = vadd.f32 %v1011, %v1374
  %v1419 = vadd.f32 %v1016, %v1379
  %v1420 = vadd.f32 %v1019, %v1382
  %v1421 = vadd.f32 %v1024, %v1387
  %v1422 = vadd.f32 %v1027, %v1390
  %v1423 = vadd.f32 %v1032, %v1395
  %v1424 = vadd.f32 %v1035, %v1398
  %v1425 = vld [vmem:[#allocation2 + $0xc] sm:$0x8]
  %v1426 = vld [vmem:[#allocation2 + $0x10] sm:$0xf]
  %v1427 = vld [vmem:[#allocation2 + $0x14] sm:$0xf]
  %v1428 = vld [vmem:[#allocation2 + $0x18] sm:$0xf]
  %v1429 = vld [vmem:[#allocation2 + $0x1c] sm:$0xf]
  %v1430 = vld [vmem:[#allocation2 + $0x20] sm:$0xf]
  %v1431 = vld [vmem:[#allocation2 + $0x24] sm:$0xf]
  %v1432 = vld [vmem:[#allocation2 + $0x28] sm:$0xf]
  %v1433 = vld [vmem:[#allocation2 + $0x2c] sm:$0xf]
  %v1434 = vld [vmem:[#allocation2 + $0x30] sm:$0xf]
  %v1435 = vld [vmem:[#allocation2 + $0x34] sm:$0xf]
  %v1436 = vld [vmem:[#allocation2 + $0x38] sm:$0xf]
  %v1437 = vld [vmem:[#allocation2 + $0x3c] sm:$0xf]
  %v1438 = vld [vmem:[#allocation2 + $0x40] sm:$0xf]
  %v1439 = vld [vmem:[#allocation2 + $0x44] sm:$0xf]
  %v1440 = vld [vmem:[#allocation2 + $0x48] sm:$0xf]
  %v1441 = vld [vmem:[#allocation2 + $0x4c] sm:$0xf]
  %v1442 = vld [vmem:[#allocation2 + $0x50] sm:$0xf]
  %v1443 = vld [vmem:[#allocation2 + $0x54] sm:$0xf]
  %v1444 = vld [vmem:[#allocation2 + $0x58] sm:$0xf]
  %v1445 = vld [vmem:[#allocation2 + $0x5c] sm:$0xf]
  %v1446 = vld [vmem:[#allocation2 + $0x60] sm:$0xf]
  %v1447 = vld [vmem:[#allocation2 + $0x64] sm:$0xf]
  %v1448 = vld [vmem:[#allocation2 + $0x68] sm:$0xf]
  %v1449 = vld [vmem:[#allocation2 + $0x6c] sm:$0xf]
  %s1450 = scalar_lea.vmem %s2, 24
  %v1451 = vld [vmem:[%s1450] sm:$0xf]
  %v1452 = vld [vmem:[%s1450 + $0x4] sm:$0xf]
  %v1478 = vunpack.c.l.b16 %v1425
  %v1479 = vunpack.c.l.b16 %v1426
  %v1480 = vunpack.c.l.b16 %v1427
  %v1481 = vunpack.c.l.b16 %v1428
  %v1482 = vunpack.c.l.b16 %v1429
  %v1483 = vunpack.c.l.b16 %v1430
  %v1484 = vunpack.c.l.b16 %v1431
  %v1485 = vunpack.c.l.b16 %v1432
  %v1486 = vunpack.c.l.b16 %v1433
  %v1487 = vunpack.c.l.b16 %v1434
  %v1488 = vunpack.c.l.b16 %v1435
  %v1489 = vunpack.c.l.b16 %v1436
  %v1490 = vunpack.c.l.b16 %v1437
  %v1491 = vunpack.c.l.b16 %v1438
  %v1492 = vunpack.c.l.b16 %v1439
  %v1493 = vunpack.c.l.b16 %v1440
  %v1494 = vunpack.c.l.b16 %v1441
  %v1495 = vunpack.c.l.b16 %v1442
  %v1496 = vunpack.c.l.b16 %v1443
  %v1497 = vunpack.c.l.b16 %v1444
  %v1498 = vunpack.c.l.b16 %v1445
  %v1499 = vunpack.c.l.b16 %v1446
  %v1500 = vunpack.c.l.b16 %v1447
  %v1501 = vunpack.c.l.b16 %v1448
  %v1502 = vunpack.c.l.b16 %v1449
  %v1503 = vpack.c.b16 %v1479, %v1478
  %v1504 = vpack.c.b16 %v1481, %v1480
  %v1505 = vpack.c.b16 %v1483, %v1482
  %v1506 = vpack.c.b16 %v1485, %v1484
  %v1507 = vpack.c.b16 %v1487, %v1486
  %v1508 = vpack.c.b16 %v1489, %v1488
  %v1509 = vpack.c.b16 %v1491, %v1490
  %v1510 = vpack.c.b16 %v1493, %v1492
  %v1511 = vpack.c.b16 %v1495, %v1494
  %v1512 = vpack.c.b16 %v1497, %v1496
  %v1513 = vpack.c.b16 %v1499, %v1498
  %v1514 = vpack.c.b16 %v1501, %v1500
  %v1515 = vpack.c.b16 %v1502, %v1502
  %v1517 = vshrl.u32 %v1503, 16
  %v1519 = vrot.slane %v1517, 3
  %v1520 = vshll.u32 %v1503, 16
  %v1522 = vrot.slane %v1520, 4
  %v1523 = vor.u32 %v1519, %v1522
  %v1525 = vshrl.u32 %v1504, 16
  %v1527 = vrot.slane %v1525, 3
  %v1528 = vshll.u32 %v1504, 16
  %v1530 = vrot.slane %v1528, 4
  %v1531 = vor.u32 %v1527, %v1530
  %v1532 = vsel %vm750, %v1523, %v1531
  %v1534 = vshrl.u32 %v1505, 16
  %v1536 = vrot.slane %v1534, 3
  %v1537 = vshll.u32 %v1505, 16
  %v1539 = vrot.slane %v1537, 4
  %v1540 = vor.u32 %v1536, %v1539
  %v1541 = vsel %vm750, %v1531, %v1540
  %v1543 = vshrl.u32 %v1506, 16
  %v1545 = vrot.slane %v1543, 3
  %v1546 = vshll.u32 %v1506, 16
  %v1548 = vrot.slane %v1546, 4
  %v1549 = vor.u32 %v1545, %v1548
  %v1550 = vsel %vm750, %v1540, %v1549
  %v1552 = vshrl.u32 %v1507, 16
  %v1554 = vrot.slane %v1552, 3
  %v1555 = vshll.u32 %v1507, 16
  %v1557 = vrot.slane %v1555, 4
  %v1558 = vor.u32 %v1554, %v1557
  %v1559 = vsel %vm750, %v1549, %v1558
  %v1561 = vshrl.u32 %v1508, 16
  %v1563 = vrot.slane %v1561, 3
  %v1564 = vshll.u32 %v1508, 16
  %v1566 = vrot.slane %v1564, 4
  %v1567 = vor.u32 %v1563, %v1566
  %v1568 = vsel %vm750, %v1558, %v1567
  %v1570 = vshrl.u32 %v1509, 16
  %v1572 = vrot.slane %v1570, 3
  %v1573 = vshll.u32 %v1509, 16
  %v1575 = vrot.slane %v1573, 4
  %v1576 = vor.u32 %v1572, %v1575
  %v1577 = vsel %vm750, %v1567, %v1576
  %v1579 = vshrl.u32 %v1510, 16
  %v1581 = vrot.slane %v1579, 3
  %v1582 = vshll.u32 %v1510, 16
  %v1584 = vrot.slane %v1582, 4
  %v1585 = vor.u32 %v1581, %v1584
  %v1586 = vsel %vm750, %v1576, %v1585
  %v1588 = vshrl.u32 %v1511, 16
  %v1590 = vrot.slane %v1588, 3
  %v1591 = vshll.u32 %v1511, 16
  %v1593 = vrot.slane %v1591, 4
  %v1594 = vor.u32 %v1590, %v1593
  %v1595 = vsel %vm750, %v1585, %v1594
  %v1597 = vshrl.u32 %v1512, 16
  %v1599 = vrot.slane %v1597, 3
  %v1600 = vshll.u32 %v1512, 16
  %v1602 = vrot.slane %v1600, 4
  %v1603 = vor.u32 %v1599, %v1602
  %v1604 = vsel %vm750, %v1594, %v1603
  %v1606 = vshrl.u32 %v1513, 16
  %v1608 = vrot.slane %v1606, 3
  %v1609 = vshll.u32 %v1513, 16
  %v1611 = vrot.slane %v1609, 4
  %v1612 = vor.u32 %v1608, %v1611
  %v1613 = vsel %vm750, %v1603, %v1612
  %v1615 = vshrl.u32 %v1514, 16
  %v1617 = vrot.slane %v1615, 3
  %v1618 = vshll.u32 %v1514, 16
  %v1620 = vrot.slane %v1618, 4
  %v1621 = vor.u32 %v1617, %v1620
  %v1622 = vsel %vm750, %v1612, %v1621
  %v1624 = vshrl.u32 %v1515, 16
  %v1626 = vrot.slane %v1624, 3
  %v1627 = vshll.u32 %v1515, 16
  %v1629 = vrot.slane %v1627, 4
  %v1630 = vor.u32 %v1626, %v1629
  %v1631 = vsel %vm750, %v1621, %v1630
  %v1634 = vunpack.c.l.b16 %v1451
  %v1635 = vunpack.c.l.b16 %v1452
  %v1636 = vpack.c.b16 %v1635, %v1634
  %v1639 = vsel %vm569, %v1532, 0
  %v1642 = vsel %vm569, %v1541, 0
  %v1645 = vsel %vm569, %v1550, 0
  %v1648 = vsel %vm569, %v1559, 0
  %v1651 = vsel %vm569, %v1568, 0
  %v1654 = vsel %vm569, %v1577, 0
  %v1657 = vsel %vm569, %v1586, 0
  %v1660 = vsel %vm569, %v1595, 0
  %v1663 = vsel %vm569, %v1604, 0
  %v1666 = vsel %vm569, %v1613, 0
  %v1669 = vsel %vm569, %v1622, 0
  %v1672 = vsel %vm569, %v1631, 0
  %1674 = vmatprep.subr.bf16.mxu0 0
  %1675 = vmatpush1.bf16.msra.mxu0 0
  %1676 = vmatprep.subr.bf16.mxu0 0
  %1677 = vmatpush1.bf16.msra.mxu0 0
  %1678 = vmatprep.subr.bf16.mxu0 0
  %1679 = vmatpush1.bf16.msra.mxu0 0
  %1680 = vmatprep.subr.bf16.mxu0 0
  %1681 = vmatpush1.bf16.msra.mxu0 0
  %1682 = vmatprep.subr.bf16.mxu0 0
  %1683 = vmatpush1.bf16.msra.mxu0 0
  %1684 = vmatprep.subr.bf16.mxu0 0
  %1685 = vmatpush1.bf16.msra.mxu0 0
  %1686 = vmatprep.subr.bf16.mxu0 0
  %1687 = vmatpush1.bf16.msra.mxu0 0
  %1688 = vmatprep.subr.bf16.mxu0 0
  %1689 = vmatpush1.bf16.msra.mxu0 %v1636
  %1690 = vmatprep.subr.bf16.mxu0 0
  %1691 = vmatpush2.bf16.msra.mxu0 0
  %1692 = vmatprep.subr.bf16.mxu0 0
  %1693 = vmatpush2.bf16.msra.mxu0 0
  %1694 = vmatprep.subr.bf16.mxu0 0
  %1695 = vmatpush2.bf16.msra.mxu0 0
  %1696 = vmatprep.subr.bf16.mxu0 0
  %1697 = vmatpush2.bf16.msra.mxu0 0
  %1698 = vmatprep.subr.bf16.mxu0 0
  %1699 = vmatpush2.bf16.msra.mxu0 0
  %1700 = vmatprep.subr.bf16.mxu0 0
  %1701 = vmatpush2.bf16.msra.mxu0 0
  %1702 = vmatprep.subr.bf16.mxu0 0
  %1703 = vmatpush2.bf16.msra.mxu0 0
  %1704 = vmatprep.subr.bf16.mxu0 0
  %1705 = vmatpush2.bf16.msra.mxu0 0
  %1706 = vmatprep.mubr.bf16.mxu0 0
  %1707 = vmatmul.mubr.bf16.gmra.mxu0 %v1639
  %v1708 = vpop.f32.mrf.mxu0
  %v1709 = vadd.f32 0.0, %v1708
  %v1710 = vpop.f32.mrf.mxu0
  %v1711 = vpop.f32.mrf.mxu0
  %v1712 = vadd.f32 0.0, %v1711
  %v1713 = vpop.f32.mrf.mxu0
  %1714 = vmatprep.mubr.bf16.mxu0 0
  %1715 = vmatmul.mubr.bf16.gmra.mxu0 %v1642
  %v1716 = vpop.f32.mrf.mxu0
  %v1717 = vadd.f32 0.0, %v1716
  %v1718 = vpop.f32.mrf.mxu0
  %v1719 = vpop.f32.mrf.mxu0
  %v1720 = vadd.f32 0.0, %v1719
  %v1721 = vpop.f32.mrf.mxu0
  %1722 = vmatprep.mubr.bf16.mxu0 0
  %1723 = vmatmul.mubr.bf16.gmra.mxu0 %v1645
  %v1724 = vpop.f32.mrf.mxu0
  %v1725 = vadd.f32 0.0, %v1724
  %v1726 = vpop.f32.mrf.mxu0
  %v1727 = vpop.f32.mrf.mxu0
  %v1728 = vadd.f32 0.0, %v1727
  %v1729 = vpop.f32.mrf.mxu0
  %1730 = vmatprep.mubr.bf16.mxu0 0
  %1731 = vmatmul.mubr.bf16.gmra.mxu0 %v1648
  %v1732 = vpop.f32.mrf.mxu0
  %v1733 = vadd.f32 0.0, %v1732
  %v1734 = vpop.f32.mrf.mxu0
  %v1735 = vpop.f32.mrf.mxu0
  %v1736 = vadd.f32 0.0, %v1735
  %v1737 = vpop.f32.mrf.mxu0
  %1738 = vmatprep.mubr.bf16.mxu0 0
  %1739 = vmatmul.mubr.bf16.gmra.mxu0 %v1651
  %v1740 = vpop.f32.mrf.mxu0
  %v1741 = vadd.f32 0.0, %v1740
  %v1742 = vpop.f32.mrf.mxu0
  %v1743 = vpop.f32.mrf.mxu0
  %v1744 = vadd.f32 0.0, %v1743
  %v1745 = vpop.f32.mrf.mxu0
  %1746 = vmatprep.mubr.bf16.mxu0 0
  %1747 = vmatmul.mubr.bf16.gmra.mxu0 %v1654
  %v1748 = vpop.f32.mrf.mxu0
  %v1749 = vadd.f32 0.0, %v1748
  %v1750 = vpop.f32.mrf.mxu0
  %v1751 = vpop.f32.mrf.mxu0
  %v1752 = vadd.f32 0.0, %v1751
  %v1753 = vpop.f32.mrf.mxu0
  %1754 = vmatprep.mubr.bf16.mxu0 0
  %1755 = vmatmul.mubr.bf16.gmra.mxu0 %v1657
  %v1756 = vpop.f32.mrf.mxu0
  %v1757 = vadd.f32 0.0, %v1756
  %v1758 = vpop.f32.mrf.mxu0
  %v1759 = vpop.f32.mrf.mxu0
  %v1760 = vadd.f32 0.0, %v1759
  %v1761 = vpop.f32.mrf.mxu0
  %1762 = vmatprep.mubr.bf16.mxu0 0
  %1763 = vmatmul.mubr.bf16.gmra.mxu0 %v1660
  %v1764 = vpop.f32.mrf.mxu0
  %v1765 = vadd.f32 0.0, %v1764
  %v1766 = vpop.f32.mrf.mxu0
  %v1767 = vpop.f32.mrf.mxu0
  %v1768 = vadd.f32 0.0, %v1767
  %v1769 = vpop.f32.mrf.mxu0
  %1770 = vmatprep.mubr.bf16.mxu0 0
  %1771 = vmatmul.mubr.bf16.gmra.mxu0 %v1663
  %v1772 = vpop.f32.mrf.mxu0
  %v1773 = vadd.f32 0.0, %v1772
  %v1774 = vpop.f32.mrf.mxu0
  %v1775 = vpop.f32.mrf.mxu0
  %v1776 = vadd.f32 0.0, %v1775
  %v1777 = vpop.f32.mrf.mxu0
  %1778 = vmatprep.mubr.bf16.mxu0 0
  %1779 = vmatmul.mubr.bf16.gmra.mxu0 %v1666
  %v1780 = vpop.f32.mrf.mxu0
  %v1781 = vadd.f32 0.0, %v1780
  %v1782 = vpop.f32.mrf.mxu0
  %v1783 = vpop.f32.mrf.mxu0
  %v1784 = vadd.f32 0.0, %v1783
  %v1785 = vpop.f32.mrf.mxu0
  %1786 = vmatprep.mubr.bf16.mxu0 0
  %1787 = vmatmul.mubr.bf16.gmra.mxu0 %v1669
  %v1788 = vpop.f32.mrf.mxu0
  %v1789 = vadd.f32 0.0, %v1788
  %v1790 = vpop.f32.mrf.mxu0
  %v1791 = vpop.f32.mrf.mxu0
  %v1792 = vadd.f32 0.0, %v1791
  %v1793 = vpop.f32.mrf.mxu0
  %1794 = vmatprep.mubr.bf16.mxu0 0
  %1795 = vmatmul.mubr.bf16.gmra.mxu0 %v1672
  %v1796 = vpop.f32.mrf.mxu0
  %v1797 = vadd.f32 0.0, %v1796
  %v1798 = vpop.f32.mrf.mxu0
  %v1799 = vpop.f32.mrf.mxu0
  %v1800 = vadd.f32 0.0, %v1799
  %v1801 = vpop.f32.mrf.mxu0
  %1802 = vdwg.mxu0
  %v1803 = vadd.f32 %v1401, %v1709
  %v1804 = vadd.f32 %v1402, %v1712
  %v1805 = vadd.f32 %v1403, %v1717
  %v1806 = vadd.f32 %v1404, %v1720
  %v1807 = vadd.f32 %v1405, %v1725
  %v1808 = vadd.f32 %v1406, %v1728
  %v1809 = vadd.f32 %v1407, %v1733
  %v1810 = vadd.f32 %v1408, %v1736
  %v1811 = vadd.f32 %v1409, %v1741
  %v1812 = vadd.f32 %v1410, %v1744
  %v1813 = vadd.f32 %v1411, %v1749
  %v1814 = vadd.f32 %v1412, %v1752
  %v1815 = vadd.f32 %v1413, %v1757
  %v1816 = vadd.f32 %v1414, %v1760
  %v1817 = vadd.f32 %v1415, %v1765
  %v1818 = vadd.f32 %v1416, %v1768
  %v1819 = vadd.f32 %v1417, %v1773
  %v1820 = vadd.f32 %v1418, %v1776
  %v1821 = vadd.f32 %v1419, %v1781
  %v1822 = vadd.f32 %v1420, %v1784
  %v1823 = vadd.f32 %v1421, %v1789
  %v1824 = vadd.f32 %v1422, %v1792
  %v1825 = vadd.f32 %v1423, %v1797
  %v1826 = vadd.f32 %v1424, %v1800
  %s1827 = scalar_lea.vmem %s2, 32
  %v1828 = vld [vmem:[%s1827] sm:$0xf]
  %v1829 = vld [vmem:[%s1827 + $0x4] sm:$0xf]
  %v1830 = vpack.c.b16 %v1480, %v1479
  %v1831 = vpack.c.b16 %v1482, %v1481
  %v1832 = vpack.c.b16 %v1484, %v1483
  %v1833 = vpack.c.b16 %v1486, %v1485
  %v1834 = vpack.c.b16 %v1488, %v1487
  %v1835 = vpack.c.b16 %v1490, %v1489
  %v1836 = vpack.c.b16 %v1492, %v1491
  %v1837 = vpack.c.b16 %v1494, %v1493
  %v1838 = vpack.c.b16 %v1496, %v1495
  %v1839 = vpack.c.b16 %v1498, %v1497
  %v1840 = vpack.c.b16 %v1500, %v1499
  %v1841 = vpack.c.b16 %v1502, %v1501
  %v1844 = vunpack.c.l.b16 %v1828
  %v1845 = vunpack.c.l.b16 %v1829
  %v1846 = vpack.c.b16 %v1845, %v1844
  %v1849 = vsel %vm569, %v1830, 0
  %v1852 = vsel %vm569, %v1831, 0
  %v1855 = vsel %vm569, %v1832, 0
  %v1858 = vsel %vm569, %v1833, 0
  %v1861 = vsel %vm569, %v1834, 0
  %v1864 = vsel %vm569, %v1835, 0
  %v1867 = vsel %vm569, %v1836, 0
  %v1870 = vsel %vm569, %v1837, 0
  %v1873 = vsel %vm569, %v1838, 0
  %v1876 = vsel %vm569, %v1839, 0
  %v1879 = vsel %vm569, %v1840, 0
  %v1882 = vsel %vm569, %v1841, 0
  %1884 = vmatprep.subr.bf16.mxu0 0
  %1885 = vmatpush1.bf16.msra.mxu0 0
  %1886 = vmatprep.subr.bf16.mxu0 0
  %1887 = vmatpush1.bf16.msra.mxu0 0
  %1888 = vmatprep.subr.bf16.mxu0 0
  %1889 = vmatpush1.bf16.msra.mxu0 0
  %1890 = vmatprep.subr.bf16.mxu0 0
  %1891 = vmatpush1.bf16.msra.mxu0 0
  %1892 = vmatprep.subr.bf16.mxu0 0
  %1893 = vmatpush1.bf16.msra.mxu0 0
  %1894 = vmatprep.subr.bf16.mxu0 0
  %1895 = vmatpush1.bf16.msra.mxu0 0
  %1896 = vmatprep.subr.bf16.mxu0 0
  %1897 = vmatpush1.bf16.msra.mxu0 0
  %1898 = vmatprep.subr.bf16.mxu0 0
  %1899 = vmatpush1.bf16.msra.mxu0 %v1846
  %1900 = vmatprep.subr.bf16.mxu0 0
  %1901 = vmatpush2.bf16.msra.mxu0 0
  %1902 = vmatprep.subr.bf16.mxu0 0
  %1903 = vmatpush2.bf16.msra.mxu0 0
  %1904 = vmatprep.subr.bf16.mxu0 0
  %1905 = vmatpush2.bf16.msra.mxu0 0
  %1906 = vmatprep.subr.bf16.mxu0 0
  %1907 = vmatpush2.bf16.msra.mxu0 0
  %1908 = vmatprep.subr.bf16.mxu0 0
  %1909 = vmatpush2.bf16.msra.mxu0 0
  %1910 = vmatprep.subr.bf16.mxu0 0
  %1911 = vmatpush2.bf16.msra.mxu0 0
  %1912 = vmatprep.subr.bf16.mxu0 0
  %1913 = vmatpush2.bf16.msra.mxu0 0
  %1914 = vmatprep.subr.bf16.mxu0 0
  %1915 = vmatpush2.bf16.msra.mxu0 0
  %1916 = vmatprep.mubr.bf16.mxu0 0
  %1917 = vmatmul.mubr.bf16.gmra.mxu0 %v1849
  %v1918 = vpop.f32.mrf.mxu0
  %v1919 = vadd.f32 0.0, %v1918
  %v1920 = vpop.f32.mrf.mxu0
  %v1921 = vpop.f32.mrf.mxu0
  %v1922 = vadd.f32 0.0, %v1921
  %v1923 = vpop.f32.mrf.mxu0
  %1924 = vmatprep.mubr.bf16.mxu0 0
  %1925 = vmatmul.mubr.bf16.gmra.mxu0 %v1852
  %v1926 = vpop.f32.mrf.mxu0
  %v1927 = vadd.f32 0.0, %v1926
  %v1928 = vpop.f32.mrf.mxu0
  %v1929 = vpop.f32.mrf.mxu0
  %v1930 = vadd.f32 0.0, %v1929
  %v1931 = vpop.f32.mrf.mxu0
  %1932 = vmatprep.mubr.bf16.mxu0 0
  %1933 = vmatmul.mubr.bf16.gmra.mxu0 %v1855
  %v1934 = vpop.f32.mrf.mxu0
  %v1935 = vadd.f32 0.0, %v1934
  %v1936 = vpop.f32.mrf.mxu0
  %v1937 = vpop.f32.mrf.mxu0
  %v1938 = vadd.f32 0.0, %v1937
  %v1939 = vpop.f32.mrf.mxu0
  %1940 = vmatprep.mubr.bf16.mxu0 0
  %1941 = vmatmul.mubr.bf16.gmra.mxu0 %v1858
  %v1942 = vpop.f32.mrf.mxu0
  %v1943 = vadd.f32 0.0, %v1942
  %v1944 = vpop.f32.mrf.mxu0
  %v1945 = vpop.f32.mrf.mxu0
  %v1946 = vadd.f32 0.0, %v1945
  %v1947 = vpop.f32.mrf.mxu0
  %1948 = vmatprep.mubr.bf16.mxu0 0
  %1949 = vmatmul.mubr.bf16.gmra.mxu0 %v1861
  %v1950 = vpop.f32.mrf.mxu0
  %v1951 = vadd.f32 0.0, %v1950
  %v1952 = vpop.f32.mrf.mxu0
  %v1953 = vpop.f32.mrf.mxu0
  %v1954 = vadd.f32 0.0, %v1953
  %v1955 = vpop.f32.mrf.mxu0
  %1956 = vmatprep.mubr.bf16.mxu0 0
  %1957 = vmatmul.mubr.bf16.gmra.mxu0 %v1864
  %v1958 = vpop.f32.mrf.mxu0
  %v1959 = vadd.f32 0.0, %v1958
  %v1960 = vpop.f32.mrf.mxu0
  %v1961 = vpop.f32.mrf.mxu0
  %v1962 = vadd.f32 0.0, %v1961
  %v1963 = vpop.f32.mrf.mxu0
  %1964 = vmatprep.mubr.bf16.mxu0 0
  %1965 = vmatmul.mubr.bf16.gmra.mxu0 %v1867
  %v1966 = vpop.f32.mrf.mxu0
  %v1967 = vadd.f32 0.0, %v1966
  %v1968 = vpop.f32.mrf.mxu0
  %v1969 = vpop.f32.mrf.mxu0
  %v1970 = vadd.f32 0.0, %v1969
  %v1971 = vpop.f32.mrf.mxu0
  %1972 = vmatprep.mubr.bf16.mxu0 0
  %1973 = vmatmul.mubr.bf16.gmra.mxu0 %v1870
  %v1974 = vpop.f32.mrf.mxu0
  %v1975 = vadd.f32 0.0, %v1974
  %v1976 = vpop.f32.mrf.mxu0
  %v1977 = vpop.f32.mrf.mxu0
  %v1978 = vadd.f32 0.0, %v1977
  %v1979 = vpop.f32.mrf.mxu0
  %1980 = vmatprep.mubr.bf16.mxu0 0
  %1981 = vmatmul.mubr.bf16.gmra.mxu0 %v1873
  %v1982 = vpop.f32.mrf.mxu0
  %v1983 = vadd.f32 0.0, %v1982
  %v1984 = vpop.f32.mrf.mxu0
  %v1985 = vpop.f32.mrf.mxu0
  %v1986 = vadd.f32 0.0, %v1985
  %v1987 = vpop.f32.mrf.mxu0
  %1988 = vmatprep.mubr.bf16.mxu0 0
  %1989 = vmatmul.mubr.bf16.gmra.mxu0 %v1876
  %v1990 = vpop.f32.mrf.mxu0
  %v1991 = vadd.f32 0.0, %v1990
  %v1992 = vpop.f32.mrf.mxu0
  %v1993 = vpop.f32.mrf.mxu0
  %v1994 = vadd.f32 0.0, %v1993
  %v1995 = vpop.f32.mrf.mxu0
  %1996 = vmatprep.mubr.bf16.mxu0 0
  %1997 = vmatmul.mubr.bf16.gmra.mxu0 %v1879
  %v1998 = vpop.f32.mrf.mxu0
  %v1999 = vadd.f32 0.0, %v1998
  %v2000 = vpop.f32.mrf.mxu0
  %v2001 = vpop.f32.mrf.mxu0
  %v2002 = vadd.f32 0.0, %v2001
  %v2003 = vpop.f32.mrf.mxu0
  %2004 = vmatprep.mubr.bf16.mxu0 0
  %2005 = vmatmul.mubr.bf16.gmra.mxu0 %v1882
  %v2006 = vpop.f32.mrf.mxu0
  %v2007 = vadd.f32 0.0, %v2006
  %v2008 = vpop.f32.mrf.mxu0
  %v2009 = vpop.f32.mrf.mxu0
  %v2010 = vadd.f32 0.0, %v2009
  %v2011 = vpop.f32.mrf.mxu0
  %2012 = vdwg.mxu0
  %v2013 = vadd.f32 %v1803, %v1919
  %v2014 = vadd.f32 %v1804, %v1922
  %v2015 = vadd.f32 %v1805, %v1927
  %v2016 = vadd.f32 %v1806, %v1930
  %v2017 = vadd.f32 %v1807, %v1935
  %v2018 = vadd.f32 %v1808, %v1938
  %v2019 = vadd.f32 %v1809, %v1943
  %v2020 = vadd.f32 %v1810, %v1946
  %v2021 = vadd.f32 %v1811, %v1951
  %v2022 = vadd.f32 %v1812, %v1954
  %v2023 = vadd.f32 %v1813, %v1959
  %v2024 = vadd.f32 %v1814, %v1962
  %v2025 = vadd.f32 %v1815, %v1967
  %v2026 = vadd.f32 %v1816, %v1970
  %v2027 = vadd.f32 %v1817, %v1975
  %v2028 = vadd.f32 %v1818, %v1978
  %v2029 = vadd.f32 %v1819, %v1983
  %v2030 = vadd.f32 %v1820, %v1986
  %v2031 = vadd.f32 %v1821, %v1991
  %v2032 = vadd.f32 %v1822, %v1994
  %v2033 = vadd.f32 %v1823, %v1999
  %v2034 = vadd.f32 %v1824, %v2002
  %v2035 = vadd.f32 %v1825, %v2007
  %v2036 = vadd.f32 %v1826, %v2010
  %v2037 = vld [vmem:[#allocation2 + $0x10] sm:$0xf]
  %v2038 = vld [vmem:[#allocation2 + $0x14] sm:$0xf]
  %v2039 = vld [vmem:[#allocation2 + $0x18] sm:$0xf]
  %v2040 = vld [vmem:[#allocation2 + $0x1c] sm:$0xf]
  %v2041 = vld [vmem:[#allocation2 + $0x20] sm:$0xf]
  %v2042 = vld [vmem:[#allocation2 + $0x24] sm:$0xf]
  %v2043 = vld [vmem:[#allocation2 + $0x28] sm:$0xf]
  %v2044 = vld [vmem:[#allocation2 + $0x2c] sm:$0xf]
  %v2045 = vld [vmem:[#allocation2 + $0x30] sm:$0xf]
  %v2046 = vld [vmem:[#allocation2 + $0x34] sm:$0xf]
  %v2047 = vld [vmem:[#allocation2 + $0x38] sm:$0xf]
  %v2048 = vld [vmem:[#allocation2 + $0x3c] sm:$0xf]
  %v2049 = vld [vmem:[#allocation2 + $0x40] sm:$0xf]
  %v2050 = vld [vmem:[#allocation2 + $0x44] sm:$0xf]
  %v2051 = vld [vmem:[#allocation2 + $0x48] sm:$0xf]
  %v2052 = vld [vmem:[#allocation2 + $0x4c] sm:$0xf]
  %v2053 = vld [vmem:[#allocation2 + $0x50] sm:$0xf]
  %v2054 = vld [vmem:[#allocation2 + $0x54] sm:$0xf]
  %v2055 = vld [vmem:[#allocation2 + $0x58] sm:$0xf]
  %v2056 = vld [vmem:[#allocation2 + $0x5c] sm:$0xf]
  %v2057 = vld [vmem:[#allocation2 + $0x60] sm:$0xf]
  %v2058 = vld [vmem:[#allocation2 + $0x64] sm:$0xf]
  %v2059 = vld [vmem:[#allocation2 + $0x68] sm:$0xf]
  %v2060 = vld [vmem:[#allocation2 + $0x6c] sm:$0xf]
  %v2061 = vld [vmem:[#allocation2 + $0x70] sm:$0x1]
  %s2062 = scalar_lea.vmem %s2, 40
  %v2063 = vld [vmem:[%s2062] sm:$0xf]
  %v2064 = vld [vmem:[%s2062 + $0x4] sm:$0xf]
  %v2090 = vunpack.c.l.b16 %v2037
  %v2091 = vunpack.c.l.b16 %v2038
  %v2092 = vunpack.c.l.b16 %v2039
  %v2093 = vunpack.c.l.b16 %v2040
  %v2094 = vunpack.c.l.b16 %v2041
  %v2095 = vunpack.c.l.b16 %v2042
  %v2096 = vunpack.c.l.b16 %v2043
  %v2097 = vunpack.c.l.b16 %v2044
  %v2098 = vunpack.c.l.b16 %v2045
  %v2099 = vunpack.c.l.b16 %v2046
  %v2100 = vunpack.c.l.b16 %v2047
  %v2101 = vunpack.c.l.b16 %v2048
  %v2102 = vunpack.c.l.b16 %v2049
  %v2103 = vunpack.c.l.b16 %v2050
  %v2104 = vunpack.c.l.b16 %v2051
  %v2105 = vunpack.c.l.b16 %v2052
  %v2106 = vunpack.c.l.b16 %v2053
  %v2107 = vunpack.c.l.b16 %v2054
  %v2108 = vunpack.c.l.b16 %v2055
  %v2109 = vunpack.c.l.b16 %v2056
  %v2110 = vunpack.c.l.b16 %v2057
  %v2111 = vunpack.c.l.b16 %v2058
  %v2112 = vunpack.c.l.b16 %v2059
  %v2113 = vunpack.c.l.b16 %v2060
  %v2114 = vunpack.c.l.b16 %v2061
  %v2115 = vpack.c.b16 %v2091, %v2090
  %v2116 = vpack.c.b16 %v2093, %v2092
  %v2117 = vpack.c.b16 %v2095, %v2094
  %v2118 = vpack.c.b16 %v2097, %v2096
  %v2119 = vpack.c.b16 %v2099, %v2098
  %v2120 = vpack.c.b16 %v2101, %v2100
  %v2121 = vpack.c.b16 %v2103, %v2102
  %v2122 = vpack.c.b16 %v2105, %v2104
  %v2123 = vpack.c.b16 %v2107, %v2106
  %v2124 = vpack.c.b16 %v2109, %v2108
  %v2125 = vpack.c.b16 %v2111, %v2110
  %v2126 = vpack.c.b16 %v2113, %v2112
  %v2127 = vpack.c.b16 %v2114, %v2114
  %v2129 = vshrl.u32 %v2115, 16
  %v2131 = vshll.u32 %v2115, 16
  %v2133 = vrot.slane %v2131, 1
  %v2134 = vor.u32 %v2129, %v2133
  %v2136 = vshll.u32 %v2116, 16
  %v2138 = vrot.slane %v2136, 1
  %v2139 = vsel %vm1129, %v2134, %v2138
  %v2140 = vshrl.u32 %v2116, 16
  %v2142 = vor.u32 %v2140, %v2138
  %v2144 = vshll.u32 %v2117, 16
  %v2146 = vrot.slane %v2144, 1
  %v2147 = vsel %vm1129, %v2142, %v2146
  %v2148 = vshrl.u32 %v2117, 16
  %v2150 = vor.u32 %v2148, %v2146
  %v2152 = vshll.u32 %v2118, 16
  %v2154 = vrot.slane %v2152, 1
  %v2155 = vsel %vm1129, %v2150, %v2154
  %v2156 = vshrl.u32 %v2118, 16
  %v2158 = vor.u32 %v2156, %v2154
  %v2160 = vshll.u32 %v2119, 16
  %v2162 = vrot.slane %v2160, 1
  %v2163 = vsel %vm1129, %v2158, %v2162
  %v2164 = vshrl.u32 %v2119, 16
  %v2166 = vor.u32 %v2164, %v2162
  %v2168 = vshll.u32 %v2120, 16
  %v2170 = vrot.slane %v2168, 1
  %v2171 = vsel %vm1129, %v2166, %v2170
  %v2172 = vshrl.u32 %v2120, 16
  %v2174 = vor.u32 %v2172, %v2170
  %v2176 = vshll.u32 %v2121, 16
  %v2178 = vrot.slane %v2176, 1
  %v2179 = vsel %vm1129, %v2174, %v2178
  %v2180 = vshrl.u32 %v2121, 16
  %v2182 = vor.u32 %v2180, %v2178
  %v2184 = vshll.u32 %v2122, 16
  %v2186 = vrot.slane %v2184, 1
  %v2187 = vsel %vm1129, %v2182, %v2186
  %v2188 = vshrl.u32 %v2122, 16
  %v2190 = vor.u32 %v2188, %v2186
  %v2192 = vshll.u32 %v2123, 16
  %v2194 = vrot.slane %v2192, 1
  %v2195 = vsel %vm1129, %v2190, %v2194
  %v2196 = vshrl.u32 %v2123, 16
  %v2198 = vor.u32 %v2196, %v2194
  %v2200 = vshll.u32 %v2124, 16
  %v2202 = vrot.slane %v2200, 1
  %v2203 = vsel %vm1129, %v2198, %v2202
  %v2204 = vshrl.u32 %v2124, 16
  %v2206 = vor.u32 %v2204, %v2202
  %v2208 = vshll.u32 %v2125, 16
  %v2210 = vrot.slane %v2208, 1
  %v2211 = vsel %vm1129, %v2206, %v2210
  %v2212 = vshrl.u32 %v2125, 16
  %v2214 = vor.u32 %v2212, %v2210
  %v2216 = vshll.u32 %v2126, 16
  %v2218 = vrot.slane %v2216, 1
  %v2219 = vsel %vm1129, %v2214, %v2218
  %v2220 = vshrl.u32 %v2126, 16
  %v2222 = vor.u32 %v2220, %v2218
  %v2224 = vshll.u32 %v2127, 16
  %v2226 = vrot.slane %v2224, 1
  %v2227 = vsel %vm1129, %v2222, %v2226
  %v2230 = vunpack.c.l.b16 %v2063
  %v2231 = vunpack.c.l.b16 %v2064
  %v2232 = vpack.c.b16 %v2231, %v2230
  %v2235 = vsel %vm569, %v2139, 0
  %v2238 = vsel %vm569, %v2147, 0
  %v2241 = vsel %vm569, %v2155, 0
  %v2244 = vsel %vm569, %v2163, 0
  %v2247 = vsel %vm569, %v2171, 0
  %v2250 = vsel %vm569, %v2179, 0
  %v2253 = vsel %vm569, %v2187, 0
  %v2256 = vsel %vm569, %v2195, 0
  %v2259 = vsel %vm569, %v2203, 0
  %v2262 = vsel %vm569, %v2211, 0
  %v2265 = vsel %vm569, %v2219, 0
  %v2268 = vsel %vm569, %v2227, 0
  %2270 = vmatprep.subr.bf16.mxu0 0
  %2271 = vmatpush1.bf16.msra.mxu0 0
  %2272 = vmatprep.subr.bf16.mxu0 0
  %2273 = vmatpush1.bf16.msra.mxu0 0
  %2274 = vmatprep.subr.bf16.mxu0 0
  %2275 = vmatpush1.bf16.msra.mxu0 0
  %2276 = vmatprep.subr.bf16.mxu0 0
  %2277 = vmatpush1.bf16.msra.mxu0 0
  %2278 = vmatprep.subr.bf16.mxu0 0
  %2279 = vmatpush1.bf16.msra.mxu0 0
  %2280 = vmatprep.subr.bf16.mxu0 0
  %2281 = vmatpush1.bf16.msra.mxu0 0
  %2282 = vmatprep.subr.bf16.mxu0 0
  %2283 = vmatpush1.bf16.msra.mxu0 0
  %2284 = vmatprep.subr.bf16.mxu0 0
  %2285 = vmatpush1.bf16.msra.mxu0 %v2232
  %2286 = vmatprep.subr.bf16.mxu0 0
  %2287 = vmatpush2.bf16.msra.mxu0 0
  %2288 = vmatprep.subr.bf16.mxu0 0
  %2289 = vmatpush2.bf16.msra.mxu0 0
  %2290 = vmatprep.subr.bf16.mxu0 0
  %2291 = vmatpush2.bf16.msra.mxu0 0
  %2292 = vmatprep.subr.bf16.mxu0 0
  %2293 = vmatpush2.bf16.msra.mxu0 0
  %2294 = vmatprep.subr.bf16.mxu0 0
  %2295 = vmatpush2.bf16.msra.mxu0 0
  %2296 = vmatprep.subr.bf16.mxu0 0
  %2297 = vmatpush2.bf16.msra.mxu0 0
  %2298 = vmatprep.subr.bf16.mxu0 0
  %2299 = vmatpush2.bf16.msra.mxu0 0
  %2300 = vmatprep.subr.bf16.mxu0 0
  %2301 = vmatpush2.bf16.msra.mxu0 0
  %2302 = vmatprep.mubr.bf16.mxu0 0
  %2303 = vmatmul.mubr.bf16.gmra.mxu0 %v2235
  %v2304 = vpop.f32.mrf.mxu0
  %v2305 = vadd.f32 0.0, %v2304
  %v2306 = vpop.f32.mrf.mxu0
  %v2307 = vpop.f32.mrf.mxu0
  %v2308 = vadd.f32 0.0, %v2307
  %v2309 = vpop.f32.mrf.mxu0
  %2310 = vmatprep.mubr.bf16.mxu0 0
  %2311 = vmatmul.mubr.bf16.gmra.mxu0 %v2238
  %v2312 = vpop.f32.mrf.mxu0
  %v2313 = vadd.f32 0.0, %v2312
  %v2314 = vpop.f32.mrf.mxu0
  %v2315 = vpop.f32.mrf.mxu0
  %v2316 = vadd.f32 0.0, %v2315
  %v2317 = vpop.f32.mrf.mxu0
  %2318 = vmatprep.mubr.bf16.mxu0 0
  %2319 = vmatmul.mubr.bf16.gmra.mxu0 %v2241
  %v2320 = vpop.f32.mrf.mxu0
  %v2321 = vadd.f32 0.0, %v2320
  %v2322 = vpop.f32.mrf.mxu0
  %v2323 = vpop.f32.mrf.mxu0
  %v2324 = vadd.f32 0.0, %v2323
  %v2325 = vpop.f32.mrf.mxu0
  %2326 = vmatprep.mubr.bf16.mxu0 0
  %2327 = vmatmul.mubr.bf16.gmra.mxu0 %v2244
  %v2328 = vpop.f32.mrf.mxu0
  %v2329 = vadd.f32 0.0, %v2328
  %v2330 = vpop.f32.mrf.mxu0
  %v2331 = vpop.f32.mrf.mxu0
  %v2332 = vadd.f32 0.0, %v2331
  %v2333 = vpop.f32.mrf.mxu0
  %2334 = vmatprep.mubr.bf16.mxu0 0
  %2335 = vmatmul.mubr.bf16.gmra.mxu0 %v2247
  %v2336 = vpop.f32.mrf.mxu0
  %v2337 = vadd.f32 0.0, %v2336
  %v2338 = vpop.f32.mrf.mxu0
  %v2339 = vpop.f32.mrf.mxu0
  %v2340 = vadd.f32 0.0, %v2339
  %v2341 = vpop.f32.mrf.mxu0
  %2342 = vmatprep.mubr.bf16.mxu0 0
  %2343 = vmatmul.mubr.bf16.gmra.mxu0 %v2250
  %v2344 = vpop.f32.mrf.mxu0
  %v2345 = vadd.f32 0.0, %v2344
  %v2346 = vpop.f32.mrf.mxu0
  %v2347 = vpop.f32.mrf.mxu0
  %v2348 = vadd.f32 0.0, %v2347
  %v2349 = vpop.f32.mrf.mxu0
  %2350 = vmatprep.mubr.bf16.mxu0 0
  %2351 = vmatmul.mubr.bf16.gmra.mxu0 %v2253
  %v2352 = vpop.f32.mrf.mxu0
  %v2353 = vadd.f32 0.0, %v2352
  %v2354 = vpop.f32.mrf.mxu0
  %v2355 = vpop.f32.mrf.mxu0
  %v2356 = vadd.f32 0.0, %v2355
  %v2357 = vpop.f32.mrf.mxu0
  %2358 = vmatprep.mubr.bf16.mxu0 0
  %2359 = vmatmul.mubr.bf16.gmra.mxu0 %v2256
  %v2360 = vpop.f32.mrf.mxu0
  %v2361 = vadd.f32 0.0, %v2360
  %v2362 = vpop.f32.mrf.mxu0
  %v2363 = vpop.f32.mrf.mxu0
  %v2364 = vadd.f32 0.0, %v2363
  %v2365 = vpop.f32.mrf.mxu0
  %2366 = vmatprep.mubr.bf16.mxu0 0
  %2367 = vmatmul.mubr.bf16.gmra.mxu0 %v2259
  %v2368 = vpop.f32.mrf.mxu0
  %v2369 = vadd.f32 0.0, %v2368
  %v2370 = vpop.f32.mrf.mxu0
  %v2371 = vpop.f32.mrf.mxu0
  %v2372 = vadd.f32 0.0, %v2371
  %v2373 = vpop.f32.mrf.mxu0
  %2374 = vmatprep.mubr.bf16.mxu0 0
  %2375 = vmatmul.mubr.bf16.gmra.mxu0 %v2262
  %v2376 = vpop.f32.mrf.mxu0
  %v2377 = vadd.f32 0.0, %v2376
  %v2378 = vpop.f32.mrf.mxu0
  %v2379 = vpop.f32.mrf.mxu0
  %v2380 = vadd.f32 0.0, %v2379
  %v2381 = vpop.f32.mrf.mxu0
  %2382 = vmatprep.mubr.bf16.mxu0 0
  %2383 = vmatmul.mubr.bf16.gmra.mxu0 %v2265
  %v2384 = vpop.f32.mrf.mxu0
  %v2385 = vadd.f32 0.0, %v2384
  %v2386 = vpop.f32.mrf.mxu0
  %v2387 = vpop.f32.mrf.mxu0
  %v2388 = vadd.f32 0.0, %v2387
  %v2389 = vpop.f32.mrf.mxu0
  %2390 = vmatprep.mubr.bf16.mxu0 0
  %2391 = vmatmul.mubr.bf16.gmra.mxu0 %v2268
  %v2392 = vpop.f32.mrf.mxu0
  %v2393 = vadd.f32 0.0, %v2392
  %v2394 = vpop.f32.mrf.mxu0
  %v2395 = vpop.f32.mrf.mxu0
  %v2396 = vadd.f32 0.0, %v2395
  %v2397 = vpop.f32.mrf.mxu0
  %2398 = vdwg.mxu0
  %v2399 = vadd.f32 %v2013, %v2305
  %v2400 = vadd.f32 %v2014, %v2308
  %v2401 = vadd.f32 %v2015, %v2313
  %v2402 = vadd.f32 %v2016, %v2316
  %v2403 = vadd.f32 %v2017, %v2321
  %v2404 = vadd.f32 %v2018, %v2324
  %v2405 = vadd.f32 %v2019, %v2329
  %v2406 = vadd.f32 %v2020, %v2332
  %v2407 = vadd.f32 %v2021, %v2337
  %v2408 = vadd.f32 %v2022, %v2340
  %v2409 = vadd.f32 %v2023, %v2345
  %v2410 = vadd.f32 %v2024, %v2348
  %v2411 = vadd.f32 %v2025, %v2353
  %v2412 = vadd.f32 %v2026, %v2356
  %v2413 = vadd.f32 %v2027, %v2361
  %v2414 = vadd.f32 %v2028, %v2364
  %v2415 = vadd.f32 %v2029, %v2369
  %v2416 = vadd.f32 %v2030, %v2372
  %v2417 = vadd.f32 %v2031, %v2377
  %v2418 = vadd.f32 %v2032, %v2380
  %v2419 = vadd.f32 %v2033, %v2385
  %v2420 = vadd.f32 %v2034, %v2388
  %v2421 = vadd.f32 %v2035, %v2393
  %v2422 = vadd.f32 %v2036, %v2396
  %v2423 = vld [vmem:[#allocation2 + $0x14] sm:$0x8]
  %v2424 = vld [vmem:[#allocation2 + $0x18] sm:$0xf]
  %v2425 = vld [vmem:[#allocation2 + $0x1c] sm:$0xf]
  %v2426 = vld [vmem:[#allocation2 + $0x20] sm:$0xf]
  %v2427 = vld [vmem:[#allocation2 + $0x24] sm:$0xf]
  %v2428 = vld [vmem:[#allocation2 + $0x28] sm:$0xf]
  %v2429 = vld [vmem:[#allocation2 + $0x2c] sm:$0xf]
  %v2430 = vld [vmem:[#allocation2 + $0x30] sm:$0xf]
  %v2431 = vld [vmem:[#allocation2 + $0x34] sm:$0xf]
  %v2432 = vld [vmem:[#allocation2 + $0x38] sm:$0xf]
  %v2433 = vld [vmem:[#allocation2 + $0x3c] sm:$0xf]
  %v2434 = vld [vmem:[#allocation2 + $0x40] sm:$0xf]
  %v2435 = vld [vmem:[#allocation2 + $0x44] sm:$0xf]
  %v2436 = vld [vmem:[#allocation2 + $0x48] sm:$0xf]
  %v2437 = vld [vmem:[#allocation2 + $0x4c] sm:$0xf]
  %v2438 = vld [vmem:[#allocation2 + $0x50] sm:$0xf]
  %v2439 = vld [vmem:[#allocation2 + $0x54] sm:$0xf]
  %v2440 = vld [vmem:[#allocation2 + $0x58] sm:$0xf]
  %v2441 = vld [vmem:[#allocation2 + $0x5c] sm:$0xf]
  %v2442 = vld [vmem:[#allocation2 + $0x60] sm:$0xf]
  %v2443 = vld [vmem:[#allocation2 + $0x64] sm:$0xf]
  %v2444 = vld [vmem:[#allocation2 + $0x68] sm:$0xf]
  %v2445 = vld [vmem:[#allocation2 + $0x6c] sm:$0xf]
  %v2446 = vld [vmem:[#allocation2 + $0x70] sm:$0xf]
  %v2447 = vld [vmem:[#allocation2 + $0x74] sm:$0xf]
  %s2448 = scalar_lea.vmem %s2, 48
  %v2449 = vld [vmem:[%s2448] sm:$0xf]
  %v2450 = vld [vmem:[%s2448 + $0x4] sm:$0xf]
  %v2476 = vunpack.c.l.b16 %v2423
  %v2477 = vunpack.c.l.b16 %v2424
  %v2478 = vunpack.c.l.b16 %v2425
  %v2479 = vunpack.c.l.b16 %v2426
  %v2480 = vunpack.c.l.b16 %v2427
  %v2481 = vunpack.c.l.b16 %v2428
  %v2482 = vunpack.c.l.b16 %v2429
  %v2483 = vunpack.c.l.b16 %v2430
  %v2484 = vunpack.c.l.b16 %v2431
  %v2485 = vunpack.c.l.b16 %v2432
  %v2486 = vunpack.c.l.b16 %v2433
  %v2487 = vunpack.c.l.b16 %v2434
  %v2488 = vunpack.c.l.b16 %v2435
  %v2489 = vunpack.c.l.b16 %v2436
  %v2490 = vunpack.c.l.b16 %v2437
  %v2491 = vunpack.c.l.b16 %v2438
  %v2492 = vunpack.c.l.b16 %v2439
  %v2493 = vunpack.c.l.b16 %v2440
  %v2494 = vunpack.c.l.b16 %v2441
  %v2495 = vunpack.c.l.b16 %v2442
  %v2496 = vunpack.c.l.b16 %v2443
  %v2497 = vunpack.c.l.b16 %v2444
  %v2498 = vunpack.c.l.b16 %v2445
  %v2499 = vunpack.c.l.b16 %v2446
  %v2500 = vunpack.c.l.b16 %v2447
  %v2501 = vpack.c.b16 %v2477, %v2476
  %v2502 = vpack.c.b16 %v2479, %v2478
  %v2503 = vpack.c.b16 %v2481, %v2480
  %v2504 = vpack.c.b16 %v2483, %v2482
  %v2505 = vpack.c.b16 %v2485, %v2484
  %v2506 = vpack.c.b16 %v2487, %v2486
  %v2507 = vpack.c.b16 %v2489, %v2488
  %v2508 = vpack.c.b16 %v2491, %v2490
  %v2509 = vpack.c.b16 %v2493, %v2492
  %v2510 = vpack.c.b16 %v2495, %v2494
  %v2511 = vpack.c.b16 %v2497, %v2496
  %v2512 = vpack.c.b16 %v2499, %v2498
  %v2513 = vpack.c.b16 %v2500, %v2500
  %v2515 = vshrl.u32 %v2501, 16
  %v2517 = vrot.slane %v2515, 3
  %v2518 = vshll.u32 %v2501, 16
  %v2520 = vrot.slane %v2518, 4
  %v2521 = vor.u32 %v2517, %v2520
  %v2523 = vshrl.u32 %v2502, 16
  %v2525 = vrot.slane %v2523, 3
  %v2526 = vshll.u32 %v2502, 16
  %v2528 = vrot.slane %v2526, 4
  %v2529 = vor.u32 %v2525, %v2528
  %v2530 = vsel %vm750, %v2521, %v2529
  %v2532 = vshrl.u32 %v2503, 16
  %v2534 = vrot.slane %v2532, 3
  %v2535 = vshll.u32 %v2503, 16
  %v2537 = vrot.slane %v2535, 4
  %v2538 = vor.u32 %v2534, %v2537
  %v2539 = vsel %vm750, %v2529, %v2538
  %v2541 = vshrl.u32 %v2504, 16
  %v2543 = vrot.slane %v2541, 3
  %v2544 = vshll.u32 %v2504, 16
  %v2546 = vrot.slane %v2544, 4
  %v2547 = vor.u32 %v2543, %v2546
  %v2548 = vsel %vm750, %v2538, %v2547
  %v2550 = vshrl.u32 %v2505, 16
  %v2552 = vrot.slane %v2550, 3
  %v2553 = vshll.u32 %v2505, 16
  %v2555 = vrot.slane %v2553, 4
  %v2556 = vor.u32 %v2552, %v2555
  %v2557 = vsel %vm750, %v2547, %v2556
  %v2559 = vshrl.u32 %v2506, 16
  %v2561 = vrot.slane %v2559, 3
  %v2562 = vshll.u32 %v2506, 16
  %v2564 = vrot.slane %v2562, 4
  %v2565 = vor.u32 %v2561, %v2564
  %v2566 = vsel %vm750, %v2556, %v2565
  %v2568 = vshrl.u32 %v2507, 16
  %v2570 = vrot.slane %v2568, 3
  %v2571 = vshll.u32 %v2507, 16
  %v2573 = vrot.slane %v2571, 4
  %v2574 = vor.u32 %v2570, %v2573
  %v2575 = vsel %vm750, %v2565, %v2574
  %v2577 = vshrl.u32 %v2508, 16
  %v2579 = vrot.slane %v2577, 3
  %v2580 = vshll.u32 %v2508, 16
  %v2582 = vrot.slane %v2580, 4
  %v2583 = vor.u32 %v2579, %v2582
  %v2584 = vsel %vm750, %v2574, %v2583
  %v2586 = vshrl.u32 %v2509, 16
  %v2588 = vrot.slane %v2586, 3
  %v2589 = vshll.u32 %v2509, 16
  %v2591 = vrot.slane %v2589, 4
  %v2592 = vor.u32 %v2588, %v2591
  %v2593 = vsel %vm750, %v2583, %v2592
  %v2595 = vshrl.u32 %v2510, 16
  %v2597 = vrot.slane %v2595, 3
  %v2598 = vshll.u32 %v2510, 16
  %v2600 = vrot.slane %v2598, 4
  %v2601 = vor.u32 %v2597, %v2600
  %v2602 = vsel %vm750, %v2592, %v2601
  %v2604 = vshrl.u32 %v2511, 16
  %v2606 = vrot.slane %v2604, 3
  %v2607 = vshll.u32 %v2511, 16
  %v2609 = vrot.slane %v2607, 4
  %v2610 = vor.u32 %v2606, %v2609
  %v2611 = vsel %vm750, %v2601, %v2610
  %v2613 = vshrl.u32 %v2512, 16
  %v2615 = vrot.slane %v2613, 3
  %v2616 = vshll.u32 %v2512, 16
  %v2618 = vrot.slane %v2616, 4
  %v2619 = vor.u32 %v2615, %v2618
  %v2620 = vsel %vm750, %v2610, %v2619
  %v2622 = vshrl.u32 %v2513, 16
  %v2624 = vrot.slane %v2622, 3
  %v2625 = vshll.u32 %v2513, 16
  %v2627 = vrot.slane %v2625, 4
  %v2628 = vor.u32 %v2624, %v2627
  %v2629 = vsel %vm750, %v2619, %v2628
  %v2632 = vunpack.c.l.b16 %v2449
  %v2633 = vunpack.c.l.b16 %v2450
  %v2634 = vpack.c.b16 %v2633, %v2632
  %v2637 = vsel %vm569, %v2530, 0
  %v2640 = vsel %vm569, %v2539, 0
  %v2643 = vsel %vm569, %v2548, 0
  %v2646 = vsel %vm569, %v2557, 0
  %v2649 = vsel %vm569, %v2566, 0
  %v2652 = vsel %vm569, %v2575, 0
  %v2655 = vsel %vm569, %v2584, 0
  %v2658 = vsel %vm569, %v2593, 0
  %v2661 = vsel %vm569, %v2602, 0
  %v2664 = vsel %vm569, %v2611, 0
  %v2667 = vsel %vm569, %v2620, 0
  %v2670 = vsel %vm569, %v2629, 0
  %2672 = vmatprep.subr.bf16.mxu0 0
  %2673 = vmatpush1.bf16.msra.mxu0 0
  %2674 = vmatprep.subr.bf16.mxu0 0
  %2675 = vmatpush1.bf16.msra.mxu0 0
  %2676 = vmatprep.subr.bf16.mxu0 0
  %2677 = vmatpush1.bf16.msra.mxu0 0
  %2678 = vmatprep.subr.bf16.mxu0 0
  %2679 = vmatpush1.bf16.msra.mxu0 0
  %2680 = vmatprep.subr.bf16.mxu0 0
  %2681 = vmatpush1.bf16.msra.mxu0 0
  %2682 = vmatprep.subr.bf16.mxu0 0
  %2683 = vmatpush1.bf16.msra.mxu0 0
  %2684 = vmatprep.subr.bf16.mxu0 0
  %2685 = vmatpush1.bf16.msra.mxu0 0
  %2686 = vmatprep.subr.bf16.mxu0 0
  %2687 = vmatpush1.bf16.msra.mxu0 %v2634
  %2688 = vmatprep.subr.bf16.mxu0 0
  %2689 = vmatpush2.bf16.msra.mxu0 0
  %2690 = vmatprep.subr.bf16.mxu0 0
  %2691 = vmatpush2.bf16.msra.mxu0 0
  %2692 = vmatprep.subr.bf16.mxu0 0
  %2693 = vmatpush2.bf16.msra.mxu0 0
  %2694 = vmatprep.subr.bf16.mxu0 0
  %2695 = vmatpush2.bf16.msra.mxu0 0
  %2696 = vmatprep.subr.bf16.mxu0 0
  %2697 = vmatpush2.bf16.msra.mxu0 0
  %2698 = vmatprep.subr.bf16.mxu0 0
  %2699 = vmatpush2.bf16.msra.mxu0 0
  %2700 = vmatprep.subr.bf16.mxu0 0
  %2701 = vmatpush2.bf16.msra.mxu0 0
  %2702 = vmatprep.subr.bf16.mxu0 0
  %2703 = vmatpush2.bf16.msra.mxu0 0
  %2704 = vmatprep.mubr.bf16.mxu0 0
  %2705 = vmatmul.mubr.bf16.gmra.mxu0 %v2637
  %v2706 = vpop.f32.mrf.mxu0
  %v2707 = vadd.f32 0.0, %v2706
  %v2708 = vpop.f32.mrf.mxu0
  %v2709 = vpop.f32.mrf.mxu0
  %v2710 = vadd.f32 0.0, %v2709
  %v2711 = vpop.f32.mrf.mxu0
  %2712 = vmatprep.mubr.bf16.mxu0 0
  %2713 = vmatmul.mubr.bf16.gmra.mxu0 %v2640
  %v2714 = vpop.f32.mrf.mxu0
  %v2715 = vadd.f32 0.0, %v2714
  %v2716 = vpop.f32.mrf.mxu0
  %v2717 = vpop.f32.mrf.mxu0
  %v2718 = vadd.f32 0.0, %v2717
  %v2719 = vpop.f32.mrf.mxu0
  %2720 = vmatprep.mubr.bf16.mxu0 0
  %2721 = vmatmul.mubr.bf16.gmra.mxu0 %v2643
  %v2722 = vpop.f32.mrf.mxu0
  %v2723 = vadd.f32 0.0, %v2722
  %v2724 = vpop.f32.mrf.mxu0
  %v2725 = vpop.f32.mrf.mxu0
  %v2726 = vadd.f32 0.0, %v2725
  %v2727 = vpop.f32.mrf.mxu0
  %2728 = vmatprep.mubr.bf16.mxu0 0
  %2729 = vmatmul.mubr.bf16.gmra.mxu0 %v2646
  %v2730 = vpop.f32.mrf.mxu0
  %v2731 = vadd.f32 0.0, %v2730
  %v2732 = vpop.f32.mrf.mxu0
  %v2733 = vpop.f32.mrf.mxu0
  %v2734 = vadd.f32 0.0, %v2733
  %v2735 = vpop.f32.mrf.mxu0
  %2736 = vmatprep.mubr.bf16.mxu0 0
  %2737 = vmatmul.mubr.bf16.gmra.mxu0 %v2649
  %v2738 = vpop.f32.mrf.mxu0
  %v2739 = vadd.f32 0.0, %v2738
  %v2740 = vpop.f32.mrf.mxu0
  %v2741 = vpop.f32.mrf.mxu0
  %v2742 = vadd.f32 0.0, %v2741
  %v2743 = vpop.f32.mrf.mxu0
  %2744 = vmatprep.mubr.bf16.mxu0 0
  %2745 = vmatmul.mubr.bf16.gmra.mxu0 %v2652
  %v2746 = vpop.f32.mrf.mxu0
  %v2747 = vadd.f32 0.0, %v2746
  %v2748 = vpop.f32.mrf.mxu0
  %v2749 = vpop.f32.mrf.mxu0
  %v2750 = vadd.f32 0.0, %v2749
  %v2751 = vpop.f32.mrf.mxu0
  %2752 = vmatprep.mubr.bf16.mxu0 0
  %2753 = vmatmul.mubr.bf16.gmra.mxu0 %v2655
  %v2754 = vpop.f32.mrf.mxu0
  %v2755 = vadd.f32 0.0, %v2754
  %v2756 = vpop.f32.mrf.mxu0
  %v2757 = vpop.f32.mrf.mxu0
  %v2758 = vadd.f32 0.0, %v2757
  %v2759 = vpop.f32.mrf.mxu0
  %2760 = vmatprep.mubr.bf16.mxu0 0
  %2761 = vmatmul.mubr.bf16.gmra.mxu0 %v2658
  %v2762 = vpop.f32.mrf.mxu0
  %v2763 = vadd.f32 0.0, %v2762
  %v2764 = vpop.f32.mrf.mxu0
  %v2765 = vpop.f32.mrf.mxu0
  %v2766 = vadd.f32 0.0, %v2765
  %v2767 = vpop.f32.mrf.mxu0
  %2768 = vmatprep.mubr.bf16.mxu0 0
  %2769 = vmatmul.mubr.bf16.gmra.mxu0 %v2661
  %v2770 = vpop.f32.mrf.mxu0
  %v2771 = vadd.f32 0.0, %v2770
  %v2772 = vpop.f32.mrf.mxu0
  %v2773 = vpop.f32.mrf.mxu0
  %v2774 = vadd.f32 0.0, %v2773
  %v2775 = vpop.f32.mrf.mxu0
  %2776 = vmatprep.mubr.bf16.mxu0 0
  %2777 = vmatmul.mubr.bf16.gmra.mxu0 %v2664
  %v2778 = vpop.f32.mrf.mxu0
  %v2779 = vadd.f32 0.0, %v2778
  %v2780 = vpop.f32.mrf.mxu0
  %v2781 = vpop.f32.mrf.mxu0
  %v2782 = vadd.f32 0.0, %v2781
  %v2783 = vpop.f32.mrf.mxu0
  %2784 = vmatprep.mubr.bf16.mxu0 0
  %2785 = vmatmul.mubr.bf16.gmra.mxu0 %v2667
  %v2786 = vpop.f32.mrf.mxu0
  %v2787 = vadd.f32 0.0, %v2786
  %v2788 = vpop.f32.mrf.mxu0
  %v2789 = vpop.f32.mrf.mxu0
  %v2790 = vadd.f32 0.0, %v2789
  %v2791 = vpop.f32.mrf.mxu0
  %2792 = vmatprep.mubr.bf16.mxu0 0
  %2793 = vmatmul.mubr.bf16.gmra.mxu0 %v2670
  %v2794 = vpop.f32.mrf.mxu0
  %v2795 = vadd.f32 0.0, %v2794
  %v2796 = vpop.f32.mrf.mxu0
  %v2797 = vpop.f32.mrf.mxu0
  %v2798 = vadd.f32 0.0, %v2797
  %v2799 = vpop.f32.mrf.mxu0
  %2800 = vdwg.mxu0
  %v2801 = vadd.f32 %v2399, %v2707
  %v2802 = vadd.f32 %v2400, %v2710
  %v2803 = vadd.f32 %v2401, %v2715
  %v2804 = vadd.f32 %v2402, %v2718
  %v2805 = vadd.f32 %v2403, %v2723
  %v2806 = vadd.f32 %v2404, %v2726
  %v2807 = vadd.f32 %v2405, %v2731
  %v2808 = vadd.f32 %v2406, %v2734
  %v2809 = vadd.f32 %v2407, %v2739
  %v2810 = vadd.f32 %v2408, %v2742
  %v2811 = vadd.f32 %v2409, %v2747
  %v2812 = vadd.f32 %v2410, %v2750
  %v2813 = vadd.f32 %v2411, %v2755
  %v2814 = vadd.f32 %v2412, %v2758
  %v2815 = vadd.f32 %v2413, %v2763
  %v2816 = vadd.f32 %v2414, %v2766
  %v2817 = vadd.f32 %v2415, %v2771
  %v2818 = vadd.f32 %v2416, %v2774
  %v2819 = vadd.f32 %v2417, %v2779
  %v2820 = vadd.f32 %v2418, %v2782
  %v2821 = vadd.f32 %v2419, %v2787
  %v2822 = vadd.f32 %v2420, %v2790
  %v2823 = vadd.f32 %v2421, %v2795
  %v2824 = vadd.f32 %v2422, %v2798
  %s2825 = scalar_lea.vmem %s2, 56
  %v2826 = vld [vmem:[%s2825] sm:$0xf]
  %v2827 = vld [vmem:[%s2825 + $0x4] sm:$0xf]
  %v2828 = vpack.c.b16 %v2478, %v2477
  %v2829 = vpack.c.b16 %v2480, %v2479
  %v2830 = vpack.c.b16 %v2482, %v2481
  %v2831 = vpack.c.b16 %v2484, %v2483
  %v2832 = vpack.c.b16 %v2486, %v2485
  %v2833 = vpack.c.b16 %v2488, %v2487
  %v2834 = vpack.c.b16 %v2490, %v2489
  %v2835 = vpack.c.b16 %v2492, %v2491
  %v2836 = vpack.c.b16 %v2494, %v2493
  %v2837 = vpack.c.b16 %v2496, %v2495
  %v2838 = vpack.c.b16 %v2498, %v2497
  %v2839 = vpack.c.b16 %v2500, %v2499
  %v2842 = vunpack.c.l.b16 %v2826
  %v2843 = vunpack.c.l.b16 %v2827
  %v2844 = vpack.c.b16 %v2843, %v2842
  %v2847 = vsel %vm569, %v2828, 0
  %v2850 = vsel %vm569, %v2829, 0
  %v2853 = vsel %vm569, %v2830, 0
  %v2856 = vsel %vm569, %v2831, 0
  %v2859 = vsel %vm569, %v2832, 0
  %v2862 = vsel %vm569, %v2833, 0
  %v2865 = vsel %vm569, %v2834, 0
  %v2868 = vsel %vm569, %v2835, 0
  %v2871 = vsel %vm569, %v2836, 0
  %v2874 = vsel %vm569, %v2837, 0
  %v2877 = vsel %vm569, %v2838, 0
  %v2880 = vsel %vm569, %v2839, 0
  %2882 = vmatprep.subr.bf16.mxu0 0
  %2883 = vmatpush1.bf16.msra.mxu0 0
  %2884 = vmatprep.subr.bf16.mxu0 0
  %2885 = vmatpush1.bf16.msra.mxu0 0
  %2886 = vmatprep.subr.bf16.mxu0 0
  %2887 = vmatpush1.bf16.msra.mxu0 0
  %2888 = vmatprep.subr.bf16.mxu0 0
  %2889 = vmatpush1.bf16.msra.mxu0 0
  %2890 = vmatprep.subr.bf16.mxu0 0
  %2891 = vmatpush1.bf16.msra.mxu0 0
  %2892 = vmatprep.subr.bf16.mxu0 0
  %2893 = vmatpush1.bf16.msra.mxu0 0
  %2894 = vmatprep.subr.bf16.mxu0 0
  %2895 = vmatpush1.bf16.msra.mxu0 0
  %2896 = vmatprep.subr.bf16.mxu0 0
  %2897 = vmatpush1.bf16.msra.mxu0 %v2844
  %2898 = vmatprep.subr.bf16.mxu0 0
  %2899 = vmatpush2.bf16.msra.mxu0 0
  %2900 = vmatprep.subr.bf16.mxu0 0
  %2901 = vmatpush2.bf16.msra.mxu0 0
  %2902 = vmatprep.subr.bf16.mxu0 0
  %2903 = vmatpush2.bf16.msra.mxu0 0
  %2904 = vmatprep.subr.bf16.mxu0 0
  %2905 = vmatpush2.bf16.msra.mxu0 0
  %2906 = vmatprep.subr.bf16.mxu0 0
  %2907 = vmatpush2.bf16.msra.mxu0 0
  %2908 = vmatprep.subr.bf16.mxu0 0
  %2909 = vmatpush2.bf16.msra.mxu0 0
  %2910 = vmatprep.subr.bf16.mxu0 0
  %2911 = vmatpush2.bf16.msra.mxu0 0
  %2912 = vmatprep.subr.bf16.mxu0 0
  %2913 = vmatpush2.bf16.msra.mxu0 0
  %2914 = vmatprep.mubr.bf16.mxu0 0
  %2915 = vmatmul.mubr.bf16.gmra.mxu0 %v2847
  %v2916 = vpop.f32.mrf.mxu0
  %v2917 = vadd.f32 0.0, %v2916
  %v2918 = vpop.f32.mrf.mxu0
  %v2919 = vpop.f32.mrf.mxu0
  %v2920 = vadd.f32 0.0, %v2919
  %v2921 = vpop.f32.mrf.mxu0
  %2922 = vmatprep.mubr.bf16.mxu0 0
  %2923 = vmatmul.mubr.bf16.gmra.mxu0 %v2850
  %v2924 = vpop.f32.mrf.mxu0
  %v2925 = vadd.f32 0.0, %v2924
  %v2926 = vpop.f32.mrf.mxu0
  %v2927 = vpop.f32.mrf.mxu0
  %v2928 = vadd.f32 0.0, %v2927
  %v2929 = vpop.f32.mrf.mxu0
  %2930 = vmatprep.mubr.bf16.mxu0 0
  %2931 = vmatmul.mubr.bf16.gmra.mxu0 %v2853
  %v2932 = vpop.f32.mrf.mxu0
  %v2933 = vadd.f32 0.0, %v2932
  %v2934 = vpop.f32.mrf.mxu0
  %v2935 = vpop.f32.mrf.mxu0
  %v2936 = vadd.f32 0.0, %v2935
  %v2937 = vpop.f32.mrf.mxu0
  %2938 = vmatprep.mubr.bf16.mxu0 0
  %2939 = vmatmul.mubr.bf16.gmra.mxu0 %v2856
  %v2940 = vpop.f32.mrf.mxu0
  %v2941 = vadd.f32 0.0, %v2940
  %v2942 = vpop.f32.mrf.mxu0
  %v2943 = vpop.f32.mrf.mxu0
  %v2944 = vadd.f32 0.0, %v2943
  %v2945 = vpop.f32.mrf.mxu0
  %2946 = vmatprep.mubr.bf16.mxu0 0
  %2947 = vmatmul.mubr.bf16.gmra.mxu0 %v2859
  %v2948 = vpop.f32.mrf.mxu0
  %v2949 = vadd.f32 0.0, %v2948
  %v2950 = vpop.f32.mrf.mxu0
  %v2951 = vpop.f32.mrf.mxu0
  %v2952 = vadd.f32 0.0, %v2951
  %v2953 = vpop.f32.mrf.mxu0
  %2954 = vmatprep.mubr.bf16.mxu0 0
  %2955 = vmatmul.mubr.bf16.gmra.mxu0 %v2862
  %v2956 = vpop.f32.mrf.mxu0
  %v2957 = vadd.f32 0.0, %v2956
  %v2958 = vpop.f32.mrf.mxu0
  %v2959 = vpop.f32.mrf.mxu0
  %v2960 = vadd.f32 0.0, %v2959
  %v2961 = vpop.f32.mrf.mxu0
  %2962 = vmatprep.mubr.bf16.mxu0 0
  %2963 = vmatmul.mubr.bf16.gmra.mxu0 %v2865
  %v2964 = vpop.f32.mrf.mxu0
  %v2965 = vadd.f32 0.0, %v2964
  %v2966 = vpop.f32.mrf.mxu0
  %v2967 = vpop.f32.mrf.mxu0
  %v2968 = vadd.f32 0.0, %v2967
  %v2969 = vpop.f32.mrf.mxu0
  %2970 = vmatprep.mubr.bf16.mxu0 0
  %2971 = vmatmul.mubr.bf16.gmra.mxu0 %v2868
  %v2972 = vpop.f32.mrf.mxu0
  %v2973 = vadd.f32 0.0, %v2972
  %v2974 = vpop.f32.mrf.mxu0
  %v2975 = vpop.f32.mrf.mxu0
  %v2976 = vadd.f32 0.0, %v2975
  %v2977 = vpop.f32.mrf.mxu0
  %2978 = vmatprep.mubr.bf16.mxu0 0
  %2979 = vmatmul.mubr.bf16.gmra.mxu0 %v2871
  %v2980 = vpop.f32.mrf.mxu0
  %v2981 = vadd.f32 0.0, %v2980
  %v2982 = vpop.f32.mrf.mxu0
  %v2983 = vpop.f32.mrf.mxu0
  %v2984 = vadd.f32 0.0, %v2983
  %v2985 = vpop.f32.mrf.mxu0
  %2986 = vmatprep.mubr.bf16.mxu0 0
  %2987 = vmatmul.mubr.bf16.gmra.mxu0 %v2874
  %v2988 = vpop.f32.mrf.mxu0
  %v2989 = vadd.f32 0.0, %v2988
  %v2990 = vpop.f32.mrf.mxu0
  %v2991 = vpop.f32.mrf.mxu0
  %v2992 = vadd.f32 0.0, %v2991
  %v2993 = vpop.f32.mrf.mxu0
  %2994 = vmatprep.mubr.bf16.mxu0 0
  %2995 = vmatmul.mubr.bf16.gmra.mxu0 %v2877
  %v2996 = vpop.f32.mrf.mxu0
  %v2997 = vadd.f32 0.0, %v2996
  %v2998 = vpop.f32.mrf.mxu0
  %v2999 = vpop.f32.mrf.mxu0
  %v3000 = vadd.f32 0.0, %v2999
  %v3001 = vpop.f32.mrf.mxu0
  %3002 = vmatprep.mubr.bf16.mxu0 0
  %3003 = vmatmul.mubr.bf16.gmra.mxu0 %v2880
  %v3004 = vpop.f32.mrf.mxu0
  %v3005 = vadd.f32 0.0, %v3004
  %v3006 = vpop.f32.mrf.mxu0
  %v3007 = vpop.f32.mrf.mxu0
  %v3008 = vadd.f32 0.0, %v3007
  %v3009 = vpop.f32.mrf.mxu0
  %3010 = vdwg.mxu0
  %v3011 = vadd.f32 %v2801, %v2917
  %v3012 = vadd.f32 %v2802, %v2920
  %v3013 = vadd.f32 %v2803, %v2925
  %v3014 = vadd.f32 %v2804, %v2928
  %v3015 = vadd.f32 %v2805, %v2933
  %v3016 = vadd.f32 %v2806, %v2936
  %v3017 = vadd.f32 %v2807, %v2941
  %v3018 = vadd.f32 %v2808, %v2944
  %v3019 = vadd.f32 %v2809, %v2949
  %v3020 = vadd.f32 %v2810, %v2952
  %v3021 = vadd.f32 %v2811, %v2957
  %v3022 = vadd.f32 %v2812, %v2960
  %v3023 = vadd.f32 %v2813, %v2965
  %v3024 = vadd.f32 %v2814, %v2968
  %v3025 = vadd.f32 %v2815, %v2973
  %v3026 = vadd.f32 %v2816, %v2976
  %v3027 = vadd.f32 %v2817, %v2981
  %v3028 = vadd.f32 %v2818, %v2984
  %v3029 = vadd.f32 %v2819, %v2989
  %v3030 = vadd.f32 %v2820, %v2992
  %v3031 = vadd.f32 %v2821, %v2997
  %v3032 = vadd.f32 %v2822, %v3000
  %v3033 = vadd.f32 %v2823, %v3005
  %v3034 = vadd.f32 %v2824, %v3008
  %v3035 = vld [vmem:[#allocation2 + $0x18] sm:$0xf]
  %v3036 = vld [vmem:[#allocation2 + $0x1c] sm:$0xf]
  %v3037 = vld [vmem:[#allocation2 + $0x20] sm:$0xf]
  %v3038 = vld [vmem:[#allocation2 + $0x24] sm:$0xf]
  %v3039 = vld [vmem:[#allocation2 + $0x28] sm:$0xf]
  %v3040 = vld [vmem:[#allocation2 + $0x2c] sm:$0xf]
  %v3041 = vld [vmem:[#allocation2 + $0x30] sm:$0xf]
  %v3042 = vld [vmem:[#allocation2 + $0x34] sm:$0xf]
  %v3043 = vld [vmem:[#allocation2 + $0x38] sm:$0xf]
  %v3044 = vld [vmem:[#allocation2 + $0x3c] sm:$0xf]
  %v3045 = vld [vmem:[#allocation2 + $0x40] sm:$0xf]
  %v3046 = vld [vmem:[#allocation2 + $0x44] sm:$0xf]
  %v3047 = vld [vmem:[#allocation2 + $0x48] sm:$0xf]
  %v3048 = vld [vmem:[#allocation2 + $0x4c] sm:$0xf]
  %v3049 = vld [vmem:[#allocation2 + $0x50] sm:$0xf]
  %v3050 = vld [vmem:[#allocation2 + $0x54] sm:$0xf]
  %v3051 = vld [vmem:[#allocation2 + $0x58] sm:$0xf]
  %v3052 = vld [vmem:[#allocation2 + $0x5c] sm:$0xf]
  %v3053 = vld [vmem:[#allocation2 + $0x60] sm:$0xf]
  %v3054 = vld [vmem:[#allocation2 + $0x64] sm:$0xf]
  %v3055 = vld [vmem:[#allocation2 + $0x68] sm:$0xf]
  %v3056 = vld [vmem:[#allocation2 + $0x6c] sm:$0xf]
  %v3057 = vld [vmem:[#allocation2 + $0x70] sm:$0xf]
  %v3058 = vld [vmem:[#allocation2 + $0x74] sm:$0xf]
  %v3059 = vld [vmem:[#allocation2 + $0x78] sm:$0x1]
  %s3060 = scalar_lea.vmem %s2, 64
  %v3061 = vld [vmem:[%s3060] sm:$0xf]
  %v3062 = vld [vmem:[%s3060 + $0x4] sm:$0xf]
  %v3088 = vunpack.c.l.b16 %v3035
  %v3089 = vunpack.c.l.b16 %v3036
  %v3090 = vunpack.c.l.b16 %v3037
  %v3091 = vunpack.c.l.b16 %v3038
  %v3092 = vunpack.c.l.b16 %v3039
  %v3093 = vunpack.c.l.b16 %v3040
  %v3094 = vunpack.c.l.b16 %v3041
  %v3095 = vunpack.c.l.b16 %v3042
  %v3096 = vunpack.c.l.b16 %v3043
  %v3097 = vunpack.c.l.b16 %v3044
  %v3098 = vunpack.c.l.b16 %v3045
  %v3099 = vunpack.c.l.b16 %v3046
  %v3100 = vunpack.c.l.b16 %v3047
  %v3101 = vunpack.c.l.b16 %v3048
  %v3102 = vunpack.c.l.b16 %v3049
  %v3103 = vunpack.c.l.b16 %v3050
  %v3104 = vunpack.c.l.b16 %v3051
  %v3105 = vunpack.c.l.b16 %v3052
  %v3106 = vunpack.c.l.b16 %v3053
  %v3107 = vunpack.c.l.b16 %v3054
  %v3108 = vunpack.c.l.b16 %v3055
  %v3109 = vunpack.c.l.b16 %v3056
  %v3110 = vunpack.c.l.b16 %v3057
  %v3111 = vunpack.c.l.b16 %v3058
  %v3112 = vunpack.c.l.b16 %v3059
  %v3113 = vpack.c.b16 %v3089, %v3088
  %v3114 = vpack.c.b16 %v3091, %v3090
  %v3115 = vpack.c.b16 %v3093, %v3092
  %v3116 = vpack.c.b16 %v3095, %v3094
  %v3117 = vpack.c.b16 %v3097, %v3096
  %v3118 = vpack.c.b16 %v3099, %v3098
  %v3119 = vpack.c.b16 %v3101, %v3100
  %v3120 = vpack.c.b16 %v3103, %v3102
  %v3121 = vpack.c.b16 %v3105, %v3104
  %v3122 = vpack.c.b16 %v3107, %v3106
  %v3123 = vpack.c.b16 %v3109, %v3108
  %v3124 = vpack.c.b16 %v3111, %v3110
  %v3125 = vpack.c.b16 %v3112, %v3112
  %v3127 = vshrl.u32 %v3113, 16
  %v3129 = vshll.u32 %v3113, 16
  %v3131 = vrot.slane %v3129, 1
  %v3132 = vor.u32 %v3127, %v3131
  %v3134 = vshll.u32 %v3114, 16
  %v3136 = vrot.slane %v3134, 1
  %v3137 = vsel %vm1129, %v3132, %v3136
  %v3138 = vshrl.u32 %v3114, 16
  %v3140 = vor.u32 %v3138, %v3136
  %v3142 = vshll.u32 %v3115, 16
  %v3144 = vrot.slane %v3142, 1
  %v3145 = vsel %vm1129, %v3140, %v3144
  %v3146 = vshrl.u32 %v3115, 16
  %v3148 = vor.u32 %v3146, %v3144
  %v3150 = vshll.u32 %v3116, 16
  %v3152 = vrot.slane %v3150, 1
  %v3153 = vsel %vm1129, %v3148, %v3152
  %v3154 = vshrl.u32 %v3116, 16
  %v3156 = vor.u32 %v3154, %v3152
  %v3158 = vshll.u32 %v3117, 16
  %v3160 = vrot.slane %v3158, 1
  %v3161 = vsel %vm1129, %v3156, %v3160
  %v3162 = vshrl.u32 %v3117, 16
  %v3164 = vor.u32 %v3162, %v3160
  %v3166 = vshll.u32 %v3118, 16
  %v3168 = vrot.slane %v3166, 1
  %v3169 = vsel %vm1129, %v3164, %v3168
  %v3170 = vshrl.u32 %v3118, 16
  %v3172 = vor.u32 %v3170, %v3168
  %v3174 = vshll.u32 %v3119, 16
  %v3176 = vrot.slane %v3174, 1
  %v3177 = vsel %vm1129, %v3172, %v3176
  %v3178 = vshrl.u32 %v3119, 16
  %v3180 = vor.u32 %v3178, %v3176
  %v3182 = vshll.u32 %v3120, 16
  %v3184 = vrot.slane %v3182, 1
  %v3185 = vsel %vm1129, %v3180, %v3184
  %v3186 = vshrl.u32 %v3120, 16
  %v3188 = vor.u32 %v3186, %v3184
  %v3190 = vshll.u32 %v3121, 16
  %v3192 = vrot.slane %v3190, 1
  %v3193 = vsel %vm1129, %v3188, %v3192
  %v3194 = vshrl.u32 %v3121, 16
  %v3196 = vor.u32 %v3194, %v3192
  %v3198 = vshll.u32 %v3122, 16
  %v3200 = vrot.slane %v3198, 1
  %v3201 = vsel %vm1129, %v3196, %v3200
  %v3202 = vshrl.u32 %v3122, 16
  %v3204 = vor.u32 %v3202, %v3200
  %v3206 = vshll.u32 %v3123, 16
  %v3208 = vrot.slane %v3206, 1
  %v3209 = vsel %vm1129, %v3204, %v3208
  %v3210 = vshrl.u32 %v3123, 16
  %v3212 = vor.u32 %v3210, %v3208
  %v3214 = vshll.u32 %v3124, 16
  %v3216 = vrot.slane %v3214, 1
  %v3217 = vsel %vm1129, %v3212, %v3216
  %v3218 = vshrl.u32 %v3124, 16
  %v3220 = vor.u32 %v3218, %v3216
  %v3222 = vshll.u32 %v3125, 16
  %v3224 = vrot.slane %v3222, 1
  %v3225 = vsel %vm1129, %v3220, %v3224
  %v3228 = vunpack.c.l.b16 %v3061
  %v3229 = vunpack.c.l.b16 %v3062
  %v3230 = vpack.c.b16 %v3229, %v3228
  %v3233 = vsel %vm569, %v3137, 0
  %v3236 = vsel %vm569, %v3145, 0
  %v3239 = vsel %vm569, %v3153, 0
  %v3242 = vsel %vm569, %v3161, 0
  %v3245 = vsel %vm569, %v3169, 0
  %v3248 = vsel %vm569, %v3177, 0
  %v3251 = vsel %vm569, %v3185, 0
  %v3254 = vsel %vm569, %v3193, 0
  %v3257 = vsel %vm569, %v3201, 0
  %v3260 = vsel %vm569, %v3209, 0
  %v3263 = vsel %vm569, %v3217, 0
  %v3266 = vsel %vm569, %v3225, 0
  %3268 = vmatprep.subr.bf16.mxu0 0
  %3269 = vmatpush1.bf16.msra.mxu0 0
  %3270 = vmatprep.subr.bf16.mxu0 0
  %3271 = vmatpush1.bf16.msra.mxu0 0
  %3272 = vmatprep.subr.bf16.mxu0 0
  %3273 = vmatpush1.bf16.msra.mxu0 0
  %3274 = vmatprep.subr.bf16.mxu0 0
  %3275 = vmatpush1.bf16.msra.mxu0 0
  %3276 = vmatprep.subr.bf16.mxu0 0
  %3277 = vmatpush1.bf16.msra.mxu0 0
  %3278 = vmatprep.subr.bf16.mxu0 0
  %3279 = vmatpush1.bf16.msra.mxu0 0
  %3280 = vmatprep.subr.bf16.mxu0 0
  %3281 = vmatpush1.bf16.msra.mxu0 0
  %3282 = vmatprep.subr.bf16.mxu0 0
  %3283 = vmatpush1.bf16.msra.mxu0 %v3230
  %3284 = vmatprep.subr.bf16.mxu0 0
  %3285 = vmatpush2.bf16.msra.mxu0 0
  %3286 = vmatprep.subr.bf16.mxu0 0
  %3287 = vmatpush2.bf16.msra.mxu0 0
  %3288 = vmatprep.subr.bf16.mxu0 0
  %3289 = vmatpush2.bf16.msra.mxu0 0
  %3290 = vmatprep.subr.bf16.mxu0 0
  %3291 = vmatpush2.bf16.msra.mxu0 0
  %3292 = vmatprep.subr.bf16.mxu0 0
  %3293 = vmatpush2.bf16.msra.mxu0 0
  %3294 = vmatprep.subr.bf16.mxu0 0
  %3295 = vmatpush2.bf16.msra.mxu0 0
  %3296 = vmatprep.subr.bf16.mxu0 0
  %3297 = vmatpush2.bf16.msra.mxu0 0
  %3298 = vmatprep.subr.bf16.mxu0 0
  %3299 = vmatpush2.bf16.msra.mxu0 0
  %3300 = vmatprep.mubr.bf16.mxu0 0
  %3301 = vmatmul.mubr.bf16.gmra.mxu0 %v3233
  %v3302 = vpop.f32.mrf.mxu0
  %v3303 = vadd.f32 0.0, %v3302
  %v3304 = vpop.f32.mrf.mxu0
  %v3305 = vpop.f32.mrf.mxu0
  %v3306 = vadd.f32 0.0, %v3305
  %v3307 = vpop.f32.mrf.mxu0
  %3308 = vmatprep.mubr.bf16.mxu0 0
  %3309 = vmatmul.mubr.bf16.gmra.mxu0 %v3236
  %v3310 = vpop.f32.mrf.mxu0
  %v3311 = vadd.f32 0.0, %v3310
  %v3312 = vpop.f32.mrf.mxu0
  %v3313 = vpop.f32.mrf.mxu0
  %v3314 = vadd.f32 0.0, %v3313
  %v3315 = vpop.f32.mrf.mxu0
  %3316 = vmatprep.mubr.bf16.mxu0 0
  %3317 = vmatmul.mubr.bf16.gmra.mxu0 %v3239
  %v3318 = vpop.f32.mrf.mxu0
  %v3319 = vadd.f32 0.0, %v3318
  %v3320 = vpop.f32.mrf.mxu0
  %v3321 = vpop.f32.mrf.mxu0
  %v3322 = vadd.f32 0.0, %v3321
  %v3323 = vpop.f32.mrf.mxu0
  %3324 = vmatprep.mubr.bf16.mxu0 0
  %3325 = vmatmul.mubr.bf16.gmra.mxu0 %v3242
  %v3326 = vpop.f32.mrf.mxu0
  %v3327 = vadd.f32 0.0, %v3326
  %v3328 = vpop.f32.mrf.mxu0
  %v3329 = vpop.f32.mrf.mxu0
  %v3330 = vadd.f32 0.0, %v3329
  %v3331 = vpop.f32.mrf.mxu0
  %3332 = vmatprep.mubr.bf16.mxu0 0
  %3333 = vmatmul.mubr.bf16.gmra.mxu0 %v3245
  %v3334 = vpop.f32.mrf.mxu0
  %v3335 = vadd.f32 0.0, %v3334
  %v3336 = vpop.f32.mrf.mxu0
  %v3337 = vpop.f32.mrf.mxu0
  %v3338 = vadd.f32 0.0, %v3337
  %v3339 = vpop.f32.mrf.mxu0
  %3340 = vmatprep.mubr.bf16.mxu0 0
  %3341 = vmatmul.mubr.bf16.gmra.mxu0 %v3248
  %v3342 = vpop.f32.mrf.mxu0
  %v3343 = vadd.f32 0.0, %v3342
  %v3344 = vpop.f32.mrf.mxu0
  %v3345 = vpop.f32.mrf.mxu0
  %v3346 = vadd.f32 0.0, %v3345
  %v3347 = vpop.f32.mrf.mxu0
  %3348 = vmatprep.mubr.bf16.mxu0 0
  %3349 = vmatmul.mubr.bf16.gmra.mxu0 %v3251
  %v3350 = vpop.f32.mrf.mxu0
  %v3351 = vadd.f32 0.0, %v3350
  %v3352 = vpop.f32.mrf.mxu0
  %v3353 = vpop.f32.mrf.mxu0
  %v3354 = vadd.f32 0.0, %v3353
  %v3355 = vpop.f32.mrf.mxu0
  %3356 = vmatprep.mubr.bf16.mxu0 0
  %3357 = vmatmul.mubr.bf16.gmra.mxu0 %v3254
  %v3358 = vpop.f32.mrf.mxu0
  %v3359 = vadd.f32 0.0, %v3358
  %v3360 = vpop.f32.mrf.mxu0
  %v3361 = vpop.f32.mrf.mxu0
  %v3362 = vadd.f32 0.0, %v3361
  %v3363 = vpop.f32.mrf.mxu0
  %3364 = vmatprep.mubr.bf16.mxu0 0
  %3365 = vmatmul.mubr.bf16.gmra.mxu0 %v3257
  %v3366 = vpop.f32.mrf.mxu0
  %v3367 = vadd.f32 0.0, %v3366
  %v3368 = vpop.f32.mrf.mxu0
  %v3369 = vpop.f32.mrf.mxu0
  %v3370 = vadd.f32 0.0, %v3369
  %v3371 = vpop.f32.mrf.mxu0
  %3372 = vmatprep.mubr.bf16.mxu0 0
  %3373 = vmatmul.mubr.bf16.gmra.mxu0 %v3260
  %v3374 = vpop.f32.mrf.mxu0
  %v3375 = vadd.f32 0.0, %v3374
  %v3376 = vpop.f32.mrf.mxu0
  %v3377 = vpop.f32.mrf.mxu0
  %v3378 = vadd.f32 0.0, %v3377
  %v3379 = vpop.f32.mrf.mxu0
  %3380 = vmatprep.mubr.bf16.mxu0 0
  %3381 = vmatmul.mubr.bf16.gmra.mxu0 %v3263
  %v3382 = vpop.f32.mrf.mxu0
  %v3383 = vadd.f32 0.0, %v3382
  %v3384 = vpop.f32.mrf.mxu0
  %v3385 = vpop.f32.mrf.mxu0
  %v3386 = vadd.f32 0.0, %v3385
  %v3387 = vpop.f32.mrf.mxu0
  %3388 = vmatprep.mubr.bf16.mxu0 0
  %3389 = vmatmul.mubr.bf16.gmra.mxu0 %v3266
  %v3390 = vpop.f32.mrf.mxu0
  %v3391 = vadd.f32 0.0, %v3390
  %v3392 = vpop.f32.mrf.mxu0
  %v3393 = vpop.f32.mrf.mxu0
  %v3394 = vadd.f32 0.0, %v3393
  %v3395 = vpop.f32.mrf.mxu0
  %3396 = vdwg.mxu0
  %v3397 = vadd.f32 %v3011, %v3303
  %v3398 = vadd.f32 %v3012, %v3306
  %v3399 = vadd.f32 %v3013, %v3311
  %v3400 = vadd.f32 %v3014, %v3314
  %v3401 = vadd.f32 %v3015, %v3319
  %v3402 = vadd.f32 %v3016, %v3322
  %v3403 = vadd.f32 %v3017, %v3327
  %v3404 = vadd.f32 %v3018, %v3330
  %v3405 = vadd.f32 %v3019, %v3335
  %v3406 = vadd.f32 %v3020, %v3338
  %v3407 = vadd.f32 %v3021, %v3343
  %v3408 = vadd.f32 %v3022, %v3346
  %v3409 = vadd.f32 %v3023, %v3351
  %v3410 = vadd.f32 %v3024, %v3354
  %v3411 = vadd.f32 %v3025, %v3359
  %v3412 = vadd.f32 %v3026, %v3362
  %v3413 = vadd.f32 %v3027, %v3367
  %v3414 = vadd.f32 %v3028, %v3370
  %v3415 = vadd.f32 %v3029, %v3375
  %v3416 = vadd.f32 %v3030, %v3378
  %v3417 = vadd.f32 %v3031, %v3383
  %v3418 = vadd.f32 %v3032, %v3386
  %v3419 = vadd.f32 %v3033, %v3391
  %v3420 = vadd.f32 %v3034, %v3394
  %v3421 = vlaneseq
  %v3422 = vshrl.u32 %v3421, 7
  %v3423 = vadd.s32 %v3422, 8
  %v3424 = vadd.s32 %v3422, 16
  %v3425 = vadd.s32 %v3422, 24
  %v3426 = vadd.s32 %v3422, 32
  %v3427 = vadd.s32 %v3422, 40
  %v3428 = vadd.s32 %v3422, 48
  %v3429 = vadd.s32 %v3422, 56
  %v3430 = vadd.s32 %v3422, 64
  %v3431 = vadd.s32 %v3422, 72
  %v3432 = vadd.s32 %v3422, 80
  %v3433 = vadd.s32 %v3422, 88
  %v3434 = vadd.s32 %v3422, 96
  %v3435 = vadd.s32 %v3422, 104
  %v3436 = vadd.s32 %v3422, 112
  %v3437 = vadd.s32 %v3422, 120
  %v3438 = vadd.s32 %v3422, 128
  %v3439 = vadd.s32 %v3422, 136
  %v3440 = vadd.s32 %v3422, 144
  %v3441 = vadd.s32 %v3422, 152
  %v3442 = vadd.s32 %v3422, 160
  %v3443 = vadd.s32 %v3422, 168
  %v3444 = vadd.s32 %v3422, 176
  %v3445 = vadd.s32 %v3422, 184
  %vm3446 = vcmp.lt.s32.totalorder %v3422, 0
  %v3447 = vsub.s32 0, %v3422
  %v3448 = vsel %vm3446, %v3447, %v3422
  %v3449 = vshrl.u32 %v3448, 4
  %v3450 = vand.u32 %v3448, 15
  %v3451 = vsub.s32 0, %v3450
  %v3452 = vsel %vm3446, %v3451, %v3450
  %vm3453 = vcmp.lt.s32.totalorder %v3423, 0
  %v3454 = vsub.s32 0, %v3423
  %v3455 = vsel %vm3453, %v3454, %v3423
  %v3456 = vshrl.u32 %v3455, 4
  %v3457 = vand.u32 %v3455, 15
  %v3458 = vsub.s32 0, %v3457
  %v3459 = vsel %vm3453, %v3458, %v3457
  %vm3460 = vcmp.lt.s32.totalorder %v3424, 0
  %v3461 = vsub.s32 0, %v3424
  %v3462 = vsel %vm3460, %v3461, %v3424
  %v3463 = vshrl.u32 %v3462, 4
  %v3464 = vand.u32 %v3462, 15
  %v3465 = vsub.s32 0, %v3464
  %v3466 = vsel %vm3460, %v3465, %v3464
  %vm3467 = vcmp.lt.s32.totalorder %v3425, 0
  %v3468 = vsub.s32 0, %v3425
  %v3469 = vsel %vm3467, %v3468, %v3425
  %v3470 = vshrl.u32 %v3469, 4
  %v3471 = vand.u32 %v3469, 15
  %v3472 = vsub.s32 0, %v3471
  %v3473 = vsel %vm3467, %v3472, %v3471
  %vm3474 = vcmp.lt.s32.totalorder %v3426, 0
  %v3475 = vsub.s32 0, %v3426
  %v3476 = vsel %vm3474, %v3475, %v3426
  %v3477 = vshrl.u32 %v3476, 4
  %v3478 = vand.u32 %v3476, 15
  %v3479 = vsub.s32 0, %v3478
  %v3480 = vsel %vm3474, %v3479, %v3478
  %vm3481 = vcmp.lt.s32.totalorder %v3427, 0
  %v3482 = vsub.s32 0, %v3427
  %v3483 = vsel %vm3481, %v3482, %v3427
  %v3484 = vshrl.u32 %v3483, 4
  %v3485 = vand.u32 %v3483, 15
  %v3486 = vsub.s32 0, %v3485
  %v3487 = vsel %vm3481, %v3486, %v3485
  %vm3488 = vcmp.lt.s32.totalorder %v3428, 0
  %v3489 = vsub.s32 0, %v3428
  %v3490 = vsel %vm3488, %v3489, %v3428
  %v3491 = vshrl.u32 %v3490, 4
  %v3492 = vand.u32 %v3490, 15
  %v3493 = vsub.s32 0, %v3492
  %v3494 = vsel %vm3488, %v3493, %v3492
  %vm3495 = vcmp.lt.s32.totalorder %v3429, 0
  %v3496 = vsub.s32 0, %v3429
  %v3497 = vsel %vm3495, %v3496, %v3429
  %v3498 = vshrl.u32 %v3497, 4
  %v3499 = vand.u32 %v3497, 15
  %v3500 = vsub.s32 0, %v3499
  %v3501 = vsel %vm3495, %v3500, %v3499
  %vm3502 = vcmp.lt.s32.totalorder %v3430, 0
  %v3503 = vsub.s32 0, %v3430
  %v3504 = vsel %vm3502, %v3503, %v3430
  %v3505 = vshrl.u32 %v3504, 4
  %v3506 = vand.u32 %v3504, 15
  %v3507 = vsub.s32 0, %v3506
  %v3508 = vsel %vm3502, %v3507, %v3506
  %vm3509 = vcmp.lt.s32.totalorder %v3431, 0
  %v3510 = vsub.s32 0, %v3431
  %v3511 = vsel %vm3509, %v3510, %v3431
  %v3512 = vshrl.u32 %v3511, 4
  %v3513 = vand.u32 %v3511, 15
  %v3514 = vsub.s32 0, %v3513
  %v3515 = vsel %vm3509, %v3514, %v3513
  %vm3516 = vcmp.lt.s32.totalorder %v3432, 0
  %v3517 = vsub.s32 0, %v3432
  %v3518 = vsel %vm3516, %v3517, %v3432
  %v3519 = vshrl.u32 %v3518, 4
  %v3520 = vand.u32 %v3518, 15
  %v3521 = vsub.s32 0, %v3520
  %v3522 = vsel %vm3516, %v3521, %v3520
  %vm3523 = vcmp.lt.s32.totalorder %v3433, 0
  %v3524 = vsub.s32 0, %v3433
  %v3525 = vsel %vm3523, %v3524, %v3433
  %v3526 = vshrl.u32 %v3525, 4
  %v3527 = vand.u32 %v3525, 15
  %v3528 = vsub.s32 0, %v3527
  %v3529 = vsel %vm3523, %v3528, %v3527
  %vm3530 = vcmp.lt.s32.totalorder %v3434, 0
  %v3531 = vsub.s32 0, %v3434
  %v3532 = vsel %vm3530, %v3531, %v3434
  %v3533 = vshrl.u32 %v3532, 4
  %v3534 = vand.u32 %v3532, 15
  %v3535 = vsub.s32 0, %v3534
  %v3536 = vsel %vm3530, %v3535, %v3534
  %vm3537 = vcmp.lt.s32.totalorder %v3435, 0
  %v3538 = vsub.s32 0, %v3435
  %v3539 = vsel %vm3537, %v3538, %v3435
  %v3540 = vshrl.u32 %v3539, 4
  %v3541 = vand.u32 %v3539, 15
  %v3542 = vsub.s32 0, %v3541
  %v3543 = vsel %vm3537, %v3542, %v3541
  %vm3544 = vcmp.lt.s32.totalorder %v3436, 0
  %v3545 = vsub.s32 0, %v3436
  %v3546 = vsel %vm3544, %v3545, %v3436
  %v3547 = vshrl.u32 %v3546, 4
  %v3548 = vand.u32 %v3546, 15
  %v3549 = vsub.s32 0, %v3548
  %v3550 = vsel %vm3544, %v3549, %v3548
  %vm3551 = vcmp.lt.s32.totalorder %v3437, 0
  %v3552 = vsub.s32 0, %v3437
  %v3553 = vsel %vm3551, %v3552, %v3437
  %v3554 = vshrl.u32 %v3553, 4
  %v3555 = vand.u32 %v3553, 15
  %v3556 = vsub.s32 0, %v3555
  %v3557 = vsel %vm3551, %v3556, %v3555
  %vm3558 = vcmp.lt.s32.totalorder %v3438, 0
  %v3559 = vsub.s32 0, %v3438
  %v3560 = vsel %vm3558, %v3559, %v3438
  %v3561 = vshrl.u32 %v3560, 4
  %v3562 = vand.u32 %v3560, 15
  %v3563 = vsub.s32 0, %v3562
  %v3564 = vsel %vm3558, %v3563, %v3562
  %vm3565 = vcmp.lt.s32.totalorder %v3439, 0
  %v3566 = vsub.s32 0, %v3439
  %v3567 = vsel %vm3565, %v3566, %v3439
  %v3568 = vshrl.u32 %v3567, 4
  %v3569 = vand.u32 %v3567, 15
  %v3570 = vsub.s32 0, %v3569
  %v3571 = vsel %vm3565, %v3570, %v3569
  %vm3572 = vcmp.lt.s32.totalorder %v3440, 0
  %v3573 = vsub.s32 0, %v3440
  %v3574 = vsel %vm3572, %v3573, %v3440
  %v3575 = vshrl.u32 %v3574, 4
  %v3576 = vand.u32 %v3574, 15
  %v3577 = vsub.s32 0, %v3576
  %v3578 = vsel %vm3572, %v3577, %v3576
  %vm3579 = vcmp.lt.s32.totalorder %v3441, 0
  %v3580 = vsub.s32 0, %v3441
  %v3581 = vsel %vm3579, %v3580, %v3441
  %v3582 = vshrl.u32 %v3581, 4
  %v3583 = vand.u32 %v3581, 15
  %v3584 = vsub.s32 0, %v3583
  %v3585 = vsel %vm3579, %v3584, %v3583
  %vm3586 = vcmp.lt.s32.totalorder %v3442, 0
  %v3587 = vsub.s32 0, %v3442
  %v3588 = vsel %vm3586, %v3587, %v3442
  %v3589 = vshrl.u32 %v3588, 4
  %v3590 = vand.u32 %v3588, 15
  %v3591 = vsub.s32 0, %v3590
  %v3592 = vsel %vm3586, %v3591, %v3590
  %vm3593 = vcmp.lt.s32.totalorder %v3443, 0
  %v3594 = vsub.s32 0, %v3443
  %v3595 = vsel %vm3593, %v3594, %v3443
  %v3596 = vshrl.u32 %v3595, 4
  %v3597 = vand.u32 %v3595, 15
  %v3598 = vsub.s32 0, %v3597
  %v3599 = vsel %vm3593, %v3598, %v3597
  %vm3600 = vcmp.lt.s32.totalorder %v3444, 0
  %v3601 = vsub.s32 0, %v3444
  %v3602 = vsel %vm3600, %v3601, %v3444
  %v3603 = vshrl.u32 %v3602, 4
  %v3604 = vand.u32 %v3602, 15
  %v3605 = vsub.s32 0, %v3604
  %v3606 = vsel %vm3600, %v3605, %v3604
  %vm3607 = vcmp.lt.s32.totalorder %v3445, 0
  %v3608 = vsub.s32 0, %v3445
  %v3609 = vsel %vm3607, %v3608, %v3445
  %v3610 = vshrl.u32 %v3609, 4
  %v3611 = vand.u32 %v3609, 15
  %v3612 = vsub.s32 0, %v3611
  %v3613 = vsel %vm3607, %v3612, %v3611
  %vm3614 = vcmp.ne.s32.totalorder %v3452, 0
  %vm3615 = vcmp.ne.s32.totalorder %v3459, 0
  %vm3616 = vcmp.ne.s32.totalorder %v3466, 0
  %vm3617 = vcmp.ne.s32.totalorder %v3473, 0
  %vm3618 = vcmp.ne.s32.totalorder %v3480, 0
  %vm3619 = vcmp.ne.s32.totalorder %v3487, 0
  %vm3620 = vcmp.ne.s32.totalorder %v3494, 0
  %vm3621 = vcmp.ne.s32.totalorder %v3501, 0
  %vm3622 = vcmp.ne.s32.totalorder %v3508, 0
  %vm3623 = vcmp.ne.s32.totalorder %v3515, 0
  %vm3624 = vcmp.ne.s32.totalorder %v3522, 0
  %vm3625 = vcmp.ne.s32.totalorder %v3529, 0
  %vm3626 = vcmp.ne.s32.totalorder %v3536, 0
  %vm3627 = vcmp.ne.s32.totalorder %v3543, 0
  %vm3628 = vcmp.ne.s32.totalorder %v3550, 0
  %vm3629 = vcmp.ne.s32.totalorder %v3557, 0
  %vm3630 = vcmp.ne.s32.totalorder %v3564, 0
  %vm3631 = vcmp.ne.s32.totalorder %v3571, 0
  %vm3632 = vcmp.ne.s32.totalorder %v3578, 0
  %vm3633 = vcmp.ne.s32.totalorder %v3585, 0
  %vm3634 = vcmp.ne.s32.totalorder %v3592, 0
  %vm3635 = vcmp.ne.s32.totalorder %v3599, 0
  %vm3636 = vcmp.ne.s32.totalorder %v3606, 0
  %vm3637 = vcmp.ne.s32.totalorder %v3613, 0
  %vm3638 = vcmp.lt.s32.totalorder %v3452, 0
  %vm3639 = vcmp.lt.s32.totalorder %v3459, 0
  %vm3640 = vcmp.lt.s32.totalorder %v3466, 0
  %vm3641 = vcmp.lt.s32.totalorder %v3473, 0
  %vm3642 = vcmp.lt.s32.totalorder %v3480, 0
  %vm3643 = vcmp.lt.s32.totalorder %v3487, 0
  %vm3644 = vcmp.lt.s32.totalorder %v3494, 0
  %vm3645 = vcmp.lt.s32.totalorder %v3501, 0
  %vm3646 = vcmp.lt.s32.totalorder %v3508, 0
  %vm3647 = vcmp.lt.s32.totalorder %v3515, 0
  %vm3648 = vcmp.lt.s32.totalorder %v3522, 0
  %vm3649 = vcmp.lt.s32.totalorder %v3529, 0
  %vm3650 = vcmp.lt.s32.totalorder %v3536, 0
  %vm3651 = vcmp.lt.s32.totalorder %v3543, 0
  %vm3652 = vcmp.lt.s32.totalorder %v3550, 0
  %vm3653 = vcmp.lt.s32.totalorder %v3557, 0
  %vm3654 = vcmp.lt.s32.totalorder %v3564, 0
  %vm3655 = vcmp.lt.s32.totalorder %v3571, 0
  %vm3656 = vcmp.lt.s32.totalorder %v3578, 0
  %vm3657 = vcmp.lt.s32.totalorder %v3585, 0
  %vm3658 = vcmp.lt.s32.totalorder %v3592, 0
  %vm3659 = vcmp.lt.s32.totalorder %v3599, 0
  %vm3660 = vcmp.lt.s32.totalorder %v3606, 0
  %vm3661 = vcmp.lt.s32.totalorder %v3613, 0
  %vm3662 = vmand %vm3638, %vm3614
  %vm3663 = vmand %vm3639, %vm3615
  %vm3664 = vmand %vm3640, %vm3616
  %vm3665 = vmand %vm3641, %vm3617
  %vm3666 = vmand %vm3642, %vm3618
  %vm3667 = vmand %vm3643, %vm3619
  %vm3668 = vmand %vm3644, %vm3620
  %vm3669 = vmand %vm3645, %vm3621
  %vm3670 = vmand %vm3646, %vm3622
  %vm3671 = vmand %vm3647, %vm3623
  %vm3672 = vmand %vm3648, %vm3624
  %vm3673 = vmand %vm3649, %vm3625
  %vm3674 = vmand %vm3650, %vm3626
  %vm3675 = vmand %vm3651, %vm3627
  %vm3676 = vmand %vm3652, %vm3628
  %vm3677 = vmand %vm3653, %vm3629
  %vm3678 = vmand %vm3654, %vm3630
  %vm3679 = vmand %vm3655, %vm3631
  %vm3680 = vmand %vm3656, %vm3632
  %vm3681 = vmand %vm3657, %vm3633
  %vm3682 = vmand %vm3658, %vm3634
  %vm3683 = vmand %vm3659, %vm3635
  %vm3684 = vmand %vm3660, %vm3636
  %vm3685 = vmand %vm3661, %vm3637
  %v3686 = vadd.s32 %v3452, 16
  %v3687 = vadd.s32 %v3459, 16
  %v3688 = vadd.s32 %v3466, 16
  %v3689 = vadd.s32 %v3473, 16
  %v3690 = vadd.s32 %v3480, 16
  %v3691 = vadd.s32 %v3487, 16
  %v3692 = vadd.s32 %v3494, 16
  %v3693 = vadd.s32 %v3501, 16
  %v3694 = vadd.s32 %v3508, 16
  %v3695 = vadd.s32 %v3515, 16
  %v3696 = vadd.s32 %v3522, 16
  %v3697 = vadd.s32 %v3529, 16
  %v3698 = vadd.s32 %v3536, 16
  %v3699 = vadd.s32 %v3543, 16
  %v3700 = vadd.s32 %v3550, 16
  %v3701 = vadd.s32 %v3557, 16
  %v3702 = vadd.s32 %v3564, 16
  %v3703 = vadd.s32 %v3571, 16
  %v3704 = vadd.s32 %v3578, 16
  %v3705 = vadd.s32 %v3585, 16
  %v3706 = vadd.s32 %v3592, 16
  %v3707 = vadd.s32 %v3599, 16
  %v3708 = vadd.s32 %v3606, 16
  %v3709 = vadd.s32 %v3613, 16
  %v3710 = vsel %vm3662, %v3686, %v3452
  %v3711 = vsel %vm3663, %v3687, %v3459
  %v3712 = vsel %vm3664, %v3688, %v3466
  %v3713 = vsel %vm3665, %v3689, %v3473
  %v3714 = vsel %vm3666, %v3690, %v3480
  %v3715 = vsel %vm3667, %v3691, %v3487
  %v3716 = vsel %vm3668, %v3692, %v3494
  %v3717 = vsel %vm3669, %v3693, %v3501
  %v3718 = vsel %vm3670, %v3694, %v3508
  %v3719 = vsel %vm3671, %v3695, %v3515
  %v3720 = vsel %vm3672, %v3696, %v3522
  %v3721 = vsel %vm3673, %v3697, %v3529
  %v3722 = vsel %vm3674, %v3698, %v3536
  %v3723 = vsel %vm3675, %v3699, %v3543
  %v3724 = vsel %vm3676, %v3700, %v3550
  %v3725 = vsel %vm3677, %v3701, %v3557
  %v3726 = vsel %vm3678, %v3702, %v3564
  %v3727 = vsel %vm3679, %v3703, %v3571
  %v3728 = vsel %vm3680, %v3704, %v3578
  %v3729 = vsel %vm3681, %v3705, %v3585
  %v3730 = vsel %vm3682, %v3706, %v3592
  %v3731 = vsel %vm3683, %v3707, %v3599
  %v3732 = vsel %vm3684, %v3708, %v3606
  %v3733 = vsel %vm3685, %v3709, %v3613
  %vm3734 = vcmp.lt.s32.totalorder %v3710, 12
  %vm3735 = vcmp.lt.s32.totalorder %v3711, 12
  %vm3736 = vcmp.lt.s32.totalorder %v3712, 12
  %vm3737 = vcmp.lt.s32.totalorder %v3713, 12
  %vm3738 = vcmp.lt.s32.totalorder %v3714, 12
  %vm3739 = vcmp.lt.s32.totalorder %v3715, 12
  %vm3740 = vcmp.lt.s32.totalorder %v3716, 12
  %vm3741 = vcmp.lt.s32.totalorder %v3717, 12
  %vm3742 = vcmp.lt.s32.totalorder %v3718, 12
  %vm3743 = vcmp.lt.s32.totalorder %v3719, 12
  %vm3744 = vcmp.lt.s32.totalorder %v3720, 12
  %vm3745 = vcmp.lt.s32.totalorder %v3721, 12
  %vm3746 = vcmp.lt.s32.totalorder %v3722, 12
  %vm3747 = vcmp.lt.s32.totalorder %v3723, 12
  %vm3748 = vcmp.lt.s32.totalorder %v3724, 12
  %vm3749 = vcmp.lt.s32.totalorder %v3725, 12
  %vm3750 = vcmp.lt.s32.totalorder %v3726, 12
  %vm3751 = vcmp.lt.s32.totalorder %v3727, 12
  %vm3752 = vcmp.lt.s32.totalorder %v3728, 12
  %vm3753 = vcmp.lt.s32.totalorder %v3729, 12
  %vm3754 = vcmp.lt.s32.totalorder %v3730, 12
  %vm3755 = vcmp.lt.s32.totalorder %v3731, 12
  %vm3756 = vcmp.lt.s32.totalorder %v3732, 12
  %vm3757 = vcmp.lt.s32.totalorder %v3733, 12
  %v3758 = vmax.f32 %v3397, 0.0
  %v3759 = vmax.f32 %v3398, 0.0
  %v3760 = vmax.f32 %v3399, 0.0
  %v3761 = vmax.f32 %v3400, 0.0
  %v3762 = vmax.f32 %v3401, 0.0
  %v3763 = vmax.f32 %v3402, 0.0
  %v3764 = vmax.f32 %v3403, 0.0
  %v3765 = vmax.f32 %v3404, 0.0
  %v3766 = vmax.f32 %v3405, 0.0
  %v3767 = vmax.f32 %v3406, 0.0
  %v3768 = vmax.f32 %v3407, 0.0
  %v3769 = vmax.f32 %v3408, 0.0
  %v3770 = vmax.f32 %v3409, 0.0
  %v3771 = vmax.f32 %v3410, 0.0
  %v3772 = vmax.f32 %v3411, 0.0
  %v3773 = vmax.f32 %v3412, 0.0
  %v3774 = vmax.f32 %v3413, 0.0
  %v3775 = vmax.f32 %v3414, 0.0
  %v3776 = vmax.f32 %v3415, 0.0
  %v3777 = vmax.f32 %v3416, 0.0
  %v3778 = vmax.f32 %v3417, 0.0
  %v3779 = vmax.f32 %v3418, 0.0
  %v3780 = vmax.f32 %v3419, 0.0
  %v3781 = vmax.f32 %v3420, 0.0
  %v3782 = vsel %vm3734, %v3758, 0.0
  %v3783 = vsel %vm3735, %v3759, 0.0
  %v3784 = vsel %vm3736, %v3760, 0.0
  %v3785 = vsel %vm3737, %v3761, 0.0
  %v3786 = vsel %vm3738, %v3762, 0.0
  %v3787 = vsel %vm3739, %v3763, 0.0
  %v3788 = vsel %vm3740, %v3764, 0.0
  %v3789 = vsel %vm3741, %v3765, 0.0
  %v3790 = vsel %vm3742, %v3766, 0.0
  %v3791 = vsel %vm3743, %v3767, 0.0
  %v3792 = vsel %vm3744, %v3768, 0.0
  %v3793 = vsel %vm3745, %v3769, 0.0
  %v3794 = vsel %vm3746, %v3770, 0.0
  %v3795 = vsel %vm3747, %v3771, 0.0
  %v3796 = vsel %vm3748, %v3772, 0.0
  %v3797 = vsel %vm3749, %v3773, 0.0
  %v3798 = vsel %vm3750, %v3774, 0.0
  %v3799 = vsel %vm3751, %v3775, 0.0
  %v3800 = vsel %vm3752, %v3776, 0.0
  %v3801 = vsel %vm3753, %v3777, 0.0
  %v3802 = vsel %vm3754, %v3778, 0.0
  %v3803 = vsel %vm3755, %v3779, 0.0
  %v3804 = vsel %vm3756, %v3780, 0.0
  %v3805 = vsel %vm3757, %v3781, 0.0
  %v3806 = vpack.c.bf16 %v3783, %v3782
  %v3807 = vpack.c.bf16 %v3785, %v3784
  %v3808 = vpack.c.bf16 %v3787, %v3786
  %v3809 = vpack.c.bf16 %v3789, %v3788
  %v3810 = vpack.c.bf16 %v3791, %v3790
  %v3811 = vpack.c.bf16 %v3793, %v3792
  %v3812 = vpack.c.bf16 %v3795, %v3794
  %v3813 = vpack.c.bf16 %v3797, %v3796
  %v3814 = vpack.c.bf16 %v3799, %v3798
  %v3815 = vpack.c.bf16 %v3801, %v3800
  %v3816 = vpack.c.bf16 %v3803, %v3802
  %v3817 = vpack.c.bf16 %v3805, %v3804
  %v3830 = vunpack.c.l.b16 %v3806
  %v3831 = vunpack.c.h.b16 %v3806
  %v3832 = vunpack.c.l.b16 %v3807
  %v3833 = vunpack.c.h.b16 %v3807
  %v3834 = vunpack.c.l.b16 %v3808
  %v3835 = vunpack.c.h.b16 %v3808
  %v3836 = vunpack.c.l.b16 %v3809
  %v3837 = vunpack.c.h.b16 %v3809
  %v3838 = vunpack.c.l.b16 %v3810
  %v3839 = vunpack.c.h.b16 %v3810
  %v3840 = vunpack.c.l.b16 %v3811
  %v3841 = vunpack.c.h.b16 %v3811
  %v3842 = vunpack.c.l.b16 %v3812
  %v3843 = vunpack.c.h.b16 %v3812
  %v3844 = vunpack.c.l.b16 %v3813
  %v3845 = vunpack.c.h.b16 %v3813
  %v3846 = vunpack.c.l.b16 %v3814
  %v3847 = vunpack.c.h.b16 %v3814
  %v3848 = vunpack.c.l.b16 %v3815
  %v3849 = vunpack.c.h.b16 %v3815
  %v3850 = vunpack.c.l.b16 %v3816
  %v3851 = vunpack.c.h.b16 %v3816
  %v3852 = vunpack.c.l.b16 %v3817
  %v3853 = vunpack.c.h.b16 %v3817
  %v3854 = vpack.c.b16 %v3830, %v3830
  %v3855 = vpack.c.b16 %v3831, %v3831
  %v3856 = vpack.c.b16 %v3832, %v3832
  %v3857 = vpack.c.b16 %v3833, %v3833
  %v3858 = vpack.c.b16 %v3834, %v3834
  %v3859 = vpack.c.b16 %v3835, %v3835
  %v3860 = vpack.c.b16 %v3836, %v3836
  %v3861 = vpack.c.b16 %v3837, %v3837
  %v3862 = vpack.c.b16 %v3838, %v3838
  %v3863 = vpack.c.b16 %v3839, %v3839
  %v3864 = vpack.c.b16 %v3840, %v3840
  %v3865 = vpack.c.b16 %v3841, %v3841
  %v3866 = vpack.c.b16 %v3842, %v3842
  %v3867 = vpack.c.b16 %v3843, %v3843
  %v3868 = vpack.c.b16 %v3844, %v3844
  %v3869 = vpack.c.b16 %v3845, %v3845
  %v3870 = vpack.c.b16 %v3846, %v3846
  %v3871 = vpack.c.b16 %v3847, %v3847
  %v3872 = vpack.c.b16 %v3848, %v3848
  %v3873 = vpack.c.b16 %v3849, %v3849
  %v3874 = vpack.c.b16 %v3850, %v3850
  %v3875 = vpack.c.b16 %v3851, %v3851
  %v3876 = vpack.c.b16 %v3852, %v3852
  %v3877 = vpack.c.b16 %v3853, %v3853
  %3902 = vst.msk [vmem:[#allocation3 + $0x10] sm:$0xf] %vm30, %v3854
  %3903 = vst.msk [vmem:[#allocation3 + $0x14] sm:$0xf] %vm30, %v3855
  %3904 = vst.msk [vmem:[#allocation3 + $0x18] sm:$0xf] %vm30, %v3856
  %3905 = vst.msk [vmem:[#allocation3 + $0x1c] sm:$0xf] %vm30, %v3857
  %3906 = vst.msk [vmem:[#allocation3 + $0x20] sm:$0xf] %vm30, %v3858
  %3907 = vst.msk [vmem:[#allocation3 + $0x24] sm:$0xf] %vm30, %v3859
  %3908 = vst.msk [vmem:[#allocation3 + $0x28] sm:$0xf] %vm30, %v3860
  %3909 = vst.msk [vmem:[#allocation3 + $0x2c] sm:$0xf] %vm30, %v3861
  %3910 = vst.msk [vmem:[#allocation3 + $0x30] sm:$0xf] %vm30, %v3862
  %3911 = vst.msk [vmem:[#allocation3 + $0x34] sm:$0xf] %vm30, %v3863
  %3912 = vst.msk [vmem:[#allocation3 + $0x38] sm:$0xf] %vm30, %v3864
  %3913 = vst.msk [vmem:[#allocation3 + $0x3c] sm:$0xf] %vm30, %v3865
  %3914 = vst.msk [vmem:[#allocation3 + $0x40] sm:$0xf] %vm30, %v3866
  %3915 = vst.msk [vmem:[#allocation3 + $0x44] sm:$0xf] %vm30, %v3867
  %3916 = vst.msk [vmem:[#allocation3 + $0x48] sm:$0xf] %vm30, %v3868
  %3917 = vst.msk [vmem:[#allocation3 + $0x4c] sm:$0xf] %vm30, %v3869
  %3918 = vst.msk [vmem:[#allocation3 + $0x50] sm:$0xf] %vm30, %v3870
  %3919 = vst.msk [vmem:[#allocation3 + $0x54] sm:$0xf] %vm30, %v3871
  %3920 = vst.msk [vmem:[#allocation3 + $0x58] sm:$0xf] %vm30, %v3872
  %3921 = vst.msk [vmem:[#allocation3 + $0x5c] sm:$0xf] %vm30, %v3873
  %3922 = vst.msk [vmem:[#allocation3 + $0x60] sm:$0xf] %vm30, %v3874
  %3923 = vst.msk [vmem:[#allocation3 + $0x64] sm:$0xf] %vm30, %v3875
  %3924 = vst.msk [vmem:[#allocation3 + $0x68] sm:$0xf] %vm30, %v3876
  %3925 = vst.msk [vmem:[#allocation3 + $0x6c] sm:$0xf] %vm30, %v3877
  %v3926 = vld [vmem:[#allocation3 + $0x4] sm:$0x8]
  %v3927 = vld [vmem:[#allocation3 + $0x8] sm:$0xf]
  %v3928 = vld [vmem:[#allocation3 + $0xc] sm:$0xf]
  %v3929 = vld [vmem:[#allocation3 + $0x10] sm:$0xf]
  %v3930 = vld [vmem:[#allocation3 + $0x14] sm:$0xf]
  %v3931 = vld [vmem:[#allocation3 + $0x18] sm:$0xf]
  %v3932 = vld [vmem:[#allocation3 + $0x1c] sm:$0xf]
  %v3933 = vld [vmem:[#allocation3 + $0x20] sm:$0xf]
  %v3934 = vld [vmem:[#allocation3 + $0x24] sm:$0xf]
  %v3935 = vld [vmem:[#allocation3 + $0x28] sm:$0xf]
  %v3936 = vld [vmem:[#allocation3 + $0x2c] sm:$0xf]
  %v3937 = vld [vmem:[#allocation3 + $0x30] sm:$0xf]
  %v3938 = vld [vmem:[#allocation3 + $0x34] sm:$0xf]
  %v3939 = vld [vmem:[#allocation3 + $0x38] sm:$0xf]
  %v3940 = vld [vmem:[#allocation3 + $0x3c] sm:$0xf]
  %v3941 = vld [vmem:[#allocation3 + $0x40] sm:$0xf]
  %v3942 = vld [vmem:[#allocation3 + $0x44] sm:$0xf]
  %v3943 = vld [vmem:[#allocation3 + $0x48] sm:$0xf]
  %v3944 = vld [vmem:[#allocation3 + $0x4c] sm:$0xf]
  %v3945 = vld [vmem:[#allocation3 + $0x50] sm:$0xf]
  %v3946 = vld [vmem:[#allocation3 + $0x54] sm:$0xf]
  %v3947 = vld [vmem:[#allocation3 + $0x58] sm:$0xf]
  %v3948 = vld [vmem:[#allocation3 + $0x5c] sm:$0xf]
  %v3949 = vld [vmem:[#allocation3 + $0x60] sm:$0xf]
  %v3950 = vld [vmem:[#allocation3 + $0x64] sm:$0xf]
  %v3951 = vld [vmem:[%s3] sm:$0xf]
  %v3952 = vld [vmem:[%s3 + $0x4] sm:$0xf]
  %v3953 = vld [vmem:[%s3 + $0x8] sm:$0xf]
  %v3954 = vld [vmem:[%s3 + $0xc] sm:$0xf]
  %s3955 = scalar_lea.vmem %s3, 16
  %v3956 = vld [vmem:[%s3955] sm:$0xf]
  %v3957 = vld [vmem:[%s3955 + $0x4] sm:$0xf]
  %v3958 = vld [vmem:[%s3955 + $0x8] sm:$0xf]
  %v3959 = vld [vmem:[%s3955 + $0xc] sm:$0xf]
  %v3984 = vunpack.c.l.b16 %v3927
  %v3985 = vunpack.c.l.b16 %v3928
  %v3986 = vunpack.c.l.b16 %v3929
  %v3987 = vunpack.c.l.b16 %v3930
  %v3988 = vunpack.c.l.b16 %v3931
  %v3989 = vunpack.c.l.b16 %v3932
  %v3990 = vunpack.c.l.b16 %v3933
  %v3991 = vunpack.c.l.b16 %v3934
  %v3992 = vunpack.c.l.b16 %v3935
  %v3993 = vunpack.c.l.b16 %v3936
  %v3994 = vunpack.c.l.b16 %v3937
  %v3995 = vunpack.c.l.b16 %v3938
  %v3996 = vunpack.c.l.b16 %v3939
  %v3997 = vunpack.c.l.b16 %v3940
  %v3998 = vunpack.c.l.b16 %v3941
  %v3999 = vunpack.c.l.b16 %v3942
  %v4000 = vunpack.c.l.b16 %v3943
  %v4001 = vunpack.c.l.b16 %v3944
  %v4002 = vunpack.c.l.b16 %v3945
  %v4003 = vunpack.c.l.b16 %v3946
  %v4004 = vunpack.c.l.b16 %v3947
  %v4005 = vunpack.c.l.b16 %v3948
  %v4006 = vunpack.c.l.b16 %v3949
  %v4007 = vunpack.c.l.b16 %v3950
  %v4008 = vpack.c.b16 %v3985, %v3984
  %v4009 = vpack.c.b16 %v3987, %v3986
  %v4010 = vpack.c.b16 %v3989, %v3988
  %v4011 = vpack.c.b16 %v3991, %v3990
  %v4012 = vpack.c.b16 %v3993, %v3992
  %v4013 = vpack.c.b16 %v3995, %v3994
  %v4014 = vpack.c.b16 %v3997, %v3996
  %v4015 = vpack.c.b16 %v3999, %v3998
  %v4016 = vpack.c.b16 %v4001, %v4000
  %v4017 = vpack.c.b16 %v4003, %v4002
  %v4018 = vpack.c.b16 %v4005, %v4004
  %v4019 = vpack.c.b16 %v4007, %v4006
  %v4024 = vunpack.c.l.b16 %v3956
  %v4025 = vunpack.c.l.b16 %v3957
  %v4026 = vunpack.c.l.b16 %v3958
  %v4027 = vunpack.c.l.b16 %v3959
  %v4028 = vpack.c.b16 %v4025, %v4024
  %v4029 = vpack.c.b16 %v4027, %v4026
  %vm4032 = vcmask 261120
  %v4034 = vsel %vm4032, %v4008, 0
  %v4037 = vsel %vm4032, %v4009, 0
  %v4040 = vsel %vm4032, %v4010, 0
  %v4043 = vsel %vm4032, %v4011, 0
  %v4046 = vsel %vm4032, %v4012, 0
  %v4049 = vsel %vm4032, %v4013, 0
  %v4052 = vsel %vm4032, %v4014, 0
  %v4055 = vsel %vm4032, %v4015, 0
  %v4058 = vsel %vm4032, %v4016, 0
  %v4061 = vsel %vm4032, %v4017, 0
  %v4064 = vsel %vm4032, %v4018, 0
  %v4067 = vsel %vm4032, %v4019, 0
  %4069 = vmatprep.subr.bf16.mxu0 0
  %4070 = vmatpush1.bf16.msra.mxu0 0
  %4071 = vmatprep.subr.bf16.mxu0 0
  %4072 = vmatpush1.bf16.msra.mxu0 0
  %4073 = vmatprep.subr.bf16.mxu0 0
  %4074 = vmatpush1.bf16.msra.mxu0 0
  %4075 = vmatprep.subr.bf16.mxu0 0
  %4076 = vmatpush1.bf16.msra.mxu0 0
  %4077 = vmatprep.subr.bf16.mxu0 0
  %4078 = vmatpush1.bf16.msra.mxu0 0
  %4079 = vmatprep.subr.bf16.mxu0 0
  %4080 = vmatpush1.bf16.msra.mxu0 0
  %4081 = vmatprep.subr.bf16.mxu0 0
  %4082 = vmatpush1.bf16.msra.mxu0 %v4029
  %4083 = vmatprep.subr.bf16.mxu0 0
  %4084 = vmatpush1.bf16.msra.mxu0 %v4028
  %4085 = vmatprep.subr.bf16.mxu0 0
  %4086 = vmatpush2.bf16.msra.mxu0 0
  %4087 = vmatprep.subr.bf16.mxu0 0
  %4088 = vmatpush2.bf16.msra.mxu0 0
  %4089 = vmatprep.subr.bf16.mxu0 0
  %4090 = vmatpush2.bf16.msra.mxu0 0
  %4091 = vmatprep.subr.bf16.mxu0 0
  %4092 = vmatpush2.bf16.msra.mxu0 0
  %4093 = vmatprep.subr.bf16.mxu0 0
  %4094 = vmatpush2.bf16.msra.mxu0 0
  %4095 = vmatprep.subr.bf16.mxu0 0
  %4096 = vmatpush2.bf16.msra.mxu0 0
  %4097 = vmatprep.subr.bf16.mxu0 0
  %4098 = vmatpush2.bf16.msra.mxu0 0
  %4099 = vmatprep.subr.bf16.mxu0 0
  %4100 = vmatpush2.bf16.msra.mxu0 0
  %4101 = vmatprep.mubr.bf16.mxu0 0
  %4102 = vmatmul.mubr.bf16.gmra.mxu0 %v4034
  %v4103 = vpop.f32.mrf.mxu0
  %v4104 = vadd.f32 0.0, %v4103
  %v4105 = vpop.f32.mrf.mxu0
  %v4106 = vpop.f32.mrf.mxu0
  %v4107 = vadd.f32 0.0, %v4106
  %v4108 = vpop.f32.mrf.mxu0
  %4109 = vmatprep.mubr.bf16.mxu0 0
  %4110 = vmatmul.mubr.bf16.gmra.mxu0 %v4037
  %v4111 = vpop.f32.mrf.mxu0
  %v4112 = vadd.f32 0.0, %v4111
  %v4113 = vpop.f32.mrf.mxu0
  %v4114 = vpop.f32.mrf.mxu0
  %v4115 = vadd.f32 0.0, %v4114
  %v4116 = vpop.f32.mrf.mxu0
  %4117 = vmatprep.mubr.bf16.mxu0 0
  %4118 = vmatmul.mubr.bf16.gmra.mxu0 %v4040
  %v4119 = vpop.f32.mrf.mxu0
  %v4120 = vadd.f32 0.0, %v4119
  %v4121 = vpop.f32.mrf.mxu0
  %v4122 = vpop.f32.mrf.mxu0
  %v4123 = vadd.f32 0.0, %v4122
  %v4124 = vpop.f32.mrf.mxu0
  %4125 = vmatprep.mubr.bf16.mxu0 0
  %4126 = vmatmul.mubr.bf16.gmra.mxu0 %v4043
  %v4127 = vpop.f32.mrf.mxu0
  %v4128 = vadd.f32 0.0, %v4127
  %v4129 = vpop.f32.mrf.mxu0
  %v4130 = vpop.f32.mrf.mxu0
  %v4131 = vadd.f32 0.0, %v4130
  %v4132 = vpop.f32.mrf.mxu0
  %4133 = vmatprep.mubr.bf16.mxu0 0
  %4134 = vmatmul.mubr.bf16.gmra.mxu0 %v4046
  %v4135 = vpop.f32.mrf.mxu0
  %v4136 = vadd.f32 0.0, %v4135
  %v4137 = vpop.f32.mrf.mxu0
  %v4138 = vpop.f32.mrf.mxu0
  %v4139 = vadd.f32 0.0, %v4138
  %v4140 = vpop.f32.mrf.mxu0
  %4141 = vmatprep.mubr.bf16.mxu0 0
  %4142 = vmatmul.mubr.bf16.gmra.mxu0 %v4049
  %v4143 = vpop.f32.mrf.mxu0
  %v4144 = vadd.f32 0.0, %v4143
  %v4145 = vpop.f32.mrf.mxu0
  %v4146 = vpop.f32.mrf.mxu0
  %v4147 = vadd.f32 0.0, %v4146
  %v4148 = vpop.f32.mrf.mxu0
  %4149 = vmatprep.mubr.bf16.mxu0 0
  %4150 = vmatmul.mubr.bf16.gmra.mxu0 %v4052
  %v4151 = vpop.f32.mrf.mxu0
  %v4152 = vadd.f32 0.0, %v4151
  %v4153 = vpop.f32.mrf.mxu0
  %v4154 = vpop.f32.mrf.mxu0
  %v4155 = vadd.f32 0.0, %v4154
  %v4156 = vpop.f32.mrf.mxu0
  %4157 = vmatprep.mubr.bf16.mxu0 0
  %4158 = vmatmul.mubr.bf16.gmra.mxu0 %v4055
  %v4159 = vpop.f32.mrf.mxu0
  %v4160 = vadd.f32 0.0, %v4159
  %v4161 = vpop.f32.mrf.mxu0
  %v4162 = vpop.f32.mrf.mxu0
  %v4163 = vadd.f32 0.0, %v4162
  %v4164 = vpop.f32.mrf.mxu0
  %4165 = vmatprep.mubr.bf16.mxu0 0
  %4166 = vmatmul.mubr.bf16.gmra.mxu0 %v4058
  %v4167 = vpop.f32.mrf.mxu0
  %v4168 = vadd.f32 0.0, %v4167
  %v4169 = vpop.f32.mrf.mxu0
  %v4170 = vpop.f32.mrf.mxu0
  %v4171 = vadd.f32 0.0, %v4170
  %v4172 = vpop.f32.mrf.mxu0
  %4173 = vmatprep.mubr.bf16.mxu0 0
  %4174 = vmatmul.mubr.bf16.gmra.mxu0 %v4061
  %v4175 = vpop.f32.mrf.mxu0
  %v4176 = vadd.f32 0.0, %v4175
  %v4177 = vpop.f32.mrf.mxu0
  %v4178 = vpop.f32.mrf.mxu0
  %v4179 = vadd.f32 0.0, %v4178
  %v4180 = vpop.f32.mrf.mxu0
  %4181 = vmatprep.mubr.bf16.mxu0 0
  %4182 = vmatmul.mubr.bf16.gmra.mxu0 %v4064
  %v4183 = vpop.f32.mrf.mxu0
  %v4184 = vadd.f32 0.0, %v4183
  %v4185 = vpop.f32.mrf.mxu0
  %v4186 = vpop.f32.mrf.mxu0
  %v4187 = vadd.f32 0.0, %v4186
  %v4188 = vpop.f32.mrf.mxu0
  %4189 = vmatprep.mubr.bf16.mxu0 0
  %4190 = vmatmul.mubr.bf16.gmra.mxu0 %v4067
  %v4191 = vpop.f32.mrf.mxu0
  %v4192 = vadd.f32 0.0, %v4191
  %v4193 = vpop.f32.mrf.mxu0
  %v4194 = vpop.f32.mrf.mxu0
  %v4195 = vadd.f32 0.0, %v4194
  %v4196 = vpop.f32.mrf.mxu0
  %4197 = vdwg.mxu0
  %v4199 = vunpack.c.l.b16 %v3926
  %v4200 = vpack.c.b16 %v3984, %v4199
  %v4201 = vpack.c.b16 %v3986, %v3985
  %v4202 = vpack.c.b16 %v3988, %v3987
  %v4203 = vpack.c.b16 %v3990, %v3989
  %v4204 = vpack.c.b16 %v3992, %v3991
  %v4205 = vpack.c.b16 %v3994, %v3993
  %v4206 = vpack.c.b16 %v3996, %v3995
  %v4207 = vpack.c.b16 %v3998, %v3997
  %v4208 = vpack.c.b16 %v4000, %v3999
  %v4209 = vpack.c.b16 %v4002, %v4001
  %v4210 = vpack.c.b16 %v4004, %v4003
  %v4211 = vpack.c.b16 %v4006, %v4005
  %v4212 = vpack.c.b16 %v4007, %v4007
  %v4214 = vshrl.u32 %v4200, 16
  %v4216 = vrot.slane %v4214, 3
  %v4217 = vshll.u32 %v4200, 16
  %v4219 = vrot.slane %v4217, 4
  %v4220 = vor.u32 %v4216, %v4219
  %v4222 = vshrl.u32 %v4201, 16
  %v4224 = vrot.slane %v4222, 3
  %v4225 = vshll.u32 %v4201, 16
  %v4227 = vrot.slane %v4225, 4
  %v4228 = vor.u32 %v4224, %v4227
  %v4229 = vsel %vm750, %v4220, %v4228
  %v4231 = vshrl.u32 %v4202, 16
  %v4233 = vrot.slane %v4231, 3
  %v4234 = vshll.u32 %v4202, 16
  %v4236 = vrot.slane %v4234, 4
  %v4237 = vor.u32 %v4233, %v4236
  %v4238 = vsel %vm750, %v4228, %v4237
  %v4240 = vshrl.u32 %v4203, 16
  %v4242 = vrot.slane %v4240, 3
  %v4243 = vshll.u32 %v4203, 16
  %v4245 = vrot.slane %v4243, 4
  %v4246 = vor.u32 %v4242, %v4245
  %v4247 = vsel %vm750, %v4237, %v4246
  %v4249 = vshrl.u32 %v4204, 16
  %v4251 = vrot.slane %v4249, 3
  %v4252 = vshll.u32 %v4204, 16
  %v4254 = vrot.slane %v4252, 4
  %v4255 = vor.u32 %v4251, %v4254
  %v4256 = vsel %vm750, %v4246, %v4255
  %v4258 = vshrl.u32 %v4205, 16
  %v4260 = vrot.slane %v4258, 3
  %v4261 = vshll.u32 %v4205, 16
  %v4263 = vrot.slane %v4261, 4
  %v4264 = vor.u32 %v4260, %v4263
  %v4265 = vsel %vm750, %v4255, %v4264
  %v4267 = vshrl.u32 %v4206, 16
  %v4269 = vrot.slane %v4267, 3
  %v4270 = vshll.u32 %v4206, 16
  %v4272 = vrot.slane %v4270, 4
  %v4273 = vor.u32 %v4269, %v4272
  %v4274 = vsel %vm750, %v4264, %v4273
  %v4276 = vshrl.u32 %v4207, 16
  %v4278 = vrot.slane %v4276, 3
  %v4279 = vshll.u32 %v4207, 16
  %v4281 = vrot.slane %v4279, 4
  %v4282 = vor.u32 %v4278, %v4281
  %v4283 = vsel %vm750, %v4273, %v4282
  %v4285 = vshrl.u32 %v4208, 16
  %v4287 = vrot.slane %v4285, 3
  %v4288 = vshll.u32 %v4208, 16
  %v4290 = vrot.slane %v4288, 4
  %v4291 = vor.u32 %v4287, %v4290
  %v4292 = vsel %vm750, %v4282, %v4291
  %v4294 = vshrl.u32 %v4209, 16
  %v4296 = vrot.slane %v4294, 3
  %v4297 = vshll.u32 %v4209, 16
  %v4299 = vrot.slane %v4297, 4
  %v4300 = vor.u32 %v4296, %v4299
  %v4301 = vsel %vm750, %v4291, %v4300
  %v4303 = vshrl.u32 %v4210, 16
  %v4305 = vrot.slane %v4303, 3
  %v4306 = vshll.u32 %v4210, 16
  %v4308 = vrot.slane %v4306, 4
  %v4309 = vor.u32 %v4305, %v4308
  %v4310 = vsel %vm750, %v4300, %v4309
  %v4312 = vshrl.u32 %v4211, 16
  %v4314 = vrot.slane %v4312, 3
  %v4315 = vshll.u32 %v4211, 16
  %v4317 = vrot.slane %v4315, 4
  %v4318 = vor.u32 %v4314, %v4317
  %v4319 = vsel %vm750, %v4309, %v4318
  %v4321 = vshrl.u32 %v4212, 16
  %v4323 = vrot.slane %v4321, 3
  %v4324 = vshll.u32 %v4212, 16
  %v4326 = vrot.slane %v4324, 4
  %v4327 = vor.u32 %v4323, %v4326
  %v4328 = vsel %vm750, %v4318, %v4327
  %v4333 = vunpack.c.l.b16 %v3951
  %v4334 = vunpack.c.l.b16 %v3952
  %v4335 = vunpack.c.l.b16 %v3953
  %v4336 = vunpack.c.l.b16 %v3954
  %v4337 = vpack.c.b16 %v4334, %v4333
  %v4338 = vpack.c.b16 %v4336, %v4335
  %v4342 = vsel %vm4032, %v4229, 0
  %v4345 = vsel %vm4032, %v4238, 0
  %v4348 = vsel %vm4032, %v4247, 0
  %v4351 = vsel %vm4032, %v4256, 0
  %v4354 = vsel %vm4032, %v4265, 0
  %v4357 = vsel %vm4032, %v4274, 0
  %v4360 = vsel %vm4032, %v4283, 0
  %v4363 = vsel %vm4032, %v4292, 0
  %v4366 = vsel %vm4032, %v4301, 0
  %v4369 = vsel %vm4032, %v4310, 0
  %v4372 = vsel %vm4032, %v4319, 0
  %v4375 = vsel %vm4032, %v4328, 0
  %4377 = vmatprep.subr.bf16.mxu0 0
  %4378 = vmatpush1.bf16.msra.mxu0 0
  %4379 = vmatprep.subr.bf16.mxu0 0
  %4380 = vmatpush1.bf16.msra.mxu0 0
  %4381 = vmatprep.subr.bf16.mxu0 0
  %4382 = vmatpush1.bf16.msra.mxu0 0
  %4383 = vmatprep.subr.bf16.mxu0 0
  %4384 = vmatpush1.bf16.msra.mxu0 0
  %4385 = vmatprep.subr.bf16.mxu0 0
  %4386 = vmatpush1.bf16.msra.mxu0 0
  %4387 = vmatprep.subr.bf16.mxu0 0
  %4388 = vmatpush1.bf16.msra.mxu0 0
  %4389 = vmatprep.subr.bf16.mxu0 0
  %4390 = vmatpush1.bf16.msra.mxu0 %v4338
  %4391 = vmatprep.subr.bf16.mxu0 0
  %4392 = vmatpush1.bf16.msra.mxu0 %v4337
  %4393 = vmatprep.subr.bf16.mxu0 0
  %4394 = vmatpush2.bf16.msra.mxu0 0
  %4395 = vmatprep.subr.bf16.mxu0 0
  %4396 = vmatpush2.bf16.msra.mxu0 0
  %4397 = vmatprep.subr.bf16.mxu0 0
  %4398 = vmatpush2.bf16.msra.mxu0 0
  %4399 = vmatprep.subr.bf16.mxu0 0
  %4400 = vmatpush2.bf16.msra.mxu0 0
  %4401 = vmatprep.subr.bf16.mxu0 0
  %4402 = vmatpush2.bf16.msra.mxu0 0
  %4403 = vmatprep.subr.bf16.mxu0 0
  %4404 = vmatpush2.bf16.msra.mxu0 0
  %4405 = vmatprep.subr.bf16.mxu0 0
  %4406 = vmatpush2.bf16.msra.mxu0 0
  %4407 = vmatprep.subr.bf16.mxu0 0
  %4408 = vmatpush2.bf16.msra.mxu0 0
  %4409 = vmatprep.mubr.bf16.mxu0 0
  %4410 = vmatmul.mubr.bf16.gmra.mxu0 %v4342
  %v4411 = vpop.f32.mrf.mxu0
  %v4412 = vadd.f32 %v4104, %v4411
  %v4413 = vpop.f32.mrf.mxu0
  %v4414 = vpop.f32.mrf.mxu0
  %v4415 = vadd.f32 %v4107, %v4414
  %v4416 = vpop.f32.mrf.mxu0
  %4417 = vmatprep.mubr.bf16.mxu0 0
  %4418 = vmatmul.mubr.bf16.gmra.mxu0 %v4345
  %v4419 = vpop.f32.mrf.mxu0
  %v4420 = vadd.f32 %v4112, %v4419
  %v4421 = vpop.f32.mrf.mxu0
  %v4422 = vpop.f32.mrf.mxu0
  %v4423 = vadd.f32 %v4115, %v4422
  %v4424 = vpop.f32.mrf.mxu0
  %4425 = vmatprep.mubr.bf16.mxu0 0
  %4426 = vmatmul.mubr.bf16.gmra.mxu0 %v4348
  %v4427 = vpop.f32.mrf.mxu0
  %v4428 = vadd.f32 %v4120, %v4427
  %v4429 = vpop.f32.mrf.mxu0
  %v4430 = vpop.f32.mrf.mxu0
  %v4431 = vadd.f32 %v4123, %v4430
  %v4432 = vpop.f32.mrf.mxu0
  %4433 = vmatprep.mubr.bf16.mxu0 0
  %4434 = vmatmul.mubr.bf16.gmra.mxu0 %v4351
  %v4435 = vpop.f32.mrf.mxu0
  %v4436 = vadd.f32 %v4128, %v4435
  %v4437 = vpop.f32.mrf.mxu0
  %v4438 = vpop.f32.mrf.mxu0
  %v4439 = vadd.f32 %v4131, %v4438
  %v4440 = vpop.f32.mrf.mxu0
  %4441 = vmatprep.mubr.bf16.mxu0 0
  %4442 = vmatmul.mubr.bf16.gmra.mxu0 %v4354
  %v4443 = vpop.f32.mrf.mxu0
  %v4444 = vadd.f32 %v4136, %v4443
  %v4445 = vpop.f32.mrf.mxu0
  %v4446 = vpop.f32.mrf.mxu0
  %v4447 = vadd.f32 %v4139, %v4446
  %v4448 = vpop.f32.mrf.mxu0
  %4449 = vmatprep.mubr.bf16.mxu0 0
  %4450 = vmatmul.mubr.bf16.gmra.mxu0 %v4357
  %v4451 = vpop.f32.mrf.mxu0
  %v4452 = vadd.f32 %v4144, %v4451
  %v4453 = vpop.f32.mrf.mxu0
  %v4454 = vpop.f32.mrf.mxu0
  %v4455 = vadd.f32 %v4147, %v4454
  %v4456 = vpop.f32.mrf.mxu0
  %4457 = vmatprep.mubr.bf16.mxu0 0
  %4458 = vmatmul.mubr.bf16.gmra.mxu0 %v4360
  %v4459 = vpop.f32.mrf.mxu0
  %v4460 = vadd.f32 %v4152, %v4459
  %v4461 = vpop.f32.mrf.mxu0
  %v4462 = vpop.f32.mrf.mxu0
  %v4463 = vadd.f32 %v4155, %v4462
  %v4464 = vpop.f32.mrf.mxu0
  %4465 = vmatprep.mubr.bf16.mxu0 0
  %4466 = vmatmul.mubr.bf16.gmra.mxu0 %v4363
  %v4467 = vpop.f32.mrf.mxu0
  %v4468 = vadd.f32 %v4160, %v4467
  %v4469 = vpop.f32.mrf.mxu0
  %v4470 = vpop.f32.mrf.mxu0
  %v4471 = vadd.f32 %v4163, %v4470
  %v4472 = vpop.f32.mrf.mxu0
  %4473 = vmatprep.mubr.bf16.mxu0 0
  %4474 = vmatmul.mubr.bf16.gmra.mxu0 %v4366
  %v4475 = vpop.f32.mrf.mxu0
  %v4476 = vadd.f32 %v4168, %v4475
  %v4477 = vpop.f32.mrf.mxu0
  %v4478 = vpop.f32.mrf.mxu0
  %v4479 = vadd.f32 %v4171, %v4478
  %v4480 = vpop.f32.mrf.mxu0
  %4481 = vmatprep.mubr.bf16.mxu0 0
  %4482 = vmatmul.mubr.bf16.gmra.mxu0 %v4369
  %v4483 = vpop.f32.mrf.mxu0
  %v4484 = vadd.f32 %v4176, %v4483
  %v4485 = vpop.f32.mrf.mxu0
  %v4486 = vpop.f32.mrf.mxu0
  %v4487 = vadd.f32 %v4179, %v4486
  %v4488 = vpop.f32.mrf.mxu0
  %4489 = vmatprep.mubr.bf16.mxu0 0
  %4490 = vmatmul.mubr.bf16.gmra.mxu0 %v4372
  %v4491 = vpop.f32.mrf.mxu0
  %v4492 = vadd.f32 %v4184, %v4491
  %v4493 = vpop.f32.mrf.mxu0
  %v4494 = vpop.f32.mrf.mxu0
  %v4495 = vadd.f32 %v4187, %v4494
  %v4496 = vpop.f32.mrf.mxu0
  %4497 = vmatprep.mubr.bf16.mxu0 0
  %4498 = vmatmul.mubr.bf16.gmra.mxu0 %v4375
  %v4499 = vpop.f32.mrf.mxu0
  %v4500 = vadd.f32 %v4192, %v4499
  %v4501 = vpop.f32.mrf.mxu0
  %v4502 = vpop.f32.mrf.mxu0
  %v4503 = vadd.f32 %v4195, %v4502
  %v4504 = vpop.f32.mrf.mxu0
  %4505 = vdwg.mxu0
  %v4506 = vld [vmem:[#allocation3 + $0x8] sm:$0xf]
  %v4507 = vld [vmem:[#allocation3 + $0xc] sm:$0xf]
  %v4508 = vld [vmem:[#allocation3 + $0x10] sm:$0xf]
  %v4509 = vld [vmem:[#allocation3 + $0x14] sm:$0xf]
  %v4510 = vld [vmem:[#allocation3 + $0x18] sm:$0xf]
  %v4511 = vld [vmem:[#allocation3 + $0x1c] sm:$0xf]
  %v4512 = vld [vmem:[#allocation3 + $0x20] sm:$0xf]
  %v4513 = vld [vmem:[#allocation3 + $0x24] sm:$0xf]
  %v4514 = vld [vmem:[#allocation3 + $0x28] sm:$0xf]
  %v4515 = vld [vmem:[#allocation3 + $0x2c] sm:$0xf]
  %v4516 = vld [vmem:[#allocation3 + $0x30] sm:$0xf]
  %v4517 = vld [vmem:[#allocation3 + $0x34] sm:$0xf]
  %v4518 = vld [vmem:[#allocation3 + $0x38] sm:$0xf]
  %v4519 = vld [vmem:[#allocation3 + $0x3c] sm:$0xf]
  %v4520 = vld [vmem:[#allocation3 + $0x40] sm:$0xf]
  %v4521 = vld [vmem:[#allocation3 + $0x44] sm:$0xf]
  %v4522 = vld [vmem:[#allocation3 + $0x48] sm:$0xf]
  %v4523 = vld [vmem:[#allocation3 + $0x4c] sm:$0xf]
  %v4524 = vld [vmem:[#allocation3 + $0x50] sm:$0xf]
  %v4525 = vld [vmem:[#allocation3 + $0x54] sm:$0xf]
  %v4526 = vld [vmem:[#allocation3 + $0x58] sm:$0xf]
  %v4527 = vld [vmem:[#allocation3 + $0x5c] sm:$0xf]
  %v4528 = vld [vmem:[#allocation3 + $0x60] sm:$0xf]
  %v4529 = vld [vmem:[#allocation3 + $0x64] sm:$0xf]
  %v4530 = vld [vmem:[#allocation3 + $0x68] sm:$0x1]
  %s4531 = scalar_lea.vmem %s3, 32
  %v4532 = vld [vmem:[%s4531] sm:$0xf]
  %v4533 = vld [vmem:[%s4531 + $0x4] sm:$0xf]
  %v4534 = vld [vmem:[%s4531 + $0x8] sm:$0xf]
  %v4535 = vld [vmem:[%s4531 + $0xc] sm:$0xf]
  %v4561 = vunpack.c.l.b16 %v4506
  %v4562 = vunpack.c.l.b16 %v4507
  %v4563 = vunpack.c.l.b16 %v4508
  %v4564 = vunpack.c.l.b16 %v4509
  %v4565 = vunpack.c.l.b16 %v4510
  %v4566 = vunpack.c.l.b16 %v4511
  %v4567 = vunpack.c.l.b16 %v4512
  %v4568 = vunpack.c.l.b16 %v4513
  %v4569 = vunpack.c.l.b16 %v4514
  %v4570 = vunpack.c.l.b16 %v4515
  %v4571 = vunpack.c.l.b16 %v4516
  %v4572 = vunpack.c.l.b16 %v4517
  %v4573 = vunpack.c.l.b16 %v4518
  %v4574 = vunpack.c.l.b16 %v4519
  %v4575 = vunpack.c.l.b16 %v4520
  %v4576 = vunpack.c.l.b16 %v4521
  %v4577 = vunpack.c.l.b16 %v4522
  %v4578 = vunpack.c.l.b16 %v4523
  %v4579 = vunpack.c.l.b16 %v4524
  %v4580 = vunpack.c.l.b16 %v4525
  %v4581 = vunpack.c.l.b16 %v4526
  %v4582 = vunpack.c.l.b16 %v4527
  %v4583 = vunpack.c.l.b16 %v4528
  %v4584 = vunpack.c.l.b16 %v4529
  %v4585 = vunpack.c.l.b16 %v4530
  %v4586 = vpack.c.b16 %v4562, %v4561
  %v4587 = vpack.c.b16 %v4564, %v4563
  %v4588 = vpack.c.b16 %v4566, %v4565
  %v4589 = vpack.c.b16 %v4568, %v4567
  %v4590 = vpack.c.b16 %v4570, %v4569
  %v4591 = vpack.c.b16 %v4572, %v4571
  %v4592 = vpack.c.b16 %v4574, %v4573
  %v4593 = vpack.c.b16 %v4576, %v4575
  %v4594 = vpack.c.b16 %v4578, %v4577
  %v4595 = vpack.c.b16 %v4580, %v4579
  %v4596 = vpack.c.b16 %v4582, %v4581
  %v4597 = vpack.c.b16 %v4584, %v4583
  %v4598 = vpack.c.b16 %v4585, %v4585
  %v4600 = vshrl.u32 %v4586, 16
  %v4602 = vshll.u32 %v4586, 16
  %v4604 = vrot.slane %v4602, 1
  %v4605 = vor.u32 %v4600, %v4604
  %v4607 = vshll.u32 %v4587, 16
  %v4609 = vrot.slane %v4607, 1
  %v4610 = vsel %vm1129, %v4605, %v4609
  %v4611 = vshrl.u32 %v4587, 16
  %v4613 = vor.u32 %v4611, %v4609
  %v4615 = vshll.u32 %v4588, 16
  %v4617 = vrot.slane %v4615, 1
  %v4618 = vsel %vm1129, %v4613, %v4617
  %v4619 = vshrl.u32 %v4588, 16
  %v4621 = vor.u32 %v4619, %v4617
  %v4623 = vshll.u32 %v4589, 16
  %v4625 = vrot.slane %v4623, 1
  %v4626 = vsel %vm1129, %v4621, %v4625
  %v4627 = vshrl.u32 %v4589, 16
  %v4629 = vor.u32 %v4627, %v4625
  %v4631 = vshll.u32 %v4590, 16
  %v4633 = vrot.slane %v4631, 1
  %v4634 = vsel %vm1129, %v4629, %v4633
  %v4635 = vshrl.u32 %v4590, 16
  %v4637 = vor.u32 %v4635, %v4633
  %v4639 = vshll.u32 %v4591, 16
  %v4641 = vrot.slane %v4639, 1
  %v4642 = vsel %vm1129, %v4637, %v4641
  %v4643 = vshrl.u32 %v4591, 16
  %v4645 = vor.u32 %v4643, %v4641
  %v4647 = vshll.u32 %v4592, 16
  %v4649 = vrot.slane %v4647, 1
  %v4650 = vsel %vm1129, %v4645, %v4649
  %v4651 = vshrl.u32 %v4592, 16
  %v4653 = vor.u32 %v4651, %v4649
  %v4655 = vshll.u32 %v4593, 16
  %v4657 = vrot.slane %v4655, 1
  %v4658 = vsel %vm1129, %v4653, %v4657
  %v4659 = vshrl.u32 %v4593, 16
  %v4661 = vor.u32 %v4659, %v4657
  %v4663 = vshll.u32 %v4594, 16
  %v4665 = vrot.slane %v4663, 1
  %v4666 = vsel %vm1129, %v4661, %v4665
  %v4667 = vshrl.u32 %v4594, 16
  %v4669 = vor.u32 %v4667, %v4665
  %v4671 = vshll.u32 %v4595, 16
  %v4673 = vrot.slane %v4671, 1
  %v4674 = vsel %vm1129, %v4669, %v4673
  %v4675 = vshrl.u32 %v4595, 16
  %v4677 = vor.u32 %v4675, %v4673
  %v4679 = vshll.u32 %v4596, 16
  %v4681 = vrot.slane %v4679, 1
  %v4682 = vsel %vm1129, %v4677, %v4681
  %v4683 = vshrl.u32 %v4596, 16
  %v4685 = vor.u32 %v4683, %v4681
  %v4687 = vshll.u32 %v4597, 16
  %v4689 = vrot.slane %v4687, 1
  %v4690 = vsel %vm1129, %v4685, %v4689
  %v4691 = vshrl.u32 %v4597, 16
  %v4693 = vor.u32 %v4691, %v4689
  %v4695 = vshll.u32 %v4598, 16
  %v4697 = vrot.slane %v4695, 1
  %v4698 = vsel %vm1129, %v4693, %v4697
  %v4703 = vunpack.c.l.b16 %v4532
  %v4704 = vunpack.c.l.b16 %v4533
  %v4705 = vunpack.c.l.b16 %v4534
  %v4706 = vunpack.c.l.b16 %v4535
  %v4707 = vpack.c.b16 %v4704, %v4703
  %v4708 = vpack.c.b16 %v4706, %v4705
  %v4712 = vsel %vm4032, %v4610, 0
  %v4715 = vsel %vm4032, %v4618, 0
  %v4718 = vsel %vm4032, %v4626, 0
  %v4721 = vsel %vm4032, %v4634, 0
  %v4724 = vsel %vm4032, %v4642, 0
  %v4727 = vsel %vm4032, %v4650, 0
  %v4730 = vsel %vm4032, %v4658, 0
  %v4733 = vsel %vm4032, %v4666, 0
  %v4736 = vsel %vm4032, %v4674, 0
  %v4739 = vsel %vm4032, %v4682, 0
  %v4742 = vsel %vm4032, %v4690, 0
  %v4745 = vsel %vm4032, %v4698, 0
  %4747 = vmatprep.subr.bf16.mxu0 0
  %4748 = vmatpush1.bf16.msra.mxu0 0
  %4749 = vmatprep.subr.bf16.mxu0 0
  %4750 = vmatpush1.bf16.msra.mxu0 0
  %4751 = vmatprep.subr.bf16.mxu0 0
  %4752 = vmatpush1.bf16.msra.mxu0 0
  %4753 = vmatprep.subr.bf16.mxu0 0
  %4754 = vmatpush1.bf16.msra.mxu0 0
  %4755 = vmatprep.subr.bf16.mxu0 0
  %4756 = vmatpush1.bf16.msra.mxu0 0
  %4757 = vmatprep.subr.bf16.mxu0 0
  %4758 = vmatpush1.bf16.msra.mxu0 0
  %4759 = vmatprep.subr.bf16.mxu0 0
  %4760 = vmatpush1.bf16.msra.mxu0 %v4708
  %4761 = vmatprep.subr.bf16.mxu0 0
  %4762 = vmatpush1.bf16.msra.mxu0 %v4707
  %4763 = vmatprep.subr.bf16.mxu0 0
  %4764 = vmatpush2.bf16.msra.mxu0 0
  %4765 = vmatprep.subr.bf16.mxu0 0
  %4766 = vmatpush2.bf16.msra.mxu0 0
  %4767 = vmatprep.subr.bf16.mxu0 0
  %4768 = vmatpush2.bf16.msra.mxu0 0
  %4769 = vmatprep.subr.bf16.mxu0 0
  %4770 = vmatpush2.bf16.msra.mxu0 0
  %4771 = vmatprep.subr.bf16.mxu0 0
  %4772 = vmatpush2.bf16.msra.mxu0 0
  %4773 = vmatprep.subr.bf16.mxu0 0
  %4774 = vmatpush2.bf16.msra.mxu0 0
  %4775 = vmatprep.subr.bf16.mxu0 0
  %4776 = vmatpush2.bf16.msra.mxu0 0
  %4777 = vmatprep.subr.bf16.mxu0 0
  %4778 = vmatpush2.bf16.msra.mxu0 0
  %4779 = vmatprep.mubr.bf16.mxu0 0
  %4780 = vmatmul.mubr.bf16.gmra.mxu0 %v4712
  %v4781 = vpop.f32.mrf.mxu0
  %v4782 = vadd.f32 0.0, %v4781
  %v4783 = vpop.f32.mrf.mxu0
  %v4784 = vpop.f32.mrf.mxu0
  %v4785 = vadd.f32 0.0, %v4784
  %v4786 = vpop.f32.mrf.mxu0
  %4787 = vmatprep.mubr.bf16.mxu0 0
  %4788 = vmatmul.mubr.bf16.gmra.mxu0 %v4715
  %v4789 = vpop.f32.mrf.mxu0
  %v4790 = vadd.f32 0.0, %v4789
  %v4791 = vpop.f32.mrf.mxu0
  %v4792 = vpop.f32.mrf.mxu0
  %v4793 = vadd.f32 0.0, %v4792
  %v4794 = vpop.f32.mrf.mxu0
  %4795 = vmatprep.mubr.bf16.mxu0 0
  %4796 = vmatmul.mubr.bf16.gmra.mxu0 %v4718
  %v4797 = vpop.f32.mrf.mxu0
  %v4798 = vadd.f32 0.0, %v4797
  %v4799 = vpop.f32.mrf.mxu0
  %v4800 = vpop.f32.mrf.mxu0
  %v4801 = vadd.f32 0.0, %v4800
  %v4802 = vpop.f32.mrf.mxu0
  %4803 = vmatprep.mubr.bf16.mxu0 0
  %4804 = vmatmul.mubr.bf16.gmra.mxu0 %v4721
  %v4805 = vpop.f32.mrf.mxu0
  %v4806 = vadd.f32 0.0, %v4805
  %v4807 = vpop.f32.mrf.mxu0
  %v4808 = vpop.f32.mrf.mxu0
  %v4809 = vadd.f32 0.0, %v4808
  %v4810 = vpop.f32.mrf.mxu0
  %4811 = vmatprep.mubr.bf16.mxu0 0
  %4812 = vmatmul.mubr.bf16.gmra.mxu0 %v4724
  %v4813 = vpop.f32.mrf.mxu0
  %v4814 = vadd.f32 0.0, %v4813
  %v4815 = vpop.f32.mrf.mxu0
  %v4816 = vpop.f32.mrf.mxu0
  %v4817 = vadd.f32 0.0, %v4816
  %v4818 = vpop.f32.mrf.mxu0
  %4819 = vmatprep.mubr.bf16.mxu0 0
  %4820 = vmatmul.mubr.bf16.gmra.mxu0 %v4727
  %v4821 = vpop.f32.mrf.mxu0
  %v4822 = vadd.f32 0.0, %v4821
  %v4823 = vpop.f32.mrf.mxu0
  %v4824 = vpop.f32.mrf.mxu0
  %v4825 = vadd.f32 0.0, %v4824
  %v4826 = vpop.f32.mrf.mxu0
  %4827 = vmatprep.mubr.bf16.mxu0 0
  %4828 = vmatmul.mubr.bf16.gmra.mxu0 %v4730
  %v4829 = vpop.f32.mrf.mxu0
  %v4830 = vadd.f32 0.0, %v4829
  %v4831 = vpop.f32.mrf.mxu0
  %v4832 = vpop.f32.mrf.mxu0
  %v4833 = vadd.f32 0.0, %v4832
  %v4834 = vpop.f32.mrf.mxu0
  %4835 = vmatprep.mubr.bf16.mxu0 0
  %4836 = vmatmul.mubr.bf16.gmra.mxu0 %v4733
  %v4837 = vpop.f32.mrf.mxu0
  %v4838 = vadd.f32 0.0, %v4837
  %v4839 = vpop.f32.mrf.mxu0
  %v4840 = vpop.f32.mrf.mxu0
  %v4841 = vadd.f32 0.0, %v4840
  %v4842 = vpop.f32.mrf.mxu0
  %4843 = vmatprep.mubr.bf16.mxu0 0
  %4844 = vmatmul.mubr.bf16.gmra.mxu0 %v4736
  %v4845 = vpop.f32.mrf.mxu0
  %v4846 = vadd.f32 0.0, %v4845
  %v4847 = vpop.f32.mrf.mxu0
  %v4848 = vpop.f32.mrf.mxu0
  %v4849 = vadd.f32 0.0, %v4848
  %v4850 = vpop.f32.mrf.mxu0
  %4851 = vmatprep.mubr.bf16.mxu0 0
  %4852 = vmatmul.mubr.bf16.gmra.mxu0 %v4739
  %v4853 = vpop.f32.mrf.mxu0
  %v4854 = vadd.f32 0.0, %v4853
  %v4855 = vpop.f32.mrf.mxu0
  %v4856 = vpop.f32.mrf.mxu0
  %v4857 = vadd.f32 0.0, %v4856
  %v4858 = vpop.f32.mrf.mxu0
  %4859 = vmatprep.mubr.bf16.mxu0 0
  %4860 = vmatmul.mubr.bf16.gmra.mxu0 %v4742
  %v4861 = vpop.f32.mrf.mxu0
  %v4862 = vadd.f32 0.0, %v4861
  %v4863 = vpop.f32.mrf.mxu0
  %v4864 = vpop.f32.mrf.mxu0
  %v4865 = vadd.f32 0.0, %v4864
  %v4866 = vpop.f32.mrf.mxu0
  %4867 = vmatprep.mubr.bf16.mxu0 0
  %4868 = vmatmul.mubr.bf16.gmra.mxu0 %v4745
  %v4869 = vpop.f32.mrf.mxu0
  %v4870 = vadd.f32 0.0, %v4869
  %v4871 = vpop.f32.mrf.mxu0
  %v4872 = vpop.f32.mrf.mxu0
  %v4873 = vadd.f32 0.0, %v4872
  %v4874 = vpop.f32.mrf.mxu0
  %4875 = vdwg.mxu0
  %v4876 = vadd.f32 %v4412, %v4782
  %v4877 = vadd.f32 %v4415, %v4785
  %v4878 = vadd.f32 %v4420, %v4790
  %v4879 = vadd.f32 %v4423, %v4793
  %v4880 = vadd.f32 %v4428, %v4798
  %v4881 = vadd.f32 %v4431, %v4801
  %v4882 = vadd.f32 %v4436, %v4806
  %v4883 = vadd.f32 %v4439, %v4809
  %v4884 = vadd.f32 %v4444, %v4814
  %v4885 = vadd.f32 %v4447, %v4817
  %v4886 = vadd.f32 %v4452, %v4822
  %v4887 = vadd.f32 %v4455, %v4825
  %v4888 = vadd.f32 %v4460, %v4830
  %v4889 = vadd.f32 %v4463, %v4833
  %v4890 = vadd.f32 %v4468, %v4838
  %v4891 = vadd.f32 %v4471, %v4841
  %v4892 = vadd.f32 %v4476, %v4846
  %v4893 = vadd.f32 %v4479, %v4849
  %v4894 = vadd.f32 %v4484, %v4854
  %v4895 = vadd.f32 %v4487, %v4857
  %v4896 = vadd.f32 %v4492, %v4862
  %v4897 = vadd.f32 %v4495, %v4865
  %v4898 = vadd.f32 %v4500, %v4870
  %v4899 = vadd.f32 %v4503, %v4873
  %v4900 = vld [vmem:[#allocation3 + $0xc] sm:$0x8]
  %v4901 = vld [vmem:[#allocation3 + $0x10] sm:$0xf]
  %v4902 = vld [vmem:[#allocation3 + $0x14] sm:$0xf]
  %v4903 = vld [vmem:[#allocation3 + $0x18] sm:$0xf]
  %v4904 = vld [vmem:[#allocation3 + $0x1c] sm:$0xf]
  %v4905 = vld [vmem:[#allocation3 + $0x20] sm:$0xf]
  %v4906 = vld [vmem:[#allocation3 + $0x24] sm:$0xf]
  %v4907 = vld [vmem:[#allocation3 + $0x28] sm:$0xf]
  %v4908 = vld [vmem:[#allocation3 + $0x2c] sm:$0xf]
  %v4909 = vld [vmem:[#allocation3 + $0x30] sm:$0xf]
  %v4910 = vld [vmem:[#allocation3 + $0x34] sm:$0xf]
  %v4911 = vld [vmem:[#allocation3 + $0x38] sm:$0xf]
  %v4912 = vld [vmem:[#allocation3 + $0x3c] sm:$0xf]
  %v4913 = vld [vmem:[#allocation3 + $0x40] sm:$0xf]
  %v4914 = vld [vmem:[#allocation3 + $0x44] sm:$0xf]
  %v4915 = vld [vmem:[#allocation3 + $0x48] sm:$0xf]
  %v4916 = vld [vmem:[#allocation3 + $0x4c] sm:$0xf]
  %v4917 = vld [vmem:[#allocation3 + $0x50] sm:$0xf]
  %v4918 = vld [vmem:[#allocation3 + $0x54] sm:$0xf]
  %v4919 = vld [vmem:[#allocation3 + $0x58] sm:$0xf]
  %v4920 = vld [vmem:[#allocation3 + $0x5c] sm:$0xf]
  %v4921 = vld [vmem:[#allocation3 + $0x60] sm:$0xf]
  %v4922 = vld [vmem:[#allocation3 + $0x64] sm:$0xf]
  %v4923 = vld [vmem:[#allocation3 + $0x68] sm:$0xf]
  %v4924 = vld [vmem:[#allocation3 + $0x6c] sm:$0xf]
  %s4925 = scalar_lea.vmem %s3, 48
  %v4926 = vld [vmem:[%s4925] sm:$0xf]
  %v4927 = vld [vmem:[%s4925 + $0x4] sm:$0xf]
  %v4928 = vld [vmem:[%s4925 + $0x8] sm:$0xf]
  %v4929 = vld [vmem:[%s4925 + $0xc] sm:$0xf]
  %v4955 = vunpack.c.l.b16 %v4900
  %v4956 = vunpack.c.l.b16 %v4901
  %v4957 = vunpack.c.l.b16 %v4902
  %v4958 = vunpack.c.l.b16 %v4903
  %v4959 = vunpack.c.l.b16 %v4904
  %v4960 = vunpack.c.l.b16 %v4905
  %v4961 = vunpack.c.l.b16 %v4906
  %v4962 = vunpack.c.l.b16 %v4907
  %v4963 = vunpack.c.l.b16 %v4908
  %v4964 = vunpack.c.l.b16 %v4909
  %v4965 = vunpack.c.l.b16 %v4910
  %v4966 = vunpack.c.l.b16 %v4911
  %v4967 = vunpack.c.l.b16 %v4912
  %v4968 = vunpack.c.l.b16 %v4913
  %v4969 = vunpack.c.l.b16 %v4914
  %v4970 = vunpack.c.l.b16 %v4915
  %v4971 = vunpack.c.l.b16 %v4916
  %v4972 = vunpack.c.l.b16 %v4917
  %v4973 = vunpack.c.l.b16 %v4918
  %v4974 = vunpack.c.l.b16 %v4919
  %v4975 = vunpack.c.l.b16 %v4920
  %v4976 = vunpack.c.l.b16 %v4921
  %v4977 = vunpack.c.l.b16 %v4922
  %v4978 = vunpack.c.l.b16 %v4923
  %v4979 = vunpack.c.l.b16 %v4924
  %v4980 = vpack.c.b16 %v4956, %v4955
  %v4981 = vpack.c.b16 %v4958, %v4957
  %v4982 = vpack.c.b16 %v4960, %v4959
  %v4983 = vpack.c.b16 %v4962, %v4961
  %v4984 = vpack.c.b16 %v4964, %v4963
  %v4985 = vpack.c.b16 %v4966, %v4965
  %v4986 = vpack.c.b16 %v4968, %v4967
  %v4987 = vpack.c.b16 %v4970, %v4969
  %v4988 = vpack.c.b16 %v4972, %v4971
  %v4989 = vpack.c.b16 %v4974, %v4973
  %v4990 = vpack.c.b16 %v4976, %v4975
  %v4991 = vpack.c.b16 %v4978, %v4977
  %v4992 = vpack.c.b16 %v4979, %v4979
  %v4994 = vshrl.u32 %v4980, 16
  %v4996 = vrot.slane %v4994, 3
  %v4997 = vshll.u32 %v4980, 16
  %v4999 = vrot.slane %v4997, 4
  %v5000 = vor.u32 %v4996, %v4999
  %v5002 = vshrl.u32 %v4981, 16
  %v5004 = vrot.slane %v5002, 3
  %v5005 = vshll.u32 %v4981, 16
  %v5007 = vrot.slane %v5005, 4
  %v5008 = vor.u32 %v5004, %v5007
  %v5009 = vsel %vm750, %v5000, %v5008
  %v5011 = vshrl.u32 %v4982, 16
  %v5013 = vrot.slane %v5011, 3
  %v5014 = vshll.u32 %v4982, 16
  %v5016 = vrot.slane %v5014, 4
  %v5017 = vor.u32 %v5013, %v5016
  %v5018 = vsel %vm750, %v5008, %v5017
  %v5020 = vshrl.u32 %v4983, 16
  %v5022 = vrot.slane %v5020, 3
  %v5023 = vshll.u32 %v4983, 16
  %v5025 = vrot.slane %v5023, 4
  %v5026 = vor.u32 %v5022, %v5025
  %v5027 = vsel %vm750, %v5017, %v5026
  %v5029 = vshrl.u32 %v4984, 16
  %v5031 = vrot.slane %v5029, 3
  %v5032 = vshll.u32 %v4984, 16
  %v5034 = vrot.slane %v5032, 4
  %v5035 = vor.u32 %v5031, %v5034
  %v5036 = vsel %vm750, %v5026, %v5035
  %v5038 = vshrl.u32 %v4985, 16
  %v5040 = vrot.slane %v5038, 3
  %v5041 = vshll.u32 %v4985, 16
  %v5043 = vrot.slane %v5041, 4
  %v5044 = vor.u32 %v5040, %v5043
  %v5045 = vsel %vm750, %v5035, %v5044
  %v5047 = vshrl.u32 %v4986, 16
  %v5049 = vrot.slane %v5047, 3
  %v5050 = vshll.u32 %v4986, 16
  %v5052 = vrot.slane %v5050, 4
  %v5053 = vor.u32 %v5049, %v5052
  %v5054 = vsel %vm750, %v5044, %v5053
  %v5056 = vshrl.u32 %v4987, 16
  %v5058 = vrot.slane %v5056, 3
  %v5059 = vshll.u32 %v4987, 16
  %v5061 = vrot.slane %v5059, 4
  %v5062 = vor.u32 %v5058, %v5061
  %v5063 = vsel %vm750, %v5053, %v5062
  %v5065 = vshrl.u32 %v4988, 16
  %v5067 = vrot.slane %v5065, 3
  %v5068 = vshll.u32 %v4988, 16
  %v5070 = vrot.slane %v5068, 4
  %v5071 = vor.u32 %v5067, %v5070
  %v5072 = vsel %vm750, %v5062, %v5071
  %v5074 = vshrl.u32 %v4989, 16
  %v5076 = vrot.slane %v5074, 3
  %v5077 = vshll.u32 %v4989, 16
  %v5079 = vrot.slane %v5077, 4
  %v5080 = vor.u32 %v5076, %v5079
  %v5081 = vsel %vm750, %v5071, %v5080
  %v5083 = vshrl.u32 %v4990, 16
  %v5085 = vrot.slane %v5083, 3
  %v5086 = vshll.u32 %v4990, 16
  %v5088 = vrot.slane %v5086, 4
  %v5089 = vor.u32 %v5085, %v5088
  %v5090 = vsel %vm750, %v5080, %v5089
  %v5092 = vshrl.u32 %v4991, 16
  %v5094 = vrot.slane %v5092, 3
  %v5095 = vshll.u32 %v4991, 16
  %v5097 = vrot.slane %v5095, 4
  %v5098 = vor.u32 %v5094, %v5097
  %v5099 = vsel %vm750, %v5089, %v5098
  %v5101 = vshrl.u32 %v4992, 16
  %v5103 = vrot.slane %v5101, 3
  %v5104 = vshll.u32 %v4992, 16
  %v5106 = vrot.slane %v5104, 4
  %v5107 = vor.u32 %v5103, %v5106
  %v5108 = vsel %vm750, %v5098, %v5107
  %v5113 = vunpack.c.l.b16 %v4926
  %v5114 = vunpack.c.l.b16 %v4927
  %v5115 = vunpack.c.l.b16 %v4928
  %v5116 = vunpack.c.l.b16 %v4929
  %v5117 = vpack.c.b16 %v5114, %v5113
  %v5118 = vpack.c.b16 %v5116, %v5115
  %v5122 = vsel %vm4032, %v5009, 0
  %v5125 = vsel %vm4032, %v5018, 0
  %v5128 = vsel %vm4032, %v5027, 0
  %v5131 = vsel %vm4032, %v5036, 0
  %v5134 = vsel %vm4032, %v5045, 0
  %v5137 = vsel %vm4032, %v5054, 0
  %v5140 = vsel %vm4032, %v5063, 0
  %v5143 = vsel %vm4032, %v5072, 0
  %v5146 = vsel %vm4032, %v5081, 0
  %v5149 = vsel %vm4032, %v5090, 0
  %v5152 = vsel %vm4032, %v5099, 0
  %v5155 = vsel %vm4032, %v5108, 0
  %5157 = vmatprep.subr.bf16.mxu0 0
  %5158 = vmatpush1.bf16.msra.mxu0 0
  %5159 = vmatprep.subr.bf16.mxu0 0
  %5160 = vmatpush1.bf16.msra.mxu0 0
  %5161 = vmatprep.subr.bf16.mxu0 0
  %5162 = vmatpush1.bf16.msra.mxu0 0
  %5163 = vmatprep.subr.bf16.mxu0 0
  %5164 = vmatpush1.bf16.msra.mxu0 0
  %5165 = vmatprep.subr.bf16.mxu0 0
  %5166 = vmatpush1.bf16.msra.mxu0 0
  %5167 = vmatprep.subr.bf16.mxu0 0
  %5168 = vmatpush1.bf16.msra.mxu0 0
  %5169 = vmatprep.subr.bf16.mxu0 0
  %5170 = vmatpush1.bf16.msra.mxu0 %v5118
  %5171 = vmatprep.subr.bf16.mxu0 0
  %5172 = vmatpush1.bf16.msra.mxu0 %v5117
  %5173 = vmatprep.subr.bf16.mxu0 0
  %5174 = vmatpush2.bf16.msra.mxu0 0
  %5175 = vmatprep.subr.bf16.mxu0 0
  %5176 = vmatpush2.bf16.msra.mxu0 0
  %5177 = vmatprep.subr.bf16.mxu0 0
  %5178 = vmatpush2.bf16.msra.mxu0 0
  %5179 = vmatprep.subr.bf16.mxu0 0
  %5180 = vmatpush2.bf16.msra.mxu0 0
  %5181 = vmatprep.subr.bf16.mxu0 0
  %5182 = vmatpush2.bf16.msra.mxu0 0
  %5183 = vmatprep.subr.bf16.mxu0 0
  %5184 = vmatpush2.bf16.msra.mxu0 0
  %5185 = vmatprep.subr.bf16.mxu0 0
  %5186 = vmatpush2.bf16.msra.mxu0 0
  %5187 = vmatprep.subr.bf16.mxu0 0
  %5188 = vmatpush2.bf16.msra.mxu0 0
  %5189 = vmatprep.mubr.bf16.mxu0 0
  %5190 = vmatmul.mubr.bf16.gmra.mxu0 %v5122
  %v5191 = vpop.f32.mrf.mxu0
  %v5192 = vadd.f32 0.0, %v5191
  %v5193 = vpop.f32.mrf.mxu0
  %v5194 = vpop.f32.mrf.mxu0
  %v5195 = vadd.f32 0.0, %v5194
  %v5196 = vpop.f32.mrf.mxu0
  %5197 = vmatprep.mubr.bf16.mxu0 0
  %5198 = vmatmul.mubr.bf16.gmra.mxu0 %v5125
  %v5199 = vpop.f32.mrf.mxu0
  %v5200 = vadd.f32 0.0, %v5199
  %v5201 = vpop.f32.mrf.mxu0
  %v5202 = vpop.f32.mrf.mxu0
  %v5203 = vadd.f32 0.0, %v5202
  %v5204 = vpop.f32.mrf.mxu0
  %5205 = vmatprep.mubr.bf16.mxu0 0
  %5206 = vmatmul.mubr.bf16.gmra.mxu0 %v5128
  %v5207 = vpop.f32.mrf.mxu0
  %v5208 = vadd.f32 0.0, %v5207
  %v5209 = vpop.f32.mrf.mxu0
  %v5210 = vpop.f32.mrf.mxu0
  %v5211 = vadd.f32 0.0, %v5210
  %v5212 = vpop.f32.mrf.mxu0
  %5213 = vmatprep.mubr.bf16.mxu0 0
  %5214 = vmatmul.mubr.bf16.gmra.mxu0 %v5131
  %v5215 = vpop.f32.mrf.mxu0
  %v5216 = vadd.f32 0.0, %v5215
  %v5217 = vpop.f32.mrf.mxu0
  %v5218 = vpop.f32.mrf.mxu0
  %v5219 = vadd.f32 0.0, %v5218
  %v5220 = vpop.f32.mrf.mxu0
  %5221 = vmatprep.mubr.bf16.mxu0 0
  %5222 = vmatmul.mubr.bf16.gmra.mxu0 %v5134
  %v5223 = vpop.f32.mrf.mxu0
  %v5224 = vadd.f32 0.0, %v5223
  %v5225 = vpop.f32.mrf.mxu0
  %v5226 = vpop.f32.mrf.mxu0
  %v5227 = vadd.f32 0.0, %v5226
  %v5228 = vpop.f32.mrf.mxu0
  %5229 = vmatprep.mubr.bf16.mxu0 0
  %5230 = vmatmul.mubr.bf16.gmra.mxu0 %v5137
  %v5231 = vpop.f32.mrf.mxu0
  %v5232 = vadd.f32 0.0, %v5231
  %v5233 = vpop.f32.mrf.mxu0
  %v5234 = vpop.f32.mrf.mxu0
  %v5235 = vadd.f32 0.0, %v5234
  %v5236 = vpop.f32.mrf.mxu0
  %5237 = vmatprep.mubr.bf16.mxu0 0
  %5238 = vmatmul.mubr.bf16.gmra.mxu0 %v5140
  %v5239 = vpop.f32.mrf.mxu0
  %v5240 = vadd.f32 0.0, %v5239
  %v5241 = vpop.f32.mrf.mxu0
  %v5242 = vpop.f32.mrf.mxu0
  %v5243 = vadd.f32 0.0, %v5242
  %v5244 = vpop.f32.mrf.mxu0
  %5245 = vmatprep.mubr.bf16.mxu0 0
  %5246 = vmatmul.mubr.bf16.gmra.mxu0 %v5143
  %v5247 = vpop.f32.mrf.mxu0
  %v5248 = vadd.f32 0.0, %v5247
  %v5249 = vpop.f32.mrf.mxu0
  %v5250 = vpop.f32.mrf.mxu0
  %v5251 = vadd.f32 0.0, %v5250
  %v5252 = vpop.f32.mrf.mxu0
  %5253 = vmatprep.mubr.bf16.mxu0 0
  %5254 = vmatmul.mubr.bf16.gmra.mxu0 %v5146
  %v5255 = vpop.f32.mrf.mxu0
  %v5256 = vadd.f32 0.0, %v5255
  %v5257 = vpop.f32.mrf.mxu0
  %v5258 = vpop.f32.mrf.mxu0
  %v5259 = vadd.f32 0.0, %v5258
  %v5260 = vpop.f32.mrf.mxu0
  %5261 = vmatprep.mubr.bf16.mxu0 0
  %5262 = vmatmul.mubr.bf16.gmra.mxu0 %v5149
  %v5263 = vpop.f32.mrf.mxu0
  %v5264 = vadd.f32 0.0, %v5263
  %v5265 = vpop.f32.mrf.mxu0
  %v5266 = vpop.f32.mrf.mxu0
  %v5267 = vadd.f32 0.0, %v5266
  %v5268 = vpop.f32.mrf.mxu0
  %5269 = vmatprep.mubr.bf16.mxu0 0
  %5270 = vmatmul.mubr.bf16.gmra.mxu0 %v5152
  %v5271 = vpop.f32.mrf.mxu0
  %v5272 = vadd.f32 0.0, %v5271
  %v5273 = vpop.f32.mrf.mxu0
  %v5274 = vpop.f32.mrf.mxu0
  %v5275 = vadd.f32 0.0, %v5274
  %v5276 = vpop.f32.mrf.mxu0
  %5277 = vmatprep.mubr.bf16.mxu0 0
  %5278 = vmatmul.mubr.bf16.gmra.mxu0 %v5155
  %v5279 = vpop.f32.mrf.mxu0
  %v5280 = vadd.f32 0.0, %v5279
  %v5281 = vpop.f32.mrf.mxu0
  %v5282 = vpop.f32.mrf.mxu0
  %v5283 = vadd.f32 0.0, %v5282
  %v5284 = vpop.f32.mrf.mxu0
  %5285 = vdwg.mxu0
  %v5286 = vadd.f32 %v4876, %v5192
  %v5287 = vadd.f32 %v4877, %v5195
  %v5288 = vadd.f32 %v4878, %v5200
  %v5289 = vadd.f32 %v4879, %v5203
  %v5290 = vadd.f32 %v4880, %v5208
  %v5291 = vadd.f32 %v4881, %v5211
  %v5292 = vadd.f32 %v4882, %v5216
  %v5293 = vadd.f32 %v4883, %v5219
  %v5294 = vadd.f32 %v4884, %v5224
  %v5295 = vadd.f32 %v4885, %v5227
  %v5296 = vadd.f32 %v4886, %v5232
  %v5297 = vadd.f32 %v4887, %v5235
  %v5298 = vadd.f32 %v4888, %v5240
  %v5299 = vadd.f32 %v4889, %v5243
  %v5300 = vadd.f32 %v4890, %v5248
  %v5301 = vadd.f32 %v4891, %v5251
  %v5302 = vadd.f32 %v4892, %v5256
  %v5303 = vadd.f32 %v4893, %v5259
  %v5304 = vadd.f32 %v4894, %v5264
  %v5305 = vadd.f32 %v4895, %v5267
  %v5306 = vadd.f32 %v4896, %v5272
  %v5307 = vadd.f32 %v4897, %v5275
  %v5308 = vadd.f32 %v4898, %v5280
  %v5309 = vadd.f32 %v4899, %v5283
  %s5310 = scalar_lea.vmem %s3, 64
  %v5311 = vld [vmem:[%s5310] sm:$0xf]
  %v5312 = vld [vmem:[%s5310 + $0x4] sm:$0xf]
  %v5313 = vld [vmem:[%s5310 + $0x8] sm:$0xf]
  %v5314 = vld [vmem:[%s5310 + $0xc] sm:$0xf]
  %v5315 = vpack.c.b16 %v4957, %v4956
  %v5316 = vpack.c.b16 %v4959, %v4958
  %v5317 = vpack.c.b16 %v4961, %v4960
  %v5318 = vpack.c.b16 %v4963, %v4962
  %v5319 = vpack.c.b16 %v4965, %v4964
  %v5320 = vpack.c.b16 %v4967, %v4966
  %v5321 = vpack.c.b16 %v4969, %v4968
  %v5322 = vpack.c.b16 %v4971, %v4970
  %v5323 = vpack.c.b16 %v4973, %v4972
  %v5324 = vpack.c.b16 %v4975, %v4974
  %v5325 = vpack.c.b16 %v4977, %v4976
  %v5326 = vpack.c.b16 %v4979, %v4978
  %v5331 = vunpack.c.l.b16 %v5311
  %v5332 = vunpack.c.l.b16 %v5312
  %v5333 = vunpack.c.l.b16 %v5313
  %v5334 = vunpack.c.l.b16 %v5314
  %v5335 = vpack.c.b16 %v5332, %v5331
  %v5336 = vpack.c.b16 %v5334, %v5333
  %v5340 = vsel %vm4032, %v5315, 0
  %v5343 = vsel %vm4032, %v5316, 0
  %v5346 = vsel %vm4032, %v5317, 0
  %v5349 = vsel %vm4032, %v5318, 0
  %v5352 = vsel %vm4032, %v5319, 0
  %v5355 = vsel %vm4032, %v5320, 0
  %v5358 = vsel %vm4032, %v5321, 0
  %v5361 = vsel %vm4032, %v5322, 0
  %v5364 = vsel %vm4032, %v5323, 0
  %v5367 = vsel %vm4032, %v5324, 0
  %v5370 = vsel %vm4032, %v5325, 0
  %v5373 = vsel %vm4032, %v5326, 0
  %5375 = vmatprep.subr.bf16.mxu0 0
  %5376 = vmatpush1.bf16.msra.mxu0 0
  %5377 = vmatprep.subr.bf16.mxu0 0
  %5378 = vmatpush1.bf16.msra.mxu0 0
  %5379 = vmatprep.subr.bf16.mxu0 0
  %5380 = vmatpush1.bf16.msra.mxu0 0
  %5381 = vmatprep.subr.bf16.mxu0 0
  %5382 = vmatpush1.bf16.msra.mxu0 0
  %5383 = vmatprep.subr.bf16.mxu0 0
  %5384 = vmatpush1.bf16.msra.mxu0 0
  %5385 = vmatprep.subr.bf16.mxu0 0
  %5386 = vmatpush1.bf16.msra.mxu0 0
  %5387 = vmatprep.subr.bf16.mxu0 0
  %5388 = vmatpush1.bf16.msra.mxu0 %v5336
  %5389 = vmatprep.subr.bf16.mxu0 0
  %5390 = vmatpush1.bf16.msra.mxu0 %v5335
  %5391 = vmatprep.subr.bf16.mxu0 0
  %5392 = vmatpush2.bf16.msra.mxu0 0
  %5393 = vmatprep.subr.bf16.mxu0 0
  %5394 = vmatpush2.bf16.msra.mxu0 0
  %5395 = vmatprep.subr.bf16.mxu0 0
  %5396 = vmatpush2.bf16.msra.mxu0 0
  %5397 = vmatprep.subr.bf16.mxu0 0
  %5398 = vmatpush2.bf16.msra.mxu0 0
  %5399 = vmatprep.subr.bf16.mxu0 0
  %5400 = vmatpush2.bf16.msra.mxu0 0
  %5401 = vmatprep.subr.bf16.mxu0 0
  %5402 = vmatpush2.bf16.msra.mxu0 0
  %5403 = vmatprep.subr.bf16.mxu0 0
  %5404 = vmatpush2.bf16.msra.mxu0 0
  %5405 = vmatprep.subr.bf16.mxu0 0
  %5406 = vmatpush2.bf16.msra.mxu0 0
  %5407 = vmatprep.mubr.bf16.mxu0 0
  %5408 = vmatmul.mubr.bf16.gmra.mxu0 %v5340
  %v5409 = vpop.f32.mrf.mxu0
  %v5410 = vadd.f32 0.0, %v5409
  %v5411 = vpop.f32.mrf.mxu0
  %v5412 = vpop.f32.mrf.mxu0
  %v5413 = vadd.f32 0.0, %v5412
  %v5414 = vpop.f32.mrf.mxu0
  %5415 = vmatprep.mubr.bf16.mxu0 0
  %5416 = vmatmul.mubr.bf16.gmra.mxu0 %v5343
  %v5417 = vpop.f32.mrf.mxu0
  %v5418 = vadd.f32 0.0, %v5417
  %v5419 = vpop.f32.mrf.mxu0
  %v5420 = vpop.f32.mrf.mxu0
  %v5421 = vadd.f32 0.0, %v5420
  %v5422 = vpop.f32.mrf.mxu0
  %5423 = vmatprep.mubr.bf16.mxu0 0
  %5424 = vmatmul.mubr.bf16.gmra.mxu0 %v5346
  %v5425 = vpop.f32.mrf.mxu0
  %v5426 = vadd.f32 0.0, %v5425
  %v5427 = vpop.f32.mrf.mxu0
  %v5428 = vpop.f32.mrf.mxu0
  %v5429 = vadd.f32 0.0, %v5428
  %v5430 = vpop.f32.mrf.mxu0
  %5431 = vmatprep.mubr.bf16.mxu0 0
  %5432 = vmatmul.mubr.bf16.gmra.mxu0 %v5349
  %v5433 = vpop.f32.mrf.mxu0
  %v5434 = vadd.f32 0.0, %v5433
  %v5435 = vpop.f32.mrf.mxu0
  %v5436 = vpop.f32.mrf.mxu0
  %v5437 = vadd.f32 0.0, %v5436
  %v5438 = vpop.f32.mrf.mxu0
  %5439 = vmatprep.mubr.bf16.mxu0 0
  %5440 = vmatmul.mubr.bf16.gmra.mxu0 %v5352
  %v5441 = vpop.f32.mrf.mxu0
  %v5442 = vadd.f32 0.0, %v5441
  %v5443 = vpop.f32.mrf.mxu0
  %v5444 = vpop.f32.mrf.mxu0
  %v5445 = vadd.f32 0.0, %v5444
  %v5446 = vpop.f32.mrf.mxu0
  %5447 = vmatprep.mubr.bf16.mxu0 0
  %5448 = vmatmul.mubr.bf16.gmra.mxu0 %v5355
  %v5449 = vpop.f32.mrf.mxu0
  %v5450 = vadd.f32 0.0, %v5449
  %v5451 = vpop.f32.mrf.mxu0
  %v5452 = vpop.f32.mrf.mxu0
  %v5453 = vadd.f32 0.0, %v5452
  %v5454 = vpop.f32.mrf.mxu0
  %5455 = vmatprep.mubr.bf16.mxu0 0
  %5456 = vmatmul.mubr.bf16.gmra.mxu0 %v5358
  %v5457 = vpop.f32.mrf.mxu0
  %v5458 = vadd.f32 0.0, %v5457
  %v5459 = vpop.f32.mrf.mxu0
  %v5460 = vpop.f32.mrf.mxu0
  %v5461 = vadd.f32 0.0, %v5460
  %v5462 = vpop.f32.mrf.mxu0
  %5463 = vmatprep.mubr.bf16.mxu0 0
  %5464 = vmatmul.mubr.bf16.gmra.mxu0 %v5361
  %v5465 = vpop.f32.mrf.mxu0
  %v5466 = vadd.f32 0.0, %v5465
  %v5467 = vpop.f32.mrf.mxu0
  %v5468 = vpop.f32.mrf.mxu0
  %v5469 = vadd.f32 0.0, %v5468
  %v5470 = vpop.f32.mrf.mxu0
  %5471 = vmatprep.mubr.bf16.mxu0 0
  %5472 = vmatmul.mubr.bf16.gmra.mxu0 %v5364
  %v5473 = vpop.f32.mrf.mxu0
  %v5474 = vadd.f32 0.0, %v5473
  %v5475 = vpop.f32.mrf.mxu0
  %v5476 = vpop.f32.mrf.mxu0
  %v5477 = vadd.f32 0.0, %v5476
  %v5478 = vpop.f32.mrf.mxu0
  %5479 = vmatprep.mubr.bf16.mxu0 0
  %5480 = vmatmul.mubr.bf16.gmra.mxu0 %v5367
  %v5481 = vpop.f32.mrf.mxu0
  %v5482 = vadd.f32 0.0, %v5481
  %v5483 = vpop.f32.mrf.mxu0
  %v5484 = vpop.f32.mrf.mxu0
  %v5485 = vadd.f32 0.0, %v5484
  %v5486 = vpop.f32.mrf.mxu0
  %5487 = vmatprep.mubr.bf16.mxu0 0
  %5488 = vmatmul.mubr.bf16.gmra.mxu0 %v5370
  %v5489 = vpop.f32.mrf.mxu0
  %v5490 = vadd.f32 0.0, %v5489
  %v5491 = vpop.f32.mrf.mxu0
  %v5492 = vpop.f32.mrf.mxu0
  %v5493 = vadd.f32 0.0, %v5492
  %v5494 = vpop.f32.mrf.mxu0
  %5495 = vmatprep.mubr.bf16.mxu0 0
  %5496 = vmatmul.mubr.bf16.gmra.mxu0 %v5373
  %v5497 = vpop.f32.mrf.mxu0
  %v5498 = vadd.f32 0.0, %v5497
  %v5499 = vpop.f32.mrf.mxu0
  %v5500 = vpop.f32.mrf.mxu0
  %v5501 = vadd.f32 0.0, %v5500
  %v5502 = vpop.f32.mrf.mxu0
  %5503 = vdwg.mxu0
  %v5504 = vadd.f32 %v5286, %v5410
  %v5505 = vadd.f32 %v5287, %v5413
  %v5506 = vadd.f32 %v5288, %v5418
  %v5507 = vadd.f32 %v5289, %v5421
  %v5508 = vadd.f32 %v5290, %v5426
  %v5509 = vadd.f32 %v5291, %v5429
  %v5510 = vadd.f32 %v5292, %v5434
  %v5511 = vadd.f32 %v5293, %v5437
  %v5512 = vadd.f32 %v5294, %v5442
  %v5513 = vadd.f32 %v5295, %v5445
  %v5514 = vadd.f32 %v5296, %v5450
  %v5515 = vadd.f32 %v5297, %v5453
  %v5516 = vadd.f32 %v5298, %v5458
  %v5517 = vadd.f32 %v5299, %v5461
  %v5518 = vadd.f32 %v5300, %v5466
  %v5519 = vadd.f32 %v5301, %v5469
  %v5520 = vadd.f32 %v5302, %v5474
  %v5521 = vadd.f32 %v5303, %v5477
  %v5522 = vadd.f32 %v5304, %v5482
  %v5523 = vadd.f32 %v5305, %v5485
  %v5524 = vadd.f32 %v5306, %v5490
  %v5525 = vadd.f32 %v5307, %v5493
  %v5526 = vadd.f32 %v5308, %v5498
  %v5527 = vadd.f32 %v5309, %v5501
  %v5528 = vld [vmem:[#allocation3 + $0x10] sm:$0xf]
  %v5529 = vld [vmem:[#allocation3 + $0x14] sm:$0xf]
  %v5530 = vld [vmem:[#allocation3 + $0x18] sm:$0xf]
  %v5531 = vld [vmem:[#allocation3 + $0x1c] sm:$0xf]
  %v5532 = vld [vmem:[#allocation3 + $0x20] sm:$0xf]
  %v5533 = vld [vmem:[#allocation3 + $0x24] sm:$0xf]
  %v5534 = vld [vmem:[#allocation3 + $0x28] sm:$0xf]
  %v5535 = vld [vmem:[#allocation3 + $0x2c] sm:$0xf]
  %v5536 = vld [vmem:[#allocation3 + $0x30] sm:$0xf]
  %v5537 = vld [vmem:[#allocation3 + $0x34] sm:$0xf]
  %v5538 = vld [vmem:[#allocation3 + $0x38] sm:$0xf]
  %v5539 = vld [vmem:[#allocation3 + $0x3c] sm:$0xf]
  %v5540 = vld [vmem:[#allocation3 + $0x40] sm:$0xf]
  %v5541 = vld [vmem:[#allocation3 + $0x44] sm:$0xf]
  %v5542 = vld [vmem:[#allocation3 + $0x48] sm:$0xf]
  %v5543 = vld [vmem:[#allocation3 + $0x4c] sm:$0xf]
  %v5544 = vld [vmem:[#allocation3 + $0x50] sm:$0xf]
  %v5545 = vld [vmem:[#allocation3 + $0x54] sm:$0xf]
  %v5546 = vld [vmem:[#allocation3 + $0x58] sm:$0xf]
  %v5547 = vld [vmem:[#allocation3 + $0x5c] sm:$0xf]
  %v5548 = vld [vmem:[#allocation3 + $0x60] sm:$0xf]
  %v5549 = vld [vmem:[#allocation3 + $0x64] sm:$0xf]
  %v5550 = vld [vmem:[#allocation3 + $0x68] sm:$0xf]
  %v5551 = vld [vmem:[#allocation3 + $0x6c] sm:$0xf]
  %v5552 = vld [vmem:[#allocation3 + $0x70] sm:$0x1]
  %s5553 = scalar_lea.vmem %s3, 80
  %v5554 = vld [vmem:[%s5553] sm:$0xf]
  %v5555 = vld [vmem:[%s5553 + $0x4] sm:$0xf]
  %v5556 = vld [vmem:[%s5553 + $0x8] sm:$0xf]
  %v5557 = vld [vmem:[%s5553 + $0xc] sm:$0xf]
  %v5583 = vunpack.c.l.b16 %v5528
  %v5584 = vunpack.c.l.b16 %v5529
  %v5585 = vunpack.c.l.b16 %v5530
  %v5586 = vunpack.c.l.b16 %v5531
  %v5587 = vunpack.c.l.b16 %v5532
  %v5588 = vunpack.c.l.b16 %v5533
  %v5589 = vunpack.c.l.b16 %v5534
  %v5590 = vunpack.c.l.b16 %v5535
  %v5591 = vunpack.c.l.b16 %v5536
  %v5592 = vunpack.c.l.b16 %v5537
  %v5593 = vunpack.c.l.b16 %v5538
  %v5594 = vunpack.c.l.b16 %v5539
  %v5595 = vunpack.c.l.b16 %v5540
  %v5596 = vunpack.c.l.b16 %v5541
  %v5597 = vunpack.c.l.b16 %v5542
  %v5598 = vunpack.c.l.b16 %v5543
  %v5599 = vunpack.c.l.b16 %v5544
  %v5600 = vunpack.c.l.b16 %v5545
  %v5601 = vunpack.c.l.b16 %v5546
  %v5602 = vunpack.c.l.b16 %v5547
  %v5603 = vunpack.c.l.b16 %v5548
  %v5604 = vunpack.c.l.b16 %v5549
  %v5605 = vunpack.c.l.b16 %v5550
  %v5606 = vunpack.c.l.b16 %v5551
  %v5607 = vunpack.c.l.b16 %v5552
  %v5608 = vpack.c.b16 %v5584, %v5583
  %v5609 = vpack.c.b16 %v5586, %v5585
  %v5610 = vpack.c.b16 %v5588, %v5587
  %v5611 = vpack.c.b16 %v5590, %v5589
  %v5612 = vpack.c.b16 %v5592, %v5591
  %v5613 = vpack.c.b16 %v5594, %v5593
  %v5614 = vpack.c.b16 %v5596, %v5595
  %v5615 = vpack.c.b16 %v5598, %v5597
  %v5616 = vpack.c.b16 %v5600, %v5599
  %v5617 = vpack.c.b16 %v5602, %v5601
  %v5618 = vpack.c.b16 %v5604, %v5603
  %v5619 = vpack.c.b16 %v5606, %v5605
  %v5620 = vpack.c.b16 %v5607, %v5607
  %v5622 = vshrl.u32 %v5608, 16
  %v5624 = vshll.u32 %v5608, 16
  %v5626 = vrot.slane %v5624, 1
  %v5627 = vor.u32 %v5622, %v5626
  %v5629 = vshll.u32 %v5609, 16
  %v5631 = vrot.slane %v5629, 1
  %v5632 = vsel %vm1129, %v5627, %v5631
  %v5633 = vshrl.u32 %v5609, 16
  %v5635 = vor.u32 %v5633, %v5631
  %v5637 = vshll.u32 %v5610, 16
  %v5639 = vrot.slane %v5637, 1
  %v5640 = vsel %vm1129, %v5635, %v5639
  %v5641 = vshrl.u32 %v5610, 16
  %v5643 = vor.u32 %v5641, %v5639
  %v5645 = vshll.u32 %v5611, 16
  %v5647 = vrot.slane %v5645, 1
  %v5648 = vsel %vm1129, %v5643, %v5647
  %v5649 = vshrl.u32 %v5611, 16
  %v5651 = vor.u32 %v5649, %v5647
  %v5653 = vshll.u32 %v5612, 16
  %v5655 = vrot.slane %v5653, 1
  %v5656 = vsel %vm1129, %v5651, %v5655
  %v5657 = vshrl.u32 %v5612, 16
  %v5659 = vor.u32 %v5657, %v5655
  %v5661 = vshll.u32 %v5613, 16
  %v5663 = vrot.slane %v5661, 1
  %v5664 = vsel %vm1129, %v5659, %v5663
  %v5665 = vshrl.u32 %v5613, 16
  %v5667 = vor.u32 %v5665, %v5663
  %v5669 = vshll.u32 %v5614, 16
  %v5671 = vrot.slane %v5669, 1
  %v5672 = vsel %vm1129, %v5667, %v5671
  %v5673 = vshrl.u32 %v5614, 16
  %v5675 = vor.u32 %v5673, %v5671
  %v5677 = vshll.u32 %v5615, 16
  %v5679 = vrot.slane %v5677, 1
  %v5680 = vsel %vm1129, %v5675, %v5679
  %v5681 = vshrl.u32 %v5615, 16
  %v5683 = vor.u32 %v5681, %v5679
  %v5685 = vshll.u32 %v5616, 16
  %v5687 = vrot.slane %v5685, 1
  %v5688 = vsel %vm1129, %v5683, %v5687
  %v5689 = vshrl.u32 %v5616, 16
  %v5691 = vor.u32 %v5689, %v5687
  %v5693 = vshll.u32 %v5617, 16
  %v5695 = vrot.slane %v5693, 1
  %v5696 = vsel %vm1129, %v5691, %v5695
  %v5697 = vshrl.u32 %v5617, 16
  %v5699 = vor.u32 %v5697, %v5695
  %v5701 = vshll.u32 %v5618, 16
  %v5703 = vrot.slane %v5701, 1
  %v5704 = vsel %vm1129, %v5699, %v5703
  %v5705 = vshrl.u32 %v5618, 16
  %v5707 = vor.u32 %v5705, %v5703
  %v5709 = vshll.u32 %v5619, 16
  %v5711 = vrot.slane %v5709, 1
  %v5712 = vsel %vm1129, %v5707, %v5711
  %v5713 = vshrl.u32 %v5619, 16
  %v5715 = vor.u32 %v5713, %v5711
  %v5717 = vshll.u32 %v5620, 16
  %v5719 = vrot.slane %v5717, 1
  %v5720 = vsel %vm1129, %v5715, %v5719
  %v5725 = vunpack.c.l.b16 %v5554
  %v5726 = vunpack.c.l.b16 %v5555
  %v5727 = vunpack.c.l.b16 %v5556
  %v5728 = vunpack.c.l.b16 %v5557
  %v5729 = vpack.c.b16 %v5726, %v5725
  %v5730 = vpack.c.b16 %v5728, %v5727
  %v5734 = vsel %vm4032, %v5632, 0
  %v5737 = vsel %vm4032, %v5640, 0
  %v5740 = vsel %vm4032, %v5648, 0
  %v5743 = vsel %vm4032, %v5656, 0
  %v5746 = vsel %vm4032, %v5664, 0
  %v5749 = vsel %vm4032, %v5672, 0
  %v5752 = vsel %vm4032, %v5680, 0
  %v5755 = vsel %vm4032, %v5688, 0
  %v5758 = vsel %vm4032, %v5696, 0
  %v5761 = vsel %vm4032, %v5704, 0
  %v5764 = vsel %vm4032, %v5712, 0
  %v5767 = vsel %vm4032, %v5720, 0
  %5769 = vmatprep.subr.bf16.mxu0 0
  %5770 = vmatpush1.bf16.msra.mxu0 0
  %5771 = vmatprep.subr.bf16.mxu0 0
  %5772 = vmatpush1.bf16.msra.mxu0 0
  %5773 = vmatprep.subr.bf16.mxu0 0
  %5774 = vmatpush1.bf16.msra.mxu0 0
  %5775 = vmatprep.subr.bf16.mxu0 0
  %5776 = vmatpush1.bf16.msra.mxu0 0
  %5777 = vmatprep.subr.bf16.mxu0 0
  %5778 = vmatpush1.bf16.msra.mxu0 0
  %5779 = vmatprep.subr.bf16.mxu0 0
  %5780 = vmatpush1.bf16.msra.mxu0 0
  %5781 = vmatprep.subr.bf16.mxu0 0
  %5782 = vmatpush1.bf16.msra.mxu0 %v5730
  %5783 = vmatprep.subr.bf16.mxu0 0
  %5784 = vmatpush1.bf16.msra.mxu0 %v5729
  %5785 = vmatprep.subr.bf16.mxu0 0
  %5786 = vmatpush2.bf16.msra.mxu0 0
  %5787 = vmatprep.subr.bf16.mxu0 0
  %5788 = vmatpush2.bf16.msra.mxu0 0
  %5789 = vmatprep.subr.bf16.mxu0 0
  %5790 = vmatpush2.bf16.msra.mxu0 0
  %5791 = vmatprep.subr.bf16.mxu0 0
  %5792 = vmatpush2.bf16.msra.mxu0 0
  %5793 = vmatprep.subr.bf16.mxu0 0
  %5794 = vmatpush2.bf16.msra.mxu0 0
  %5795 = vmatprep.subr.bf16.mxu0 0
  %5796 = vmatpush2.bf16.msra.mxu0 0
  %5797 = vmatprep.subr.bf16.mxu0 0
  %5798 = vmatpush2.bf16.msra.mxu0 0
  %5799 = vmatprep.subr.bf16.mxu0 0
  %5800 = vmatpush2.bf16.msra.mxu0 0
  %5801 = vmatprep.mubr.bf16.mxu0 0
  %5802 = vmatmul.mubr.bf16.gmra.mxu0 %v5734
  %v5803 = vpop.f32.mrf.mxu0
  %v5804 = vadd.f32 0.0, %v5803
  %v5805 = vpop.f32.mrf.mxu0
  %v5806 = vpop.f32.mrf.mxu0
  %v5807 = vadd.f32 0.0, %v5806
  %v5808 = vpop.f32.mrf.mxu0
  %5809 = vmatprep.mubr.bf16.mxu0 0
  %5810 = vmatmul.mubr.bf16.gmra.mxu0 %v5737
  %v5811 = vpop.f32.mrf.mxu0
  %v5812 = vadd.f32 0.0, %v5811
  %v5813 = vpop.f32.mrf.mxu0
  %v5814 = vpop.f32.mrf.mxu0
  %v5815 = vadd.f32 0.0, %v5814
  %v5816 = vpop.f32.mrf.mxu0
  %5817 = vmatprep.mubr.bf16.mxu0 0
  %5818 = vmatmul.mubr.bf16.gmra.mxu0 %v5740
  %v5819 = vpop.f32.mrf.mxu0
  %v5820 = vadd.f32 0.0, %v5819
  %v5821 = vpop.f32.mrf.mxu0
  %v5822 = vpop.f32.mrf.mxu0
  %v5823 = vadd.f32 0.0, %v5822
  %v5824 = vpop.f32.mrf.mxu0
  %5825 = vmatprep.mubr.bf16.mxu0 0
  %5826 = vmatmul.mubr.bf16.gmra.mxu0 %v5743
  %v5827 = vpop.f32.mrf.mxu0
  %v5828 = vadd.f32 0.0, %v5827
  %v5829 = vpop.f32.mrf.mxu0
  %v5830 = vpop.f32.mrf.mxu0
  %v5831 = vadd.f32 0.0, %v5830
  %v5832 = vpop.f32.mrf.mxu0
  %5833 = vmatprep.mubr.bf16.mxu0 0
  %5834 = vmatmul.mubr.bf16.gmra.mxu0 %v5746
  %v5835 = vpop.f32.mrf.mxu0
  %v5836 = vadd.f32 0.0, %v5835
  %v5837 = vpop.f32.mrf.mxu0
  %v5838 = vpop.f32.mrf.mxu0
  %v5839 = vadd.f32 0.0, %v5838
  %v5840 = vpop.f32.mrf.mxu0
  %5841 = vmatprep.mubr.bf16.mxu0 0
  %5842 = vmatmul.mubr.bf16.gmra.mxu0 %v5749
  %v5843 = vpop.f32.mrf.mxu0
  %v5844 = vadd.f32 0.0, %v5843
  %v5845 = vpop.f32.mrf.mxu0
  %v5846 = vpop.f32.mrf.mxu0
  %v5847 = vadd.f32 0.0, %v5846
  %v5848 = vpop.f32.mrf.mxu0
  %5849 = vmatprep.mubr.bf16.mxu0 0
  %5850 = vmatmul.mubr.bf16.gmra.mxu0 %v5752
  %v5851 = vpop.f32.mrf.mxu0
  %v5852 = vadd.f32 0.0, %v5851
  %v5853 = vpop.f32.mrf.mxu0
  %v5854 = vpop.f32.mrf.mxu0
  %v5855 = vadd.f32 0.0, %v5854
  %v5856 = vpop.f32.mrf.mxu0
  %5857 = vmatprep.mubr.bf16.mxu0 0
  %5858 = vmatmul.mubr.bf16.gmra.mxu0 %v5755
  %v5859 = vpop.f32.mrf.mxu0
  %v5860 = vadd.f32 0.0, %v5859
  %v5861 = vpop.f32.mrf.mxu0
  %v5862 = vpop.f32.mrf.mxu0
  %v5863 = vadd.f32 0.0, %v5862
  %v5864 = vpop.f32.mrf.mxu0
  %5865 = vmatprep.mubr.bf16.mxu0 0
  %5866 = vmatmul.mubr.bf16.gmra.mxu0 %v5758
  %v5867 = vpop.f32.mrf.mxu0
  %v5868 = vadd.f32 0.0, %v5867
  %v5869 = vpop.f32.mrf.mxu0
  %v5870 = vpop.f32.mrf.mxu0
  %v5871 = vadd.f32 0.0, %v5870
  %v5872 = vpop.f32.mrf.mxu0
  %5873 = vmatprep.mubr.bf16.mxu0 0
  %5874 = vmatmul.mubr.bf16.gmra.mxu0 %v5761
  %v5875 = vpop.f32.mrf.mxu0
  %v5876 = vadd.f32 0.0, %v5875
  %v5877 = vpop.f32.mrf.mxu0
  %v5878 = vpop.f32.mrf.mxu0
  %v5879 = vadd.f32 0.0, %v5878
  %v5880 = vpop.f32.mrf.mxu0
  %5881 = vmatprep.mubr.bf16.mxu0 0
  %5882 = vmatmul.mubr.bf16.gmra.mxu0 %v5764
  %v5883 = vpop.f32.mrf.mxu0
  %v5884 = vadd.f32 0.0, %v5883
  %v5885 = vpop.f32.mrf.mxu0
  %v5886 = vpop.f32.mrf.mxu0
  %v5887 = vadd.f32 0.0, %v5886
  %v5888 = vpop.f32.mrf.mxu0
  %5889 = vmatprep.mubr.bf16.mxu0 0
  %5890 = vmatmul.mubr.bf16.gmra.mxu0 %v5767
  %v5891 = vpop.f32.mrf.mxu0
  %v5892 = vadd.f32 0.0, %v5891
  %v5893 = vpop.f32.mrf.mxu0
  %v5894 = vpop.f32.mrf.mxu0
  %v5895 = vadd.f32 0.0, %v5894
  %v5896 = vpop.f32.mrf.mxu0
  %5897 = vdwg.mxu0
  %v5898 = vadd.f32 %v5504, %v5804
  %v5899 = vadd.f32 %v5505, %v5807
  %v5900 = vadd.f32 %v5506, %v5812
  %v5901 = vadd.f32 %v5507, %v5815
  %v5902 = vadd.f32 %v5508, %v5820
  %v5903 = vadd.f32 %v5509, %v5823
  %v5904 = vadd.f32 %v5510, %v5828
  %v5905 = vadd.f32 %v5511, %v5831
  %v5906 = vadd.f32 %v5512, %v5836
  %v5907 = vadd.f32 %v5513, %v5839
  %v5908 = vadd.f32 %v5514, %v5844
  %v5909 = vadd.f32 %v5515, %v5847
  %v5910 = vadd.f32 %v5516, %v5852
  %v5911 = vadd.f32 %v5517, %v5855
  %v5912 = vadd.f32 %v5518, %v5860
  %v5913 = vadd.f32 %v5519, %v5863
  %v5914 = vadd.f32 %v5520, %v5868
  %v5915 = vadd.f32 %v5521, %v5871
  %v5916 = vadd.f32 %v5522, %v5876
  %v5917 = vadd.f32 %v5523, %v5879
  %v5918 = vadd.f32 %v5524, %v5884
  %v5919 = vadd.f32 %v5525, %v5887
  %v5920 = vadd.f32 %v5526, %v5892
  %v5921 = vadd.f32 %v5527, %v5895
  %v5922 = vld [vmem:[#allocation3 + $0x14] sm:$0x8]
  %v5923 = vld [vmem:[#allocation3 + $0x18] sm:$0xf]
  %v5924 = vld [vmem:[#allocation3 + $0x1c] sm:$0xf]
  %v5925 = vld [vmem:[#allocation3 + $0x20] sm:$0xf]
  %v5926 = vld [vmem:[#allocation3 + $0x24] sm:$0xf]
  %v5927 = vld [vmem:[#allocation3 + $0x28] sm:$0xf]
  %v5928 = vld [vmem:[#allocation3 + $0x2c] sm:$0xf]
  %v5929 = vld [vmem:[#allocation3 + $0x30] sm:$0xf]
  %v5930 = vld [vmem:[#allocation3 + $0x34] sm:$0xf]
  %v5931 = vld [vmem:[#allocation3 + $0x38] sm:$0xf]
  %v5932 = vld [vmem:[#allocation3 + $0x3c] sm:$0xf]
  %v5933 = vld [vmem:[#allocation3 + $0x40] sm:$0xf]
  %v5934 = vld [vmem:[#allocation3 + $0x44] sm:$0xf]
  %v5935 = vld [vmem:[#allocation3 + $0x48] sm:$0xf]
  %v5936 = vld [vmem:[#allocation3 + $0x4c] sm:$0xf]
  %v5937 = vld [vmem:[#allocation3 + $0x50] sm:$0xf]
  %v5938 = vld [vmem:[#allocation3 + $0x54] sm:$0xf]
  %v5939 = vld [vmem:[#allocation3 + $0x58] sm:$0xf]
  %v5940 = vld [vmem:[#allocation3 + $0x5c] sm:$0xf]
  %v5941 = vld [vmem:[#allocation3 + $0x60] sm:$0xf]
  %v5942 = vld [vmem:[#allocation3 + $0x64] sm:$0xf]
  %v5943 = vld [vmem:[#allocation3 + $0x68] sm:$0xf]
  %v5944 = vld [vmem:[#allocation3 + $0x6c] sm:$0xf]
  %v5945 = vld [vmem:[#allocation3 + $0x70] sm:$0xf]
  %v5946 = vld [vmem:[#allocation3 + $0x74] sm:$0xf]
  %s5947 = scalar_lea.vmem %s3, 96
  %v5948 = vld [vmem:[%s5947] sm:$0xf]
  %v5949 = vld [vmem:[%s5947 + $0x4] sm:$0xf]
  %v5950 = vld [vmem:[%s5947 + $0x8] sm:$0xf]
  %v5951 = vld [vmem:[%s5947 + $0xc] sm:$0xf]
  %v5977 = vunpack.c.l.b16 %v5922
  %v5978 = vunpack.c.l.b16 %v5923
  %v5979 = vunpack.c.l.b16 %v5924
  %v5980 = vunpack.c.l.b16 %v5925
  %v5981 = vunpack.c.l.b16 %v5926
  %v5982 = vunpack.c.l.b16 %v5927
  %v5983 = vunpack.c.l.b16 %v5928
  %v5984 = vunpack.c.l.b16 %v5929
  %v5985 = vunpack.c.l.b16 %v5930
  %v5986 = vunpack.c.l.b16 %v5931
  %v5987 = vunpack.c.l.b16 %v5932
  %v5988 = vunpack.c.l.b16 %v5933
  %v5989 = vunpack.c.l.b16 %v5934
  %v5990 = vunpack.c.l.b16 %v5935
  %v5991 = vunpack.c.l.b16 %v5936
  %v5992 = vunpack.c.l.b16 %v5937
  %v5993 = vunpack.c.l.b16 %v5938
  %v5994 = vunpack.c.l.b16 %v5939
  %v5995 = vunpack.c.l.b16 %v5940
  %v5996 = vunpack.c.l.b16 %v5941
  %v5997 = vunpack.c.l.b16 %v5942
  %v5998 = vunpack.c.l.b16 %v5943
  %v5999 = vunpack.c.l.b16 %v5944
  %v6000 = vunpack.c.l.b16 %v5945
  %v6001 = vunpack.c.l.b16 %v5946
  %v6002 = vpack.c.b16 %v5978, %v5977
  %v6003 = vpack.c.b16 %v5980, %v5979
  %v6004 = vpack.c.b16 %v5982, %v5981
  %v6005 = vpack.c.b16 %v5984, %v5983
  %v6006 = vpack.c.b16 %v5986, %v5985
  %v6007 = vpack.c.b16 %v5988, %v5987
  %v6008 = vpack.c.b16 %v5990, %v5989
  %v6009 = vpack.c.b16 %v5992, %v5991
  %v6010 = vpack.c.b16 %v5994, %v5993
  %v6011 = vpack.c.b16 %v5996, %v5995
  %v6012 = vpack.c.b16 %v5998, %v5997
  %v6013 = vpack.c.b16 %v6000, %v5999
  %v6014 = vpack.c.b16 %v6001, %v6001
  %v6016 = vshrl.u32 %v6002, 16
  %v6018 = vrot.slane %v6016, 3
  %v6019 = vshll.u32 %v6002, 16
  %v6021 = vrot.slane %v6019, 4
  %v6022 = vor.u32 %v6018, %v6021
  %v6024 = vshrl.u32 %v6003, 16
  %v6026 = vrot.slane %v6024, 3
  %v6027 = vshll.u32 %v6003, 16
  %v6029 = vrot.slane %v6027, 4
  %v6030 = vor.u32 %v6026, %v6029
  %v6031 = vsel %vm750, %v6022, %v6030
  %v6033 = vshrl.u32 %v6004, 16
  %v6035 = vrot.slane %v6033, 3
  %v6036 = vshll.u32 %v6004, 16
  %v6038 = vrot.slane %v6036, 4
  %v6039 = vor.u32 %v6035, %v6038
  %v6040 = vsel %vm750, %v6030, %v6039
  %v6042 = vshrl.u32 %v6005, 16
  %v6044 = vrot.slane %v6042, 3
  %v6045 = vshll.u32 %v6005, 16
  %v6047 = vrot.slane %v6045, 4
  %v6048 = vor.u32 %v6044, %v6047
  %v6049 = vsel %vm750, %v6039, %v6048
  %v6051 = vshrl.u32 %v6006, 16
  %v6053 = vrot.slane %v6051, 3
  %v6054 = vshll.u32 %v6006, 16
  %v6056 = vrot.slane %v6054, 4
  %v6057 = vor.u32 %v6053, %v6056
  %v6058 = vsel %vm750, %v6048, %v6057
  %v6060 = vshrl.u32 %v6007, 16
  %v6062 = vrot.slane %v6060, 3
  %v6063 = vshll.u32 %v6007, 16
  %v6065 = vrot.slane %v6063, 4
  %v6066 = vor.u32 %v6062, %v6065
  %v6067 = vsel %vm750, %v6057, %v6066
  %v6069 = vshrl.u32 %v6008, 16
  %v6071 = vrot.slane %v6069, 3
  %v6072 = vshll.u32 %v6008, 16
  %v6074 = vrot.slane %v6072, 4
  %v6075 = vor.u32 %v6071, %v6074
  %v6076 = vsel %vm750, %v6066, %v6075
  %v6078 = vshrl.u32 %v6009, 16
  %v6080 = vrot.slane %v6078, 3
  %v6081 = vshll.u32 %v6009, 16
  %v6083 = vrot.slane %v6081, 4
  %v6084 = vor.u32 %v6080, %v6083
  %v6085 = vsel %vm750, %v6075, %v6084
  %v6087 = vshrl.u32 %v6010, 16
  %v6089 = vrot.slane %v6087, 3
  %v6090 = vshll.u32 %v6010, 16
  %v6092 = vrot.slane %v6090, 4
  %v6093 = vor.u32 %v6089, %v6092
  %v6094 = vsel %vm750, %v6084, %v6093
  %v6096 = vshrl.u32 %v6011, 16
  %v6098 = vrot.slane %v6096, 3
  %v6099 = vshll.u32 %v6011, 16
  %v6101 = vrot.slane %v6099, 4
  %v6102 = vor.u32 %v6098, %v6101
  %v6103 = vsel %vm750, %v6093, %v6102
  %v6105 = vshrl.u32 %v6012, 16
  %v6107 = vrot.slane %v6105, 3
  %v6108 = vshll.u32 %v6012, 16
  %v6110 = vrot.slane %v6108, 4
  %v6111 = vor.u32 %v6107, %v6110
  %v6112 = vsel %vm750, %v6102, %v6111
  %v6114 = vshrl.u32 %v6013, 16
  %v6116 = vrot.slane %v6114, 3
  %v6117 = vshll.u32 %v6013, 16
  %v6119 = vrot.slane %v6117, 4
  %v6120 = vor.u32 %v6116, %v6119
  %v6121 = vsel %vm750, %v6111, %v6120
  %v6123 = vshrl.u32 %v6014, 16
  %v6125 = vrot.slane %v6123, 3
  %v6126 = vshll.u32 %v6014, 16
  %v6128 = vrot.slane %v6126, 4
  %v6129 = vor.u32 %v6125, %v6128
  %v6130 = vsel %vm750, %v6120, %v6129
  %v6135 = vunpack.c.l.b16 %v5948
  %v6136 = vunpack.c.l.b16 %v5949
  %v6137 = vunpack.c.l.b16 %v5950
  %v6138 = vunpack.c.l.b16 %v5951
  %v6139 = vpack.c.b16 %v6136, %v6135
  %v6140 = vpack.c.b16 %v6138, %v6137
  %v6144 = vsel %vm4032, %v6031, 0
  %v6147 = vsel %vm4032, %v6040, 0
  %v6150 = vsel %vm4032, %v6049, 0
  %v6153 = vsel %vm4032, %v6058, 0
  %v6156 = vsel %vm4032, %v6067, 0
  %v6159 = vsel %vm4032, %v6076, 0
  %v6162 = vsel %vm4032, %v6085, 0
  %v6165 = vsel %vm4032, %v6094, 0
  %v6168 = vsel %vm4032, %v6103, 0
  %v6171 = vsel %vm4032, %v6112, 0
  %v6174 = vsel %vm4032, %v6121, 0
  %v6177 = vsel %vm4032, %v6130, 0
  %6179 = vmatprep.subr.bf16.mxu0 0
  %6180 = vmatpush1.bf16.msra.mxu0 0
  %6181 = vmatprep.subr.bf16.mxu0 0
  %6182 = vmatpush1.bf16.msra.mxu0 0
  %6183 = vmatprep.subr.bf16.mxu0 0
  %6184 = vmatpush1.bf16.msra.mxu0 0
  %6185 = vmatprep.subr.bf16.mxu0 0
  %6186 = vmatpush1.bf16.msra.mxu0 0
  %6187 = vmatprep.subr.bf16.mxu0 0
  %6188 = vmatpush1.bf16.msra.mxu0 0
  %6189 = vmatprep.subr.bf16.mxu0 0
  %6190 = vmatpush1.bf16.msra.mxu0 0
  %6191 = vmatprep.subr.bf16.mxu0 0
  %6192 = vmatpush1.bf16.msra.mxu0 %v6140
  %6193 = vmatprep.subr.bf16.mxu0 0
  %6194 = vmatpush1.bf16.msra.mxu0 %v6139
  %6195 = vmatprep.subr.bf16.mxu0 0
  %6196 = vmatpush2.bf16.msra.mxu0 0
  %6197 = vmatprep.subr.bf16.mxu0 0
  %6198 = vmatpush2.bf16.msra.mxu0 0
  %6199 = vmatprep.subr.bf16.mxu0 0
  %6200 = vmatpush2.bf16.msra.mxu0 0
  %6201 = vmatprep.subr.bf16.mxu0 0
  %6202 = vmatpush2.bf16.msra.mxu0 0
  %6203 = vmatprep.subr.bf16.mxu0 0
  %6204 = vmatpush2.bf16.msra.mxu0 0
  %6205 = vmatprep.subr.bf16.mxu0 0
  %6206 = vmatpush2.bf16.msra.mxu0 0
  %6207 = vmatprep.subr.bf16.mxu0 0
  %6208 = vmatpush2.bf16.msra.mxu0 0
  %6209 = vmatprep.subr.bf16.mxu0 0
  %6210 = vmatpush2.bf16.msra.mxu0 0
  %6211 = vmatprep.mubr.bf16.mxu0 0
  %6212 = vmatmul.mubr.bf16.gmra.mxu0 %v6144
  %v6213 = vpop.f32.mrf.mxu0
  %v6214 = vadd.f32 0.0, %v6213
  %v6215 = vpop.f32.mrf.mxu0
  %v6216 = vpop.f32.mrf.mxu0
  %v6217 = vadd.f32 0.0, %v6216
  %v6218 = vpop.f32.mrf.mxu0
  %6219 = vmatprep.mubr.bf16.mxu0 0
  %6220 = vmatmul.mubr.bf16.gmra.mxu0 %v6147
  %v6221 = vpop.f32.mrf.mxu0
  %v6222 = vadd.f32 0.0, %v6221
  %v6223 = vpop.f32.mrf.mxu0
  %v6224 = vpop.f32.mrf.mxu0
  %v6225 = vadd.f32 0.0, %v6224
  %v6226 = vpop.f32.mrf.mxu0
  %6227 = vmatprep.mubr.bf16.mxu0 0
  %6228 = vmatmul.mubr.bf16.gmra.mxu0 %v6150
  %v6229 = vpop.f32.mrf.mxu0
  %v6230 = vadd.f32 0.0, %v6229
  %v6231 = vpop.f32.mrf.mxu0
  %v6232 = vpop.f32.mrf.mxu0
  %v6233 = vadd.f32 0.0, %v6232
  %v6234 = vpop.f32.mrf.mxu0
  %6235 = vmatprep.mubr.bf16.mxu0 0
  %6236 = vmatmul.mubr.bf16.gmra.mxu0 %v6153
  %v6237 = vpop.f32.mrf.mxu0
  %v6238 = vadd.f32 0.0, %v6237
  %v6239 = vpop.f32.mrf.mxu0
  %v6240 = vpop.f32.mrf.mxu0
  %v6241 = vadd.f32 0.0, %v6240
  %v6242 = vpop.f32.mrf.mxu0
  %6243 = vmatprep.mubr.bf16.mxu0 0
  %6244 = vmatmul.mubr.bf16.gmra.mxu0 %v6156
  %v6245 = vpop.f32.mrf.mxu0
  %v6246 = vadd.f32 0.0, %v6245
  %v6247 = vpop.f32.mrf.mxu0
  %v6248 = vpop.f32.mrf.mxu0
  %v6249 = vadd.f32 0.0, %v6248
  %v6250 = vpop.f32.mrf.mxu0
  %6251 = vmatprep.mubr.bf16.mxu0 0
  %6252 = vmatmul.mubr.bf16.gmra.mxu0 %v6159
  %v6253 = vpop.f32.mrf.mxu0
  %v6254 = vadd.f32 0.0, %v6253
  %v6255 = vpop.f32.mrf.mxu0
  %v6256 = vpop.f32.mrf.mxu0
  %v6257 = vadd.f32 0.0, %v6256
  %v6258 = vpop.f32.mrf.mxu0
  %6259 = vmatprep.mubr.bf16.mxu0 0
  %6260 = vmatmul.mubr.bf16.gmra.mxu0 %v6162
  %v6261 = vpop.f32.mrf.mxu0
  %v6262 = vadd.f32 0.0, %v6261
  %v6263 = vpop.f32.mrf.mxu0
  %v6264 = vpop.f32.mrf.mxu0
  %v6265 = vadd.f32 0.0, %v6264
  %v6266 = vpop.f32.mrf.mxu0
  %6267 = vmatprep.mubr.bf16.mxu0 0
  %6268 = vmatmul.mubr.bf16.gmra.mxu0 %v6165
  %v6269 = vpop.f32.mrf.mxu0
  %v6270 = vadd.f32 0.0, %v6269
  %v6271 = vpop.f32.mrf.mxu0
  %v6272 = vpop.f32.mrf.mxu0
  %v6273 = vadd.f32 0.0, %v6272
  %v6274 = vpop.f32.mrf.mxu0
  %6275 = vmatprep.mubr.bf16.mxu0 0
  %6276 = vmatmul.mubr.bf16.gmra.mxu0 %v6168
  %v6277 = vpop.f32.mrf.mxu0
  %v6278 = vadd.f32 0.0, %v6277
  %v6279 = vpop.f32.mrf.mxu0
  %v6280 = vpop.f32.mrf.mxu0
  %v6281 = vadd.f32 0.0, %v6280
  %v6282 = vpop.f32.mrf.mxu0
  %6283 = vmatprep.mubr.bf16.mxu0 0
  %6284 = vmatmul.mubr.bf16.gmra.mxu0 %v6171
  %v6285 = vpop.f32.mrf.mxu0
  %v6286 = vadd.f32 0.0, %v6285
  %v6287 = vpop.f32.mrf.mxu0
  %v6288 = vpop.f32.mrf.mxu0
  %v6289 = vadd.f32 0.0, %v6288
  %v6290 = vpop.f32.mrf.mxu0
  %6291 = vmatprep.mubr.bf16.mxu0 0
  %6292 = vmatmul.mubr.bf16.gmra.mxu0 %v6174
  %v6293 = vpop.f32.mrf.mxu0
  %v6294 = vadd.f32 0.0, %v6293
  %v6295 = vpop.f32.mrf.mxu0
  %v6296 = vpop.f32.mrf.mxu0
  %v6297 = vadd.f32 0.0, %v6296
  %v6298 = vpop.f32.mrf.mxu0
  %6299 = vmatprep.mubr.bf16.mxu0 0
  %6300 = vmatmul.mubr.bf16.gmra.mxu0 %v6177
  %v6301 = vpop.f32.mrf.mxu0
  %v6302 = vadd.f32 0.0, %v6301
  %v6303 = vpop.f32.mrf.mxu0
  %v6304 = vpop.f32.mrf.mxu0
  %v6305 = vadd.f32 0.0, %v6304
  %v6306 = vpop.f32.mrf.mxu0
  %6307 = vdwg.mxu0
  %v6308 = vadd.f32 %v5898, %v6214
  %v6309 = vadd.f32 %v5899, %v6217
  %v6310 = vadd.f32 %v5900, %v6222
  %v6311 = vadd.f32 %v5901, %v6225
  %v6312 = vadd.f32 %v5902, %v6230
  %v6313 = vadd.f32 %v5903, %v6233
  %v6314 = vadd.f32 %v5904, %v6238
  %v6315 = vadd.f32 %v5905, %v6241
  %v6316 = vadd.f32 %v5906, %v6246
  %v6317 = vadd.f32 %v5907, %v6249
  %v6318 = vadd.f32 %v5908, %v6254
  %v6319 = vadd.f32 %v5909, %v6257
  %v6320 = vadd.f32 %v5910, %v6262
  %v6321 = vadd.f32 %v5911, %v6265
  %v6322 = vadd.f32 %v5912, %v6270
  %v6323 = vadd.f32 %v5913, %v6273
  %v6324 = vadd.f32 %v5914, %v6278
  %v6325 = vadd.f32 %v5915, %v6281
  %v6326 = vadd.f32 %v5916, %v6286
  %v6327 = vadd.f32 %v5917, %v6289
  %v6328 = vadd.f32 %v5918, %v6294
  %v6329 = vadd.f32 %v5919, %v6297
  %v6330 = vadd.f32 %v5920, %v6302
  %v6331 = vadd.f32 %v5921, %v6305
  %s6332 = scalar_lea.vmem %s3, 112
  %v6333 = vld [vmem:[%s6332] sm:$0xf]
  %v6334 = vld [vmem:[%s6332 + $0x4] sm:$0xf]
  %v6335 = vld [vmem:[%s6332 + $0x8] sm:$0xf]
  %v6336 = vld [vmem:[%s6332 + $0xc] sm:$0xf]
  %v6337 = vpack.c.b16 %v5979, %v5978
  %v6338 = vpack.c.b16 %v5981, %v5980
  %v6339 = vpack.c.b16 %v5983, %v5982
  %v6340 = vpack.c.b16 %v5985, %v5984
  %v6341 = vpack.c.b16 %v5987, %v5986
  %v6342 = vpack.c.b16 %v5989, %v5988
  %v6343 = vpack.c.b16 %v5991, %v5990
  %v6344 = vpack.c.b16 %v5993, %v5992
  %v6345 = vpack.c.b16 %v5995, %v5994
  %v6346 = vpack.c.b16 %v5997, %v5996
  %v6347 = vpack.c.b16 %v5999, %v5998
  %v6348 = vpack.c.b16 %v6001, %v6000
  %v6353 = vunpack.c.l.b16 %v6333
  %v6354 = vunpack.c.l.b16 %v6334
  %v6355 = vunpack.c.l.b16 %v6335
  %v6356 = vunpack.c.l.b16 %v6336
  %v6357 = vpack.c.b16 %v6354, %v6353
  %v6358 = vpack.c.b16 %v6356, %v6355
  %v6362 = vsel %vm4032, %v6337, 0
  %v6365 = vsel %vm4032, %v6338, 0
  %v6368 = vsel %vm4032, %v6339, 0
  %v6371 = vsel %vm4032, %v6340, 0
  %v6374 = vsel %vm4032, %v6341, 0
  %v6377 = vsel %vm4032, %v6342, 0
  %v6380 = vsel %vm4032, %v6343, 0
  %v6383 = vsel %vm4032, %v6344, 0
  %v6386 = vsel %vm4032, %v6345, 0
  %v6389 = vsel %vm4032, %v6346, 0
  %v6392 = vsel %vm4032, %v6347, 0
  %v6395 = vsel %vm4032, %v6348, 0
  %6397 = vmatprep.subr.bf16.mxu0 0
  %6398 = vmatpush1.bf16.msra.mxu0 0
  %6399 = vmatprep.subr.bf16.mxu0 0
  %6400 = vmatpush1.bf16.msra.mxu0 0
  %6401 = vmatprep.subr.bf16.mxu0 0
  %6402 = vmatpush1.bf16.msra.mxu0 0
  %6403 = vmatprep.subr.bf16.mxu0 0
  %6404 = vmatpush1.bf16.msra.mxu0 0
  %6405 = vmatprep.subr.bf16.mxu0 0
  %6406 = vmatpush1.bf16.msra.mxu0 0
  %6407 = vmatprep.subr.bf16.mxu0 0
  %6408 = vmatpush1.bf16.msra.mxu0 0
  %6409 = vmatprep.subr.bf16.mxu0 0
  %6410 = vmatpush1.bf16.msra.mxu0 %v6358
  %6411 = vmatprep.subr.bf16.mxu0 0
  %6412 = vmatpush1.bf16.msra.mxu0 %v6357
  %6413 = vmatprep.subr.bf16.mxu0 0
  %6414 = vmatpush2.bf16.msra.mxu0 0
  %6415 = vmatprep.subr.bf16.mxu0 0
  %6416 = vmatpush2.bf16.msra.mxu0 0
  %6417 = vmatprep.subr.bf16.mxu0 0
  %6418 = vmatpush2.bf16.msra.mxu0 0
  %6419 = vmatprep.subr.bf16.mxu0 0
  %6420 = vmatpush2.bf16.msra.mxu0 0
  %6421 = vmatprep.subr.bf16.mxu0 0
  %6422 = vmatpush2.bf16.msra.mxu0 0
  %6423 = vmatprep.subr.bf16.mxu0 0
  %6424 = vmatpush2.bf16.msra.mxu0 0
  %6425 = vmatprep.subr.bf16.mxu0 0
  %6426 = vmatpush2.bf16.msra.mxu0 0
  %6427 = vmatprep.subr.bf16.mxu0 0
  %6428 = vmatpush2.bf16.msra.mxu0 0
  %6429 = vmatprep.mubr.bf16.mxu0 0
  %6430 = vmatmul.mubr.bf16.gmra.mxu0 %v6362
  %v6431 = vpop.f32.mrf.mxu0
  %v6432 = vadd.f32 0.0, %v6431
  %v6433 = vpop.f32.mrf.mxu0
  %v6434 = vpop.f32.mrf.mxu0
  %v6435 = vadd.f32 0.0, %v6434
  %v6436 = vpop.f32.mrf.mxu0
  %6437 = vmatprep.mubr.bf16.mxu0 0
  %6438 = vmatmul.mubr.bf16.gmra.mxu0 %v6365
  %v6439 = vpop.f32.mrf.mxu0
  %v6440 = vadd.f32 0.0, %v6439
  %v6441 = vpop.f32.mrf.mxu0
  %v6442 = vpop.f32.mrf.mxu0
  %v6443 = vadd.f32 0.0, %v6442
  %v6444 = vpop.f32.mrf.mxu0
  %6445 = vmatprep.mubr.bf16.mxu0 0
  %6446 = vmatmul.mubr.bf16.gmra.mxu0 %v6368
  %v6447 = vpop.f32.mrf.mxu0
  %v6448 = vadd.f32 0.0, %v6447
  %v6449 = vpop.f32.mrf.mxu0
  %v6450 = vpop.f32.mrf.mxu0
  %v6451 = vadd.f32 0.0, %v6450
  %v6452 = vpop.f32.mrf.mxu0
  %6453 = vmatprep.mubr.bf16.mxu0 0
  %6454 = vmatmul.mubr.bf16.gmra.mxu0 %v6371
  %v6455 = vpop.f32.mrf.mxu0
  %v6456 = vadd.f32 0.0, %v6455
  %v6457 = vpop.f32.mrf.mxu0
  %v6458 = vpop.f32.mrf.mxu0
  %v6459 = vadd.f32 0.0, %v6458
  %v6460 = vpop.f32.mrf.mxu0
  %6461 = vmatprep.mubr.bf16.mxu0 0
  %6462 = vmatmul.mubr.bf16.gmra.mxu0 %v6374
  %v6463 = vpop.f32.mrf.mxu0
  %v6464 = vadd.f32 0.0, %v6463
  %v6465 = vpop.f32.mrf.mxu0
  %v6466 = vpop.f32.mrf.mxu0
  %v6467 = vadd.f32 0.0, %v6466
  %v6468 = vpop.f32.mrf.mxu0
  %6469 = vmatprep.mubr.bf16.mxu0 0
  %6470 = vmatmul.mubr.bf16.gmra.mxu0 %v6377
  %v6471 = vpop.f32.mrf.mxu0
  %v6472 = vadd.f32 0.0, %v6471
  %v6473 = vpop.f32.mrf.mxu0
  %v6474 = vpop.f32.mrf.mxu0
  %v6475 = vadd.f32 0.0, %v6474
  %v6476 = vpop.f32.mrf.mxu0
  %6477 = vmatprep.mubr.bf16.mxu0 0
  %6478 = vmatmul.mubr.bf16.gmra.mxu0 %v6380
  %v6479 = vpop.f32.mrf.mxu0
  %v6480 = vadd.f32 0.0, %v6479
  %v6481 = vpop.f32.mrf.mxu0
  %v6482 = vpop.f32.mrf.mxu0
  %v6483 = vadd.f32 0.0, %v6482
  %v6484 = vpop.f32.mrf.mxu0
  %6485 = vmatprep.mubr.bf16.mxu0 0
  %6486 = vmatmul.mubr.bf16.gmra.mxu0 %v6383
  %v6487 = vpop.f32.mrf.mxu0
  %v6488 = vadd.f32 0.0, %v6487
  %v6489 = vpop.f32.mrf.mxu0
  %v6490 = vpop.f32.mrf.mxu0
  %v6491 = vadd.f32 0.0, %v6490
  %v6492 = vpop.f32.mrf.mxu0
  %6493 = vmatprep.mubr.bf16.mxu0 0
  %6494 = vmatmul.mubr.bf16.gmra.mxu0 %v6386
  %v6495 = vpop.f32.mrf.mxu0
  %v6496 = vadd.f32 0.0, %v6495
  %v6497 = vpop.f32.mrf.mxu0
  %v6498 = vpop.f32.mrf.mxu0
  %v6499 = vadd.f32 0.0, %v6498
  %v6500 = vpop.f32.mrf.mxu0
  %6501 = vmatprep.mubr.bf16.mxu0 0
  %6502 = vmatmul.mubr.bf16.gmra.mxu0 %v6389
  %v6503 = vpop.f32.mrf.mxu0
  %v6504 = vadd.f32 0.0, %v6503
  %v6505 = vpop.f32.mrf.mxu0
  %v6506 = vpop.f32.mrf.mxu0
  %v6507 = vadd.f32 0.0, %v6506
  %v6508 = vpop.f32.mrf.mxu0
  %6509 = vmatprep.mubr.bf16.mxu0 0
  %6510 = vmatmul.mubr.bf16.gmra.mxu0 %v6392
  %v6511 = vpop.f32.mrf.mxu0
  %v6512 = vadd.f32 0.0, %v6511
  %v6513 = vpop.f32.mrf.mxu0
  %v6514 = vpop.f32.mrf.mxu0
  %v6515 = vadd.f32 0.0, %v6514
  %v6516 = vpop.f32.mrf.mxu0
  %6517 = vmatprep.mubr.bf16.mxu0 0
  %6518 = vmatmul.mubr.bf16.gmra.mxu0 %v6395
  %v6519 = vpop.f32.mrf.mxu0
  %v6520 = vadd.f32 0.0, %v6519
  %v6521 = vpop.f32.mrf.mxu0
  %v6522 = vpop.f32.mrf.mxu0
  %v6523 = vadd.f32 0.0, %v6522
  %v6524 = vpop.f32.mrf.mxu0
  %6525 = vdwg.mxu0
  %v6526 = vadd.f32 %v6308, %v6432
  %v6527 = vadd.f32 %v6309, %v6435
  %v6528 = vadd.f32 %v6310, %v6440
  %v6529 = vadd.f32 %v6311, %v6443
  %v6530 = vadd.f32 %v6312, %v6448
  %v6531 = vadd.f32 %v6313, %v6451
  %v6532 = vadd.f32 %v6314, %v6456
  %v6533 = vadd.f32 %v6315, %v6459
  %v6534 = vadd.f32 %v6316, %v6464
  %v6535 = vadd.f32 %v6317, %v6467
  %v6536 = vadd.f32 %v6318, %v6472
  %v6537 = vadd.f32 %v6319, %v6475
  %v6538 = vadd.f32 %v6320, %v6480
  %v6539 = vadd.f32 %v6321, %v6483
  %v6540 = vadd.f32 %v6322, %v6488
  %v6541 = vadd.f32 %v6323, %v6491
  %v6542 = vadd.f32 %v6324, %v6496
  %v6543 = vadd.f32 %v6325, %v6499
  %v6544 = vadd.f32 %v6326, %v6504
  %v6545 = vadd.f32 %v6327, %v6507
  %v6546 = vadd.f32 %v6328, %v6512
  %v6547 = vadd.f32 %v6329, %v6515
  %v6548 = vadd.f32 %v6330, %v6520
  %v6549 = vadd.f32 %v6331, %v6523
  %v6550 = vld [vmem:[#allocation3 + $0x18] sm:$0xf]
  %v6551 = vld [vmem:[#allocation3 + $0x1c] sm:$0xf]
  %v6552 = vld [vmem:[#allocation3 + $0x20] sm:$0xf]
  %v6553 = vld [vmem:[#allocation3 + $0x24] sm:$0xf]
  %v6554 = vld [vmem:[#allocation3 + $0x28] sm:$0xf]
  %v6555 = vld [vmem:[#allocation3 + $0x2c] sm:$0xf]
  %v6556 = vld [vmem:[#allocation3 + $0x30] sm:$0xf]
  %v6557 = vld [vmem:[#allocation3 + $0x34] sm:$0xf]
  %v6558 = vld [vmem:[#allocation3 + $0x38] sm:$0xf]
  %v6559 = vld [vmem:[#allocation3 + $0x3c] sm:$0xf]
  %v6560 = vld [vmem:[#allocation3 + $0x40] sm:$0xf]
  %v6561 = vld [vmem:[#allocation3 + $0x44] sm:$0xf]
  %v6562 = vld [vmem:[#allocation3 + $0x48] sm:$0xf]
  %v6563 = vld [vmem:[#allocation3 + $0x4c] sm:$0xf]
  %v6564 = vld [vmem:[#allocation3 + $0x50] sm:$0xf]
  %v6565 = vld [vmem:[#allocation3 + $0x54] sm:$0xf]
  %v6566 = vld [vmem:[#allocation3 + $0x58] sm:$0xf]
  %v6567 = vld [vmem:[#allocation3 + $0x5c] sm:$0xf]
  %v6568 = vld [vmem:[#allocation3 + $0x60] sm:$0xf]
  %v6569 = vld [vmem:[#allocation3 + $0x64] sm:$0xf]
  %v6570 = vld [vmem:[#allocation3 + $0x68] sm:$0xf]
  %v6571 = vld [vmem:[#allocation3 + $0x6c] sm:$0xf]
  %v6572 = vld [vmem:[#allocation3 + $0x70] sm:$0xf]
  %v6573 = vld [vmem:[#allocation3 + $0x74] sm:$0xf]
  %v6574 = vld [vmem:[#allocation3 + $0x78] sm:$0x1]
  %s6575 = scalar_lea.vmem %s3, 128
  %v6576 = vld [vmem:[%s6575] sm:$0xf]
  %v6577 = vld [vmem:[%s6575 + $0x4] sm:$0xf]
  %v6578 = vld [vmem:[%s6575 + $0x8] sm:$0xf]
  %v6579 = vld [vmem:[%s6575 + $0xc] sm:$0xf]
  %v6605 = vunpack.c.l.b16 %v6550
  %v6606 = vunpack.c.l.b16 %v6551
  %v6607 = vunpack.c.l.b16 %v6552
  %v6608 = vunpack.c.l.b16 %v6553
  %v6609 = vunpack.c.l.b16 %v6554
  %v6610 = vunpack.c.l.b16 %v6555
  %v6611 = vunpack.c.l.b16 %v6556
  %v6612 = vunpack.c.l.b16 %v6557
  %v6613 = vunpack.c.l.b16 %v6558
  %v6614 = vunpack.c.l.b16 %v6559
  %v6615 = vunpack.c.l.b16 %v6560
  %v6616 = vunpack.c.l.b16 %v6561
  %v6617 = vunpack.c.l.b16 %v6562
  %v6618 = vunpack.c.l.b16 %v6563
  %v6619 = vunpack.c.l.b16 %v6564
  %v6620 = vunpack.c.l.b16 %v6565
  %v6621 = vunpack.c.l.b16 %v6566
  %v6622 = vunpack.c.l.b16 %v6567
  %v6623 = vunpack.c.l.b16 %v6568
  %v6624 = vunpack.c.l.b16 %v6569
  %v6625 = vunpack.c.l.b16 %v6570
  %v6626 = vunpack.c.l.b16 %v6571
  %v6627 = vunpack.c.l.b16 %v6572
  %v6628 = vunpack.c.l.b16 %v6573
  %v6629 = vunpack.c.l.b16 %v6574
  %v6630 = vpack.c.b16 %v6606, %v6605
  %v6631 = vpack.c.b16 %v6608, %v6607
  %v6632 = vpack.c.b16 %v6610, %v6609
  %v6633 = vpack.c.b16 %v6612, %v6611
  %v6634 = vpack.c.b16 %v6614, %v6613
  %v6635 = vpack.c.b16 %v6616, %v6615
  %v6636 = vpack.c.b16 %v6618, %v6617
  %v6637 = vpack.c.b16 %v6620, %v6619
  %v6638 = vpack.c.b16 %v6622, %v6621
  %v6639 = vpack.c.b16 %v6624, %v6623
  %v6640 = vpack.c.b16 %v6626, %v6625
  %v6641 = vpack.c.b16 %v6628, %v6627
  %v6642 = vpack.c.b16 %v6629, %v6629
  %v6644 = vshrl.u32 %v6630, 16
  %v6646 = vshll.u32 %v6630, 16
  %v6648 = vrot.slane %v6646, 1
  %v6649 = vor.u32 %v6644, %v6648
  %v6651 = vshll.u32 %v6631, 16
  %v6653 = vrot.slane %v6651, 1
  %v6654 = vsel %vm1129, %v6649, %v6653
  %v6655 = vshrl.u32 %v6631, 16
  %v6657 = vor.u32 %v6655, %v6653
  %v6659 = vshll.u32 %v6632, 16
  %v6661 = vrot.slane %v6659, 1
  %v6662 = vsel %vm1129, %v6657, %v6661
  %v6663 = vshrl.u32 %v6632, 16
  %v6665 = vor.u32 %v6663, %v6661
  %v6667 = vshll.u32 %v6633, 16
  %v6669 = vrot.slane %v6667, 1
  %v6670 = vsel %vm1129, %v6665, %v6669
  %v6671 = vshrl.u32 %v6633, 16
  %v6673 = vor.u32 %v6671, %v6669
  %v6675 = vshll.u32 %v6634, 16
  %v6677 = vrot.slane %v6675, 1
  %v6678 = vsel %vm1129, %v6673, %v6677
  %v6679 = vshrl.u32 %v6634, 16
  %v6681 = vor.u32 %v6679, %v6677
  %v6683 = vshll.u32 %v6635, 16
  %v6685 = vrot.slane %v6683, 1
  %v6686 = vsel %vm1129, %v6681, %v6685
  %v6687 = vshrl.u32 %v6635, 16
  %v6689 = vor.u32 %v6687, %v6685
  %v6691 = vshll.u32 %v6636, 16
  %v6693 = vrot.slane %v6691, 1
  %v6694 = vsel %vm1129, %v6689, %v6693
  %v6695 = vshrl.u32 %v6636, 16
  %v6697 = vor.u32 %v6695, %v6693
  %v6699 = vshll.u32 %v6637, 16
  %v6701 = vrot.slane %v6699, 1
  %v6702 = vsel %vm1129, %v6697, %v6701
  %v6703 = vshrl.u32 %v6637, 16
  %v6705 = vor.u32 %v6703, %v6701
  %v6707 = vshll.u32 %v6638, 16
  %v6709 = vrot.slane %v6707, 1
  %v6710 = vsel %vm1129, %v6705, %v6709
  %v6711 = vshrl.u32 %v6638, 16
  %v6713 = vor.u32 %v6711, %v6709
  %v6715 = vshll.u32 %v6639, 16
  %v6717 = vrot.slane %v6715, 1
  %v6718 = vsel %vm1129, %v6713, %v6717
  %v6719 = vshrl.u32 %v6639, 16
  %v6721 = vor.u32 %v6719, %v6717
  %v6723 = vshll.u32 %v6640, 16
  %v6725 = vrot.slane %v6723, 1
  %v6726 = vsel %vm1129, %v6721, %v6725
  %v6727 = vshrl.u32 %v6640, 16
  %v6729 = vor.u32 %v6727, %v6725
  %v6731 = vshll.u32 %v6641, 16
  %v6733 = vrot.slane %v6731, 1
  %v6734 = vsel %vm1129, %v6729, %v6733
  %v6735 = vshrl.u32 %v6641, 16
  %v6737 = vor.u32 %v6735, %v6733
  %v6739 = vshll.u32 %v6642, 16
  %v6741 = vrot.slane %v6739, 1
  %v6742 = vsel %vm1129, %v6737, %v6741
  %v6747 = vunpack.c.l.b16 %v6576
  %v6748 = vunpack.c.l.b16 %v6577
  %v6749 = vunpack.c.l.b16 %v6578
  %v6750 = vunpack.c.l.b16 %v6579
  %v6751 = vpack.c.b16 %v6748, %v6747
  %v6752 = vpack.c.b16 %v6750, %v6749
  %v6756 = vsel %vm4032, %v6654, 0
  %v6759 = vsel %vm4032, %v6662, 0
  %v6762 = vsel %vm4032, %v6670, 0
  %v6765 = vsel %vm4032, %v6678, 0
  %v6768 = vsel %vm4032, %v6686, 0
  %v6771 = vsel %vm4032, %v6694, 0
  %v6774 = vsel %vm4032, %v6702, 0
  %v6777 = vsel %vm4032, %v6710, 0
  %v6780 = vsel %vm4032, %v6718, 0
  %v6783 = vsel %vm4032, %v6726, 0
  %v6786 = vsel %vm4032, %v6734, 0
  %v6789 = vsel %vm4032, %v6742, 0
  %6791 = vmatprep.subr.bf16.mxu0 0
  %6792 = vmatpush1.bf16.msra.mxu0 0
  %6793 = vmatprep.subr.bf16.mxu0 0
  %6794 = vmatpush1.bf16.msra.mxu0 0
  %6795 = vmatprep.subr.bf16.mxu0 0
  %6796 = vmatpush1.bf16.msra.mxu0 0
  %6797 = vmatprep.subr.bf16.mxu0 0
  %6798 = vmatpush1.bf16.msra.mxu0 0
  %6799 = vmatprep.subr.bf16.mxu0 0
  %6800 = vmatpush1.bf16.msra.mxu0 0
  %6801 = vmatprep.subr.bf16.mxu0 0
  %6802 = vmatpush1.bf16.msra.mxu0 0
  %6803 = vmatprep.subr.bf16.mxu0 0
  %6804 = vmatpush1.bf16.msra.mxu0 %v6752
  %6805 = vmatprep.subr.bf16.mxu0 0
  %6806 = vmatpush1.bf16.msra.mxu0 %v6751
  %6807 = vmatprep.subr.bf16.mxu0 0
  %6808 = vmatpush2.bf16.msra.mxu0 0
  %6809 = vmatprep.subr.bf16.mxu0 0
  %6810 = vmatpush2.bf16.msra.mxu0 0
  %6811 = vmatprep.subr.bf16.mxu0 0
  %6812 = vmatpush2.bf16.msra.mxu0 0
  %6813 = vmatprep.subr.bf16.mxu0 0
  %6814 = vmatpush2.bf16.msra.mxu0 0
  %6815 = vmatprep.subr.bf16.mxu0 0
  %6816 = vmatpush2.bf16.msra.mxu0 0
  %6817 = vmatprep.subr.bf16.mxu0 0
  %6818 = vmatpush2.bf16.msra.mxu0 0
  %6819 = vmatprep.subr.bf16.mxu0 0
  %6820 = vmatpush2.bf16.msra.mxu0 0
  %6821 = vmatprep.subr.bf16.mxu0 0
  %6822 = vmatpush2.bf16.msra.mxu0 0
  %6823 = vmatprep.mubr.bf16.mxu0 0
  %6824 = vmatmul.mubr.bf16.gmra.mxu0 %v6756
  %v6825 = vpop.f32.mrf.mxu0
  %v6826 = vadd.f32 0.0, %v6825
  %v6827 = vpop.f32.mrf.mxu0
  %v6828 = vpop.f32.mrf.mxu0
  %v6829 = vadd.f32 0.0, %v6828
  %v6830 = vpop.f32.mrf.mxu0
  %6831 = vmatprep.mubr.bf16.mxu0 0
  %6832 = vmatmul.mubr.bf16.gmra.mxu0 %v6759
  %v6833 = vpop.f32.mrf.mxu0
  %v6834 = vadd.f32 0.0, %v6833
  %v6835 = vpop.f32.mrf.mxu0
  %v6836 = vpop.f32.mrf.mxu0
  %v6837 = vadd.f32 0.0, %v6836
  %v6838 = vpop.f32.mrf.mxu0
  %6839 = vmatprep.mubr.bf16.mxu0 0
  %6840 = vmatmul.mubr.bf16.gmra.mxu0 %v6762
  %v6841 = vpop.f32.mrf.mxu0
  %v6842 = vadd.f32 0.0, %v6841
  %v6843 = vpop.f32.mrf.mxu0
  %v6844 = vpop.f32.mrf.mxu0
  %v6845 = vadd.f32 0.0, %v6844
  %v6846 = vpop.f32.mrf.mxu0
  %6847 = vmatprep.mubr.bf16.mxu0 0
  %6848 = vmatmul.mubr.bf16.gmra.mxu0 %v6765
  %v6849 = vpop.f32.mrf.mxu0
  %v6850 = vadd.f32 0.0, %v6849
  %v6851 = vpop.f32.mrf.mxu0
  %v6852 = vpop.f32.mrf.mxu0
  %v6853 = vadd.f32 0.0, %v6852
  %v6854 = vpop.f32.mrf.mxu0
  %6855 = vmatprep.mubr.bf16.mxu0 0
  %6856 = vmatmul.mubr.bf16.gmra.mxu0 %v6768
  %v6857 = vpop.f32.mrf.mxu0
  %v6858 = vadd.f32 0.0, %v6857
  %v6859 = vpop.f32.mrf.mxu0
  %v6860 = vpop.f32.mrf.mxu0
  %v6861 = vadd.f32 0.0, %v6860
  %v6862 = vpop.f32.mrf.mxu0
  %6863 = vmatprep.mubr.bf16.mxu0 0
  %6864 = vmatmul.mubr.bf16.gmra.mxu0 %v6771
  %v6865 = vpop.f32.mrf.mxu0
  %v6866 = vadd.f32 0.0, %v6865
  %v6867 = vpop.f32.mrf.mxu0
  %v6868 = vpop.f32.mrf.mxu0
  %v6869 = vadd.f32 0.0, %v6868
  %v6870 = vpop.f32.mrf.mxu0
  %6871 = vmatprep.mubr.bf16.mxu0 0
  %6872 = vmatmul.mubr.bf16.gmra.mxu0 %v6774
  %v6873 = vpop.f32.mrf.mxu0
  %v6874 = vadd.f32 0.0, %v6873
  %v6875 = vpop.f32.mrf.mxu0
  %v6876 = vpop.f32.mrf.mxu0
  %v6877 = vadd.f32 0.0, %v6876
  %v6878 = vpop.f32.mrf.mxu0
  %6879 = vmatprep.mubr.bf16.mxu0 0
  %6880 = vmatmul.mubr.bf16.gmra.mxu0 %v6777
  %v6881 = vpop.f32.mrf.mxu0
  %v6882 = vadd.f32 0.0, %v6881
  %v6883 = vpop.f32.mrf.mxu0
  %v6884 = vpop.f32.mrf.mxu0
  %v6885 = vadd.f32 0.0, %v6884
  %v6886 = vpop.f32.mrf.mxu0
  %6887 = vmatprep.mubr.bf16.mxu0 0
  %6888 = vmatmul.mubr.bf16.gmra.mxu0 %v6780
  %v6889 = vpop.f32.mrf.mxu0
  %v6890 = vadd.f32 0.0, %v6889
  %v6891 = vpop.f32.mrf.mxu0
  %v6892 = vpop.f32.mrf.mxu0
  %v6893 = vadd.f32 0.0, %v6892
  %v6894 = vpop.f32.mrf.mxu0
  %6895 = vmatprep.mubr.bf16.mxu0 0
  %6896 = vmatmul.mubr.bf16.gmra.mxu0 %v6783
  %v6897 = vpop.f32.mrf.mxu0
  %v6898 = vadd.f32 0.0, %v6897
  %v6899 = vpop.f32.mrf.mxu0
  %v6900 = vpop.f32.mrf.mxu0
  %v6901 = vadd.f32 0.0, %v6900
  %v6902 = vpop.f32.mrf.mxu0
  %6903 = vmatprep.mubr.bf16.mxu0 0
  %6904 = vmatmul.mubr.bf16.gmra.mxu0 %v6786
  %v6905 = vpop.f32.mrf.mxu0
  %v6906 = vadd.f32 0.0, %v6905
  %v6907 = vpop.f32.mrf.mxu0
  %v6908 = vpop.f32.mrf.mxu0
  %v6909 = vadd.f32 0.0, %v6908
  %v6910 = vpop.f32.mrf.mxu0
  %6911 = vmatprep.mubr.bf16.mxu0 0
  %6912 = vmatmul.mubr.bf16.gmra.mxu0 %v6789
  %v6913 = vpop.f32.mrf.mxu0
  %v6914 = vadd.f32 0.0, %v6913
  %v6915 = vpop.f32.mrf.mxu0
  %v6916 = vpop.f32.mrf.mxu0
  %v6917 = vadd.f32 0.0, %v6916
  %v6918 = vpop.f32.mrf.mxu0
  %6919 = vdwg.mxu0
  %v6920 = vadd.f32 %v6526, %v6826
  %v6921 = vadd.f32 %v6527, %v6829
  %v6922 = vadd.f32 %v6528, %v6834
  %v6923 = vadd.f32 %v6529, %v6837
  %v6924 = vadd.f32 %v6530, %v6842
  %v6925 = vadd.f32 %v6531, %v6845
  %v6926 = vadd.f32 %v6532, %v6850
  %v6927 = vadd.f32 %v6533, %v6853
  %v6928 = vadd.f32 %v6534, %v6858
  %v6929 = vadd.f32 %v6535, %v6861
  %v6930 = vadd.f32 %v6536, %v6866
  %v6931 = vadd.f32 %v6537, %v6869
  %v6932 = vadd.f32 %v6538, %v6874
  %v6933 = vadd.f32 %v6539, %v6877
  %v6934 = vadd.f32 %v6540, %v6882
  %v6935 = vadd.f32 %v6541, %v6885
  %v6936 = vadd.f32 %v6542, %v6890
  %v6937 = vadd.f32 %v6543, %v6893
  %v6938 = vadd.f32 %v6544, %v6898
  %v6939 = vadd.f32 %v6545, %v6901
  %v6940 = vadd.f32 %v6546, %v6906
  %v6941 = vadd.f32 %v6547, %v6909
  %v6942 = vadd.f32 %v6548, %v6914
  %v6943 = vadd.f32 %v6549, %v6917
  %v6944 = vmax.f32 %v6920, 0.0
  %v6945 = vmax.f32 %v6921, 0.0
  %v6946 = vmax.f32 %v6922, 0.0
  %v6947 = vmax.f32 %v6923, 0.0
  %v6948 = vmax.f32 %v6924, 0.0
  %v6949 = vmax.f32 %v6925, 0.0
  %v6950 = vmax.f32 %v6926, 0.0
  %v6951 = vmax.f32 %v6927, 0.0
  %v6952 = vmax.f32 %v6928, 0.0
  %v6953 = vmax.f32 %v6929, 0.0
  %v6954 = vmax.f32 %v6930, 0.0
  %v6955 = vmax.f32 %v6931, 0.0
  %v6956 = vmax.f32 %v6932, 0.0
  %v6957 = vmax.f32 %v6933, 0.0
  %v6958 = vmax.f32 %v6934, 0.0
  %v6959 = vmax.f32 %v6935, 0.0
  %v6960 = vmax.f32 %v6936, 0.0
  %v6961 = vmax.f32 %v6937, 0.0
  %v6962 = vmax.f32 %v6938, 0.0
  %v6963 = vmax.f32 %v6939, 0.0
  %v6964 = vmax.f32 %v6940, 0.0
  %v6965 = vmax.f32 %v6941, 0.0
  %v6966 = vmax.f32 %v6942, 0.0
  %v6967 = vmax.f32 %v6943, 0.0
  %v6968 = vsel %vm3734, %v6944, 0.0
  %v6969 = vsel %vm3735, %v6945, 0.0
  %v6970 = vsel %vm3736, %v6946, 0.0
  %v6971 = vsel %vm3737, %v6947, 0.0
  %v6972 = vsel %vm3738, %v6948, 0.0
  %v6973 = vsel %vm3739, %v6949, 0.0
  %v6974 = vsel %vm3740, %v6950, 0.0
  %v6975 = vsel %vm3741, %v6951, 0.0
  %v6976 = vsel %vm3742, %v6952, 0.0
  %v6977 = vsel %vm3743, %v6953, 0.0
  %v6978 = vsel %vm3744, %v6954, 0.0
  %v6979 = vsel %vm3745, %v6955, 0.0
  %v6980 = vsel %vm3746, %v6956, 0.0
  %v6981 = vsel %vm3747, %v6957, 0.0
  %v6982 = vsel %vm3748, %v6958, 0.0
  %v6983 = vsel %vm3749, %v6959, 0.0
  %v6984 = vsel %vm3750, %v6960, 0.0
  %v6985 = vsel %vm3751, %v6961, 0.0
  %v6986 = vsel %vm3752, %v6962, 0.0
  %v6987 = vsel %vm3753, %v6963, 0.0
  %v6988 = vsel %vm3754, %v6964, 0.0
  %v6989 = vsel %vm3755, %v6965, 0.0
  %v6990 = vsel %vm3756, %v6966, 0.0
  %v6991 = vsel %vm3757, %v6967, 0.0
  %v6992 = vsel %vm4032, %v6968, 0.0
  %v6993 = vsel %vm4032, %v6969, 0.0
  %v6994 = vadd.f32 %v6992, %v6993
  %v6995 = vsel %vm4032, %v6970, 0.0
  %v6996 = vadd.f32 %v6994, %v6995
  %v6997 = vsel %vm4032, %v6971, 0.0
  %v6998 = vadd.f32 %v6996, %v6997
  %v6999 = vsel %vm4032, %v6972, 0.0
  %v7000 = vadd.f32 %v6998, %v6999
  %v7001 = vsel %vm4032, %v6973, 0.0
  %v7002 = vadd.f32 %v7000, %v7001
  %v7003 = vsel %vm4032, %v6974, 0.0
  %v7004 = vadd.f32 %v7002, %v7003
  %v7005 = vsel %vm4032, %v6975, 0.0
  %v7006 = vadd.f32 %v7004, %v7005
  %v7007 = vsel %vm4032, %v6976, 0.0
  %v7008 = vadd.f32 %v7006, %v7007
  %v7009 = vsel %vm4032, %v6977, 0.0
  %v7010 = vadd.f32 %v7008, %v7009
  %v7011 = vsel %vm4032, %v6978, 0.0
  %v7012 = vadd.f32 %v7010, %v7011
  %v7013 = vsel %vm4032, %v6979, 0.0
  %v7014 = vadd.f32 %v7012, %v7013
  %v7015 = vsel %vm4032, %v6980, 0.0
  %v7016 = vadd.f32 %v7014, %v7015
  %v7017 = vsel %vm4032, %v6981, 0.0
  %v7018 = vadd.f32 %v7016, %v7017
  %v7019 = vsel %vm4032, %v6982, 0.0
  %v7020 = vadd.f32 %v7018, %v7019
  %v7021 = vsel %vm4032, %v6983, 0.0
  %v7022 = vadd.f32 %v7020, %v7021
  %v7023 = vsel %vm4032, %v6984, 0.0
  %v7024 = vadd.f32 %v7022, %v7023
  %v7025 = vsel %vm4032, %v6985, 0.0
  %v7026 = vadd.f32 %v7024, %v7025
  %v7027 = vsel %vm4032, %v6986, 0.0
  %v7028 = vadd.f32 %v7026, %v7027
  %v7029 = vsel %vm4032, %v6987, 0.0
  %v7030 = vadd.f32 %v7028, %v7029
  %v7031 = vsel %vm4032, %v6988, 0.0
  %v7032 = vadd.f32 %v7030, %v7031
  %v7033 = vsel %vm4032, %v6989, 0.0
  %v7034 = vadd.f32 %v7032, %v7033
  %v7035 = vsel %vm4032, %v6990, 0.0
  %v7036 = vadd.f32 %v7034, %v7035
  %v7037 = vsel %vm4032, %v6991, 0.0
  %v7038 = vadd.f32 %v7036, %v7037
  %v7039 = vrot.slane %v7038, 4
  %v7040 = vadd.f32 %v7038, %v7039
  %v7041 = vrot.slane %v7040, 2
  %v7042 = vadd.f32 %v7040, %v7041
  %v7043 = vrot.slane %v7042, 1
  %v7044 = vadd.f32 %v7042, %v7043
  %v7045 = vmul.f32 %v7044, 0.0069444445
  %v7046 = vld [vmem:[%s4] sm:$0xff]
  %v7047 = vld [vmem:[%s4 + $0x8] sm:$0xff]
  %v7048 = vld [vmem:[%s4 + $0x10] sm:$0xff]
  %v7049 = vld [vmem:[%s4 + $0x18] sm:$0xff]
  %v7051 = vsel %vm4032, %v7045, 0
  %7053 = vmatprep.subr.mxu0 0.0
  %7054 = vmatpush1.msra.mxu0 0.0
  %7055 = vmatprep.subr.mxu0 0.0
  %7056 = vmatpush1.msra.mxu0 0.0
  %7057 = vmatprep.subr.mxu0 0.0
  %7058 = vmatpush1.msra.mxu0 0.0
  %7059 = vmatprep.subr.mxu0 0.0
  %7060 = vmatpush1.msra.mxu0 0.0
  %7061 = vmatprep.subr.mxu0 0.0
  %7062 = vmatpush1.msra.mxu0 0.0
  %7063 = vmatprep.subr.mxu0 0.0
  %7064 = vmatpush1.msra.mxu0 0.0
  %7065 = vmatprep.subr.mxu0 0.0
  %7066 = vmatpush1.msra.mxu0 0.0
  %7067 = vmatprep.subr.mxu0 0.0
  %7068 = vmatpush1.msra.mxu0 0.0
  %7069 = vmatprep.subr.mxu0 0.0
  %7070 = vmatpush1.msra.mxu0 0.0
  %7071 = vmatprep.subr.mxu0 0.0
  %7072 = vmatpush1.msra.mxu0 0.0
  %7073 = vmatprep.subr.mxu0 0.0
  %7074 = vmatpush1.msra.mxu0 0.0
  %7075 = vmatprep.subr.mxu0 0.0
  %7076 = vmatpush1.msra.mxu0 0.0
  %7077 = vmatprep.subr.mxu0 0.0
  %7078 = vmatpush1.msra.mxu0 %v7049
  %7079 = vmatprep.subr.mxu0 0.0
  %7080 = vmatpush1.msra.mxu0 %v7048
  %7081 = vmatprep.subr.mxu0 0.0
  %7082 = vmatpush1.msra.mxu0 %v7047
  %7083 = vmatprep.subr.mxu0 0.0
  %7084 = vmatpush1.msra.mxu0 %v7046
  %7085 = vmatprep.subr.mxu0 0.0
  %7086 = vmatpush2.msra.mxu0 0.0
  %7087 = vmatprep.subr.mxu0 0.0
  %7088 = vmatpush2.msra.mxu0 0.0
  %7089 = vmatprep.subr.mxu0 0.0
  %7090 = vmatpush2.msra.mxu0 0.0
  %7091 = vmatprep.subr.mxu0 0.0
  %7092 = vmatpush2.msra.mxu0 0.0
  %7093 = vmatprep.subr.mxu0 0.0
  %7094 = vmatpush2.msra.mxu0 0.0
  %7095 = vmatprep.subr.mxu0 0.0
  %7096 = vmatpush2.msra.mxu0 0.0
  %7097 = vmatprep.subr.mxu0 0.0
  %7098 = vmatpush2.msra.mxu0 0.0
  %7099 = vmatprep.subr.mxu0 0.0
  %7100 = vmatpush2.msra.mxu0 0.0
  %7101 = vmatprep.subr.mxu0 0.0
  %7102 = vmatpush2.msra.mxu0 0.0
  %7103 = vmatprep.subr.mxu0 0.0
  %7104 = vmatpush2.msra.mxu0 0.0
  %7105 = vmatprep.subr.mxu0 0.0
  %7106 = vmatpush2.msra.mxu0 0.0
  %7107 = vmatprep.subr.mxu0 0.0
  %7108 = vmatpush2.msra.mxu0 0.0
  %7109 = vmatprep.subr.mxu0 0.0
  %7110 = vmatpush2.msra.mxu0 0.0
  %7111 = vmatprep.subr.mxu0 0.0
  %7112 = vmatpush2.msra.mxu0 0.0
  %7113 = vmatprep.subr.mxu0 0.0
  %7114 = vmatpush2.msra.mxu0 0.0
  %7115 = vmatprep.subr.mxu0 0.0
  %7116 = vmatpush2.msra.mxu0 0.0
  %7117 = vmatprep.mubr.f32.mxu0 0.0
  %7118 = vmatmul.mubr.f32.gmra.mxu0 %v7051
  %v7119 = vpop.f32.mrf.mxu0
  %v7120 = vadd.f32 0.0, %v7119
  %v7121 = vpop.f32.mrf.mxu0
  %7122 = vdwg.mxu0
  %v7123 = vlaneseq
  %v7124 = vand.u32 %v7123, 127
  %vm7125 = vcmp.lt.s32.totalorder %v7124, 4
  %v7126 = vsel %vm7125, %v7120, -1e+30
  %vm7127 = vcmask 1040384
  %v7128 = vsel %vm7127, %v7126, -inf
  %7129 = vmax.xlane.f32.xlu0 %v7128
  %v7130 = vpop.xlane.xlu0 %7129
  %v7131 = vsub.f32 %v7126, %v7130
  %v7132 = vmul.f32 %v7131, 1.442695
  %v7133 = vpow.pop %v7132
  %v7134 = vsel %vm7127, %v7133, 0.0
  %7135 = vadd.xlane.f32.xlu0 %v7134
  %v7136 = vpop.xlane.xlu0 %7135
  %v7137 = vrcp.pop %v7136
  %v7138 = vmul.f32 %v7133, %v7137
  %v7139 = vlog2.pop %v7136
  %v7140 = vmul.f32 %v7139, 0.6931472
  %v7141 = vadd.f32 %v7130, %v7140
  %vm7142 = vcmp.eq.s32.totalorder %v7124, 3
  %v7143 = vsel %vm7142, %v7120, 0.0
  %v7144 = vsel %vm7127, %v7143, 0.0
  %7145 = vadd.xlane.f32.xlu0 %v7144
  %v7146 = vpop.xlane.xlu0 %7145
  %v7147 = vsub.f32 %v7141, %v7146
  %vm7148 = vcmp.eq.s32.totalorder %v3422, 0
  %v7149 = vlaneseq
  %v7150 = vshrl.u32 %v7149, 7
  %v7151 = vsub.s32 0, %v7150
  %v7152 = vrot.slane %v7138, %v7151
  %vm7153 = vcmp.eq.s32.totalorder %v3422, 1
  %v7154 = vlaneseq
  %v7155 = vshrl.u32 %v7154, 7
  %v7156 = vsub.s32 0, %v7155
  %v7157 = vrot.slane %v7147, %v7156
  %v7158 = vsel %vm7153, %v7157, 0.0
  %v7159 = vsel %vm7148, %v7152, %v7158
  %7160 = vst [vmem:[%s5] sm:$0xff] %v7159
  // Predicated region
  $region22: #{unknown_net_forward.1} parent=0 // pred_check
    _
  $region23: #{unknown_net_forward.1} parent=0 // pred_check_branch
    %7162 = sbr.rel (0) target = $region25
  $region24: #{unknown_net_forward.1} parent=0 // pred_region
    _
  $region25: #{unknown_net_forward.1} parent=0 // pred_fallthru
    _
  // Predicated region
  $region26: #{unknown_net_forward.1} parent=0 // pred_check
    _
  $region27: #{unknown_net_forward.1} parent=0 // pred_check_branch
    %7164 = sbr.rel (0) target = $region29
  $region28: #{unknown_net_forward.1} parent=0 // pred_region
    _
  $region29: #{unknown_net_forward.1} parent=0 // pred_fallthru
    _

</llo_original>
